<compile_context>
chip_gen: v7x
topology: tpu7x:2x2x1
jax: 0.10.0
libtpu: 0.0.40
codegen_flags: <defaults>
</compile_context>

<pallas_src>
import functools

import jax
import jax.numpy as jnp
from jax import lax
from jax.experimental import pallas as pl
from jax.experimental.pallas import tpu as pltpu

BN_EPS = 1e-5
FEATURE_DIM = 960   # MobileNetV3-Large final channel count
HIDDEN = 512
LANES = 128
NEG_BIG = -1e30     # softmax padding logit


def bmi_head_kernel(feat_ref,                  # (TB, SC, C)   bf16, channels-last chunk
                    w13_ref, t1_ref,           # (C, 2H) bf16 (pool+BN folded), (1, H) f32
                    w2_ref, b2_ref,            # (H, 128) bf16 padded, (1, 128) f32 (pads=-1e30)
                    w3g_ref, t2_ref,           # (2, H) f32, (1, H) f32
                    w4_ref, b4_ref,            # (H, 128) bf16 padded, (1, 128) f32
                    gender_ref, bmi_ref,       # (TB, 128) f32 each (lane-dense)
                    pooled_acc):               # (TB, C) f32 scratch (persists over S axis)
    s = pl.program_id(1)

    @pl.when(s == 0)
    def _():
        pooled_acc[...] = jnp.zeros_like(pooled_acc)

    # ---- AdaptiveAvgPool2d(1) + flatten: spatial sum accumulated across the S
    #      grid axis; inside a step we reduce in 8-sublane sub-chunks so the f32
    #      upcast temporary stays at ~tb*8*C*4 bytes (no full-block f32 copy).
    #      The 1/S mean scale is folded into w13 in the wrapper.
    tb, sc, c = feat_ref.shape

    def body(j, acc):
        off = pl.multiple_of(j * 8, 8)
        blk = feat_ref[:, pl.ds(off, 8), :].astype(jnp.float32)   # (TB, 8, C)
        return acc + jnp.sum(blk, axis=1)

    pooled_acc[...] += lax.fori_loop(0, sc // 8, body,
                                     jnp.zeros((tb, c), jnp.float32), unroll=True)

    # ---- heads run only once, on the last spatial step.
    @pl.when(s == pl.num_programs(1) - 1)
    def _():
        pooled_bf = pooled_acc[...].astype(jnp.bfloat16)           # (TB, C)

        # Single MXU pass for BOTH first-layer linears (gender + bmi), N = 1024.
        h = jnp.dot(pooled_bf, w13_ref[...],
                    preferred_element_type=jnp.float32)            # (TB, 2H)

        # gender_fc: Linear(960,512) -> BN(eval, folded) -> ReLU -> Dropout(eval=id)
        #            -> Linear(512,2) -> softmax
        h1 = jnp.maximum(h[:, :HIDDEN] + t1_ref[...], 0.0)
        logits = jnp.dot(h1.astype(jnp.bfloat16), w2_ref[...],
                         preferred_element_type=jnp.float32) + b2_ref[...]   # (TB, 128)
        m = jnp.max(logits, axis=-1, keepdims=True)
        e = jnp.exp(logits - m)
        denom = jnp.sum(e, axis=-1, keepdims=True)
        gender = e * (1.0 / denom)          # exact reciprocal on (TB,1): ~free
        gender_ref[...] = gender

        # bmi_fc on cat([pooled, gender], dim=1): the pooled@W3[:960] part came
        # from the merged dot above; the K=2 gender part is two VPU rank-1 MACs.
        g0 = gender[:, 0:1]
        g1 = gender[:, 1:2]
        h2 = (h[:, HIDDEN:]
              + g0 * w3g_ref[0:1, :]
              + g1 * w3g_ref[1:2, :]
              + t2_ref[...])                                        # (TB, H)
        h2 = jnp.maximum(h2, 0.0)
        bmi_ref[...] = jnp.dot(h2.astype(jnp.bfloat16), w4_ref[...],
                               preferred_element_type=jnp.float32) + b4_ref[...]


def init_params(key):
    """Deterministic synthetic parameters matching the module's head shapes."""
    ks = jax.random.split(key, 6)
    p = {}
    # gender_fc: Linear(960,512), BN(512), Linear(512,2)
    p["w1"] = jax.random.normal(ks[0], (FEATURE_DIM, HIDDEN), jnp.float32) * 0.02
    p["b1"] = jnp.zeros((1, HIDDEN), jnp.float32)
    p["bn1_gamma"] = jnp.ones((1, HIDDEN), jnp.float32)
    p["bn1_beta"] = jnp.zeros((1, HIDDEN), jnp.float32)
    p["bn1_mean"] = jnp.zeros((1, HIDDEN), jnp.float32)
    p["bn1_var"] = jnp.ones((1, HIDDEN), jnp.float32)
    p["w2"] = jax.random.normal(ks[1], (HIDDEN, 2), jnp.float32) * 0.02
    p["b2"] = jnp.zeros((1, 2), jnp.float32)
    # bmi_fc: Linear(962,512), BN(512), Linear(512,1)
    p["w3"] = jax.random.normal(ks[2], (FEATURE_DIM + 2, HIDDEN), jnp.float32) * 0.02
    p["b3"] = jnp.zeros((1, HIDDEN), jnp.float32)
    p["bn2_gamma"] = jnp.ones((1, HIDDEN), jnp.float32)
    p["bn2_beta"] = jnp.zeros((1, HIDDEN), jnp.float32)
    p["bn2_mean"] = jnp.zeros((1, HIDDEN), jnp.float32)
    p["bn2_var"] = jnp.ones((1, HIDDEN), jnp.float32)
    p["w4"] = jax.random.normal(ks[3], (HIDDEN, 1), jnp.float32) * 0.02
    p["b4"] = jnp.zeros((1, 1), jnp.float32)
    return p


def _round_up(x, m):
    return ((x + m - 1) // m) * m


def _pick_spatial_chunk(s_pad8, cap):
    """Largest multiple-of-8 chunk <= cap minimizing spatial zero-padding."""
    best, best_pad = 8, _round_up(s_pad8, 8)
    for chunk in range(8, min(cap, s_pad8) + 1, 8):
        padded = _round_up(s_pad8, chunk)
        if padded < best_pad or (padded == best_pad and chunk > best):
            best, best_pad = chunk, padded
    return best, best_pad


@functools.partial(jax.jit, static_argnames=("batch_tile", "spatial_chunk_cap"))
def bmi_predictor_heads(feats_nchw, params, *, batch_tile=64, spatial_chunk_cap=64):
    """feats_nchw: (B, 960, Hf, Wf) backbone feature maps (NCHW, like PyTorch).

    NOTE: PyTorch nn.Linear weights are (out, in); transpose them to the
    (in, out) layout used here when loading a real checkpoint.
    """
    B, C, Hf, Wf = feats_nchw.shape
    S = Hf * Wf

    # Cast to bf16 BEFORE the NCHW->NSC transpose: the transpose is a full HBM
    # read+write of the feature tensor, so doing it at 2 B/elem halves traffic.
    feat = jnp.transpose(feats_nchw.astype(jnp.bfloat16).reshape(B, C, S), (0, 2, 1))

    # ---- fold eval-mode BatchNorm1d + first-layer bias + 1/S pool scale ----
    s1 = params["bn1_gamma"] / jnp.sqrt(params["bn1_var"] + BN_EPS)
    t1 = params["bn1_beta"] - params["bn1_mean"] * s1 + params["b1"] * s1
    s2 = params["bn2_gamma"] / jnp.sqrt(params["bn2_var"] + BN_EPS)
    t2 = params["bn2_beta"] - params["bn2_mean"] * s2 + params["b3"] * s2

    inv_s = jnp.float32(1.0 / S)
    w1_eff = (params["w1"] * s1 * inv_s).astype(jnp.bfloat16)              # (960, 512)
    w3f_eff = (params["w3"][:FEATURE_DIM] * s2 * inv_s).astype(jnp.bfloat16)
    w13 = jnp.concatenate([w1_eff, w3f_eff], axis=1)                       # (960, 1024)
    w3g_eff = (params["w3"][FEATURE_DIM:] * s2).astype(jnp.float32)        # (2, 512)

    # Tiny-N output layers padded to 128 lanes (lane-dense MXU / stores); bf16
    # weights (single-pass MXU), f32 biases. Pad logits get -1e30 bias so the
    # softmax over all 128 lanes assigns exactly zero probability to pads.
    w2_pad = jnp.zeros((HIDDEN, LANES), jnp.float32).at[:, :2].set(
        params["w2"]).astype(jnp.bfloat16)
    b2_pad = jnp.full((1, LANES), NEG_BIG, jnp.float32).at[:, :2].set(params["b2"])
    w4_pad = jnp.zeros((HIDDEN, LANES), jnp.float32).at[:, :1].set(
        params["w4"]).astype(jnp.bfloat16)
    b4_pad = jnp.zeros((1, LANES), jnp.float32).at[:, :1].set(params["b4"])

    # ---- batch padding / tiling: keep >=2 batch grid steps when possible so
    #      v7x's two TensorCores can both work the "parallel" axis.
    b_pad = max(_round_up(B, 8), 8)
    tb = min(batch_tile, b_pad)
    if b_pad >= 16 and b_pad // tb < 2:
        tb = _round_up(b_pad // 2, 8)
    b_pad = _round_up(b_pad, tb)

    # ---- spatial chunking: per-step VMEM independent of backbone resolution.
    s_pad8 = _round_up(S, 8)
    s_chunk, s_pad = _pick_spatial_chunk(s_pad8, spatial_chunk_cap)

    if (b_pad != B) or (s_pad != S):
        feat = jnp.pad(feat, ((0, b_pad - B), (0, s_pad - S), (0, 0)))

    n_b = b_pad // tb
    n_s = s_pad // s_chunk

    resident = lambda i, s: (0, 0)          # weights stay resident across the grid
    w_spec = lambda shape: pl.BlockSpec(shape, resident,
                                        pipeline_mode=pl.Buffered(1))  # single buffer

    grid_spec = pltpu.PrefetchScalarGridSpec(
        num_scalar_prefetch=0,
        grid=(n_b, n_s),
        in_specs=[
            pl.BlockSpec((tb, s_chunk, C), lambda i, s: (i, s, 0)),   # feat (streamed)
            w_spec((FEATURE_DIM, 2 * HIDDEN)),   # w13 (merged first-layer weights)
            w_spec((1, HIDDEN)),                 # t1
            w_spec((HIDDEN, LANES)),             # w2_pad
            w_spec((1, LANES)),                  # b2_pad
            w_spec((2, HIDDEN)),                 # w3g_eff
            w_spec((1, HIDDEN)),                 # t2
            w_spec((HIDDEN, LANES)),             # w4_pad
            w_spec((1, LANES)),                  # b4_pad
        ],
        out_specs=(
            pl.BlockSpec((tb, LANES), lambda i, s: (i, 0)),   # gender (padded lanes)
            pl.BlockSpec((tb, LANES), lambda i, s: (i, 0)),   # bmi    (padded lanes)
        ),
        scratch_shapes=[pltpu.VMEM((tb, C), jnp.float32)],     # pooled accumulator
    )

    gender_full, bmi_full = pl.pallas_call(
        bmi_head_kernel,
        out_shape=(jax.ShapeDtypeStruct((b_pad, LANES), jnp.float32),
                   jax.ShapeDtypeStruct((b_pad, LANES), jnp.float32)),
        grid_spec=grid_spec,
        compiler_params=pltpu.CompilerParams(
            dimension_semantics=("parallel", "arbitrary"),   # batch || , spatial reduce
            vmem_limit_bytes=32 * 1024 * 1024),              # fits v5e/v6e/v7x budgets
    )(feat, w13, t1, w2_pad, b2_pad, w3g_eff, t2, w4_pad, b4_pad)

    return gender_full[:B, :2], bmi_full[:B, :1]


def reference_heads(feats_nchw, params):
    """Pure-JAX f32 reference of the PyTorch head math (eval mode)."""
    B, C, Hf, Wf = feats_nchw.shape
    pooled = jnp.mean(feats_nchw.reshape(B, C, Hf * Wf), axis=-1)
    s1 = params["bn1_gamma"] / jnp.sqrt(params["bn1_var"] + BN_EPS)
    t1 = params["bn1_beta"] - params["bn1_mean"] * s1
    h1 = jnp.maximum((pooled @ params["w1"] + params["b1"]) * s1 + t1, 0.0)
    gender = jax.nn.softmax(h1 @ params["w2"] + params["b2"], axis=-1)
    comb = jnp.concatenate([pooled, gender], axis=1)
    s2 = params["bn2_gamma"] / jnp.sqrt(params["bn2_var"] + BN_EPS)
    t2 = params["bn2_beta"] - params["bn2_mean"] * s2
    h2 = jnp.maximum((comb @ params["w3"] + params["b3"]) * s2 + t2, 0.0)
    bmi = h2 @ params["w4"] + params["b4"]
    return gender, bmi


if __name__ == "__main__":
    key = jax.random.PRNGKey(0)
    k_feat, k_params = jax.random.split(key)

    # Small but module-consistent shapes: batch=2, channels=960 (MobileNetV3-L
    # final feature dim), 4x4 backbone feature map.
    feats = jax.random.normal(k_feat, (2, FEATURE_DIM, 4, 4), jnp.float32)
    params = init_params(k_params)

    gender_probs, bmi = jax.block_until_ready(bmi_predictor_heads(feats, params))

    assert gender_probs.shape == (2, 2) and bmi.shape == (2, 1)
    # Softmax rows sum to ~1.
    assert bool(jnp.all(jnp.abs(jnp.sum(gender_probs, axis=1) - 1.0) < 5e-3))
    # Match the pure-JAX reference (bf16 feats/weights => loose tolerance).
    g_ref, b_ref = reference_heads(feats, params)
    assert bool(jnp.allclose(gender_probs, g_ref, atol=2e-2, rtol=2e-2))
    assert bool(jnp.allclose(bmi, b_ref, atol=2e-2, rtol=2e-2))
    print("KERNEL_OK")
</pallas_src>

<mosaic_0001>
module attributes {stable_mosaic.version = 11 : i64} {
  func.func @bmi_head_kernel(%arg0: i32, %arg1: i32, %arg2: memref<8x16x960xbf16, #tpu.memory_space<vmem>>, %arg3: memref<960x1024xbf16, #tpu.memory_space<vmem>>, %arg4: memref<1x512xf32, #tpu.memory_space<vmem>>, %arg5: memref<512x128xbf16, #tpu.memory_space<vmem>>, %arg6: memref<1x128xf32, #tpu.memory_space<vmem>>, %arg7: memref<2x512xf32, #tpu.memory_space<vmem>>, %arg8: memref<1x512xf32, #tpu.memory_space<vmem>>, %arg9: memref<512x128xbf16, #tpu.memory_space<vmem>>, %arg10: memref<1x128xf32, #tpu.memory_space<vmem>>, %arg11: memref<8x128xf32, #tpu.memory_space<vmem>>, %arg12: memref<8x128xf32, #tpu.memory_space<vmem>>, %arg13: memref<8x960xf32, #tpu.memory_space<vmem>>) attributes {dimension_semantics = [#tpu.dimension_semantics<parallel>, #tpu.dimension_semantics<arbitrary>], iteration_bounds = array<i64: 1, 1>, scalar_prefetch = 0 : i64, scratch_operands = 1 : i64, tpu.core_type = #tpu.core_type<tc>, window_params = [{transform_indices = @transform_0, window_bounds = array<i64: 8, 16, 960>}, {pipeline_mode = #tpu.pipeline_mode<synchronous>, transform_indices = @transform_1, window_bounds = array<i64: 960, 1024>}, {pipeline_mode = #tpu.pipeline_mode<synchronous>, transform_indices = @transform_2, window_bounds = array<i64: 1, 512>}, {pipeline_mode = #tpu.pipeline_mode<synchronous>, transform_indices = @transform_3, window_bounds = array<i64: 512, 128>}, {pipeline_mode = #tpu.pipeline_mode<synchronous>, transform_indices = @transform_4, window_bounds = array<i64: 1, 128>}, {pipeline_mode = #tpu.pipeline_mode<synchronous>, transform_indices = @transform_5, window_bounds = array<i64: 2, 512>}, {pipeline_mode = #tpu.pipeline_mode<synchronous>, transform_indices = @transform_6, window_bounds = array<i64: 1, 512>}, {pipeline_mode = #tpu.pipeline_mode<synchronous>, transform_indices = @transform_7, window_bounds = array<i64: 512, 128>}, {pipeline_mode = #tpu.pipeline_mode<synchronous>, transform_indices = @transform_8, window_bounds = array<i64: 1, 128>}, {transform_indices = @transform_9, window_bounds = array<i64: 8, 128>}, {transform_indices = @transform_10, window_bounds = array<i64: 8, 128>}]} {
    %c0_i32 = arith.constant 0 : i32
    %0 = arith.cmpi eq, %arg1, %c0_i32 : i32
    %1 = arith.extui %0 : i1 to i32
    %c0_i32_0 = arith.constant 0 : i32
    %2 = arith.cmpi ne, %1, %c0_i32_0 : i32
    scf.if %2 {
      %cst_14 = arith.constant 0.000000e+00 : f32
      %24 = vector.broadcast %cst_14 : f32 to vector<8x960xf32>
      %c0_15 = arith.constant 0 : index
      %c0_16 = arith.constant 0 : index
      %25 = vector.load %arg13[%c0_15, %c0_16] : memref<8x960xf32, #tpu.memory_space<vmem>>, vector<8x960xf32>
      tpu.vector_store %arg13[%c0_15, %c0_16], %24 {strides = array<i32>} : memref<8x960xf32, #tpu.memory_space<vmem>>, vector<8x960xf32>,
    } else {
    }
    %c0 = arith.constant 0 : index
    %c0_1 = arith.constant 0 : index
    %3 = vector.load %arg13[%c0, %c0_1] : memref<8x960xf32, #tpu.memory_space<vmem>>, vector<8x960xf32>
    %cst = arith.constant 0.000000e+00 : f32
    %4 = vector.broadcast %cst : f32 to vector<8x960xf32>
    %c0_i32_2 = arith.constant 0 : i32
    %c8_i32 = arith.constant 8 : i32
    %5 = arith.muli %c0_i32_2, %c8_i32 : i32
    %6 = tpu.assume_multiple %5, 8 : i32
    %c0_3 = arith.constant 0 : index
    %7 = arith.index_cast %6 : i32 to index
    %c0_4 = arith.constant 0 : index
    %8 = vector.load %arg2[%c0_3, %7, %c0_4] : memref<8x16x960xbf16, #tpu.memory_space<vmem>>, vector<8x8x960xbf16>
    %9 = arith.extf %8 : vector<8x8x960xbf16> to vector<8x8x960xf32>
    %cst_5 = arith.constant dense<0.000000e+00> : vector<8x960xf32>
    %10 = vector.multi_reduction <add>, %9, %cst_5 [1] : vector<8x8x960xf32> to vector<8x960xf32>
    %11 = arith.addf %4, %10 : vector<8x960xf32>
    %c1_i32 = arith.constant 1 : i32
    %c8_i32_6 = arith.constant 8 : i32
    %12 = arith.muli %c1_i32, %c8_i32_6 : i32
    %13 = tpu.assume_multiple %12, 8 : i32
    %c0_7 = arith.constant 0 : index
    %14 = arith.index_cast %13 : i32 to index
    %c0_8 = arith.constant 0 : index
    %15 = vector.load %arg2[%c0_7, %14, %c0_8] : memref<8x16x960xbf16, #tpu.memory_space<vmem>>, vector<8x8x960xbf16>
    %16 = arith.extf %15 : vector<8x8x960xbf16> to vector<8x8x960xf32>
    %cst_9 = arith.constant dense<0.000000e+00> : vector<8x960xf32>
    %17 = vector.multi_reduction <add>, %16, %cst_9 [1] : vector<8x8x960xf32> to vector<8x960xf32>
    %18 = arith.addf %11, %17 : vector<8x960xf32>
    %c2_i32 = arith.constant 2 : i32
    %19 = arith.addf %3, %18 : vector<8x960xf32>
    %c0_10 = arith.constant 0 : index
    %c0_11 = arith.constant 0 : index
    %20 = vector.load %arg13[%c0_10, %c0_11] : memref<8x960xf32, #tpu.memory_space<vmem>>, vector<8x960xf32>
    tpu.vector_store %arg13[%c0_10, %c0_11], %19 {strides = array<i32>} : memref<8x960xf32, #tpu.memory_space<vmem>>, vector<8x960xf32>,
    %c0_i32_12 = arith.constant 0 : i32
    %21 = arith.cmpi eq, %arg1, %c0_i32_12 : i32
    %22 = arith.extui %21 : i1 to i32
    %c0_i32_13 = arith.constant 0 : i32
    %23 = arith.cmpi ne, %22, %c0_i32_13 : i32
    scf.if %23 {
      %c0_14 = arith.constant 0 : index
      %c0_15 = arith.constant 0 : index
      %24 = vector.load %arg13[%c0_14, %c0_15] : memref<8x960xf32, #tpu.memory_space<vmem>>, vector<8x960xf32>
      %25 = arith.truncf %24 : vector<8x960xf32> to vector<8x960xbf16>
      %c0_16 = arith.constant 0 : index
      %c0_17 = arith.constant 0 : index
      %26 = vector.load %arg3[%c0_16, %c0_17] : memref<960x1024xbf16, #tpu.memory_space<vmem>>, vector<960x1024xbf16>
      %cst_18 = arith.constant dense<0.000000e+00> : vector<8x1024xf32>
      %27 = tpu.matmul %25, %26, %cst_18 {dimension_numbers = #tpu.dot_dimension_numbers<[1], [0], [0], [1], [0, 0, 1, 1], [], []>} : vector<8x960xbf16>, vector<960x1024xbf16>, vector<8x1024xf32> -> vector<8x1024xf32>
      %28 = vector.extract_strided_slice %27 {offsets = [0, 0], sizes = [8, 512], strides = [1, 1]} : vector<8x1024xf32> to vector<8x512xf32>
      %c0_19 = arith.constant 0 : index
      %c0_20 = arith.constant 0 : index
      %29 = vector.load %arg4[%c0_19, %c0_20] : memref<1x512xf32, #tpu.memory_space<vmem>>, vector<1x512xf32>
      %30 = vector.broadcast %29 : vector<1x512xf32> to vector<8x512xf32>
      %31 = arith.addf %28, %30 : vector<8x512xf32>
      %cst_21 = arith.constant 0.000000e+00 : f32
      %32 = vector.broadcast %cst_21 : f32 to vector<8x512xf32>
      %33 = arith.maximumf %31, %32 : vector<8x512xf32>
      %34 = arith.truncf %33 : vector<8x512xf32> to vector<8x512xbf16>
      %c0_22 = arith.constant 0 : index
      %c0_23 = arith.constant 0 : index
      %35 = vector.load %arg5[%c0_22, %c0_23] : memref<512x128xbf16, #tpu.memory_space<vmem>>, vector<512x128xbf16>
      %cst_24 = arith.constant dense<0.000000e+00> : vector<8x128xf32>
      %36 = tpu.matmul %34, %35, %cst_24 {dimension_numbers = #tpu.dot_dimension_numbers<[1], [0], [0], [1], [0, 0, 1, 1], [], []>} : vector<8x512xbf16>, vector<512x128xbf16>, vector<8x128xf32> -> vector<8x128xf32>
      %c0_25 = arith.constant 0 : index
      %c0_26 = arith.constant 0 : index
      %37 = vector.load %arg6[%c0_25, %c0_26] : memref<1x128xf32, #tpu.memory_space<vmem>>, vector<1x128xf32>
      %38 = vector.broadcast %37 : vector<1x128xf32> to vector<8x128xf32>
      %39 = arith.addf %36, %38 : vector<8x128xf32>
      %cst_27 = arith.constant dense<0xFF800000> : vector<8xf32>
      %40 = vector.multi_reduction <maximumf>, %39, %cst_27 [1] : vector<8x128xf32> to vector<8xf32>
      %41 = vector.shape_cast %40 : vector<8xf32> to vector<8x1xf32>
      %42 = vector.broadcast %41 : vector<8x1xf32> to vector<8x128xf32>
      %43 = arith.subf %39, %42 : vector<8x128xf32>
      %44 = math.exp %43 : vector<8x128xf32>
      %cst_28 = arith.constant dense<0.000000e+00> : vector<8xf32>
      %45 = vector.multi_reduction <add>, %44, %cst_28 [1] : vector<8x128xf32> to vector<8xf32>
      %46 = vector.shape_cast %45 : vector<8xf32> to vector<8x1xf32>
      %cst_29 = arith.constant 1.000000e+00 : f32
      %47 = vector.broadcast %cst_29 : f32 to vector<8x1xf32>
      %48 = arith.divf %47, %46 : vector<8x1xf32>
      %49 = vector.broadcast %48 : vector<8x1xf32> to vector<8x128xf32>
      %50 = arith.mulf %44, %49 : vector<8x128xf32>
      %c0_30 = arith.constant 0 : index
      %c0_31 = arith.constant 0 : index
      %51 = vector.load %arg11[%c0_30, %c0_31] : memref<8x128xf32, #tpu.memory_space<vmem>>, vector<8x128xf32>
      tpu.vector_store %arg11[%c0_30, %c0_31], %50 {strides = array<i32>} : memref<8x128xf32, #tpu.memory_space<vmem>>, vector<8x128xf32>,
      %52 = vector.extract_strided_slice %50 {offsets = [0, 0], sizes = [8, 1], strides = [1, 1]} : vector<8x128xf32> to vector<8x1xf32>
      %53 = vector.extract_strided_slice %50 {offsets = [0, 1], sizes = [8, 1], strides = [1, 1]} : vector<8x128xf32> to vector<8x1xf32>
      %54 = vector.extract_strided_slice %27 {offsets = [0, 512], sizes = [8, 512], strides = [1, 1]} : vector<8x1024xf32> to vector<8x512xf32>
      %c0_32 = arith.constant 0 : index
      %c0_33 = arith.constant 0 : index
      %55 = vector.load %arg7[%c0_32, %c0_33] : memref<2x512xf32, #tpu.memory_space<vmem>>, vector<1x512xf32>
      %56 = vector.broadcast %52 : vector<8x1xf32> to vector<8x512xf32>
      %57 = vector.broadcast %55 : vector<1x512xf32> to vector<8x512xf32>
      %58 = arith.mulf %56, %57 : vector<8x512xf32>
      %59 = arith.addf %54, %58 : vector<8x512xf32>
      %c1 = arith.constant 1 : index
      %c0_34 = arith.constant 0 : index
      %60 = vector.load %arg7[%c1, %c0_34] : memref<2x512xf32, #tpu.memory_space<vmem>>, vector<1x512xf32>
      %61 = vector.broadcast %53 : vector<8x1xf32> to vector<8x512xf32>
      %62 = vector.broadcast %60 : vector<1x512xf32> to vector<8x512xf32>
      %63 = arith.mulf %61, %62 : vector<8x512xf32>
      %64 = arith.addf %59, %63 : vector<8x512xf32>
      %c0_35 = arith.constant 0 : index
      %c0_36 = arith.constant 0 : index
      %65 = vector.load %arg8[%c0_35, %c0_36] : memref<1x512xf32, #tpu.memory_space<vmem>>, vector<1x512xf32>
      %66 = vector.broadcast %65 : vector<1x512xf32> to vector<8x512xf32>
      %67 = arith.addf %64, %66 : vector<8x512xf32>
      %cst_37 = arith.constant 0.000000e+00 : f32
      %68 = vector.broadcast %cst_37 : f32 to vector<8x512xf32>
      %69 = arith.maximumf %67, %68 : vector<8x512xf32>
      %70 = arith.truncf %69 : vector<8x512xf32> to vector<8x512xbf16>
      %c0_38 = arith.constant 0 : index
      %c0_39 = arith.constant 0 : index
      %71 = vector.load %arg9[%c0_38, %c0_39] : memref<512x128xbf16, #tpu.memory_space<vmem>>, vector<512x128xbf16>
      %cst_40 = arith.constant dense<0.000000e+00> : vector<8x128xf32>
      %72 = tpu.matmul %70, %71, %cst_40 {dimension_numbers = #tpu.dot_dimension_numbers<[1], [0], [0], [1], [0, 0, 1, 1], [], []>} : vector<8x512xbf16>, vector<512x128xbf16>, vector<8x128xf32> -> vector<8x128xf32>
      %c0_41 = arith.constant 0 : index
      %c0_42 = arith.constant 0 : index
      %73 = vector.load %arg10[%c0_41, %c0_42] : memref<1x128xf32, #tpu.memory_space<vmem>>, vector<1x128xf32>
      %74 = vector.broadcast %73 : vector<1x128xf32> to vector<8x128xf32>
      %75 = arith.addf %72, %74 : vector<8x128xf32>
      %c0_43 = arith.constant 0 : index
      %c0_44 = arith.constant 0 : index
      %76 = vector.load %arg12[%c0_43, %c0_44] : memref<8x128xf32, #tpu.memory_space<vmem>>, vector<8x128xf32>
      tpu.vector_store %arg12[%c0_43, %c0_44], %75 {strides = array<i32>} : memref<8x128xf32, #tpu.memory_space<vmem>>, vector<8x128xf32>,
    } else {
    }
    return
  }
  func.func @transform_0(%arg0: i32, %arg1: i32) -> (i32, i32, i32) {
    %c0_i32 = arith.constant 0 : i32
    %c0_i32_0 = arith.constant 0 : i32
    return %arg0, %arg1, %c0_i32 : i32, i32, i32
  }
  func.func @transform_1(%arg0: i32, %arg1: i32) -> (i32, i32) {
    %c0_i32 = arith.constant 0 : i32
    %c0_i32_0 = arith.constant 0 : i32
    %c0_i32_1 = arith.constant 0 : i32
    return %c0_i32, %c0_i32_0 : i32, i32
  }
  func.func @transform_2(%arg0: i32, %arg1: i32) -> (i32, i32) {
    %c0_i32 = arith.constant 0 : i32
    %c0_i32_0 = arith.constant 0 : i32
    %c0_i32_1 = arith.constant 0 : i32
    return %c0_i32, %c0_i32_0 : i32, i32
  }
  func.func @transform_3(%arg0: i32, %arg1: i32) -> (i32, i32) {
    %c0_i32 = arith.constant 0 : i32
    %c0_i32_0 = arith.constant 0 : i32
    %c0_i32_1 = arith.constant 0 : i32
    return %c0_i32, %c0_i32_0 : i32, i32
  }
  func.func @transform_4(%arg0: i32, %arg1: i32) -> (i32, i32) {
    %c0_i32 = arith.constant 0 : i32
    %c0_i32_0 = arith.constant 0 : i32
    %c0_i32_1 = arith.constant 0 : i32
    return %c0_i32, %c0_i32_0 : i32, i32
  }
  func.func @transform_5(%arg0: i32, %arg1: i32) -> (i32, i32) {
    %c0_i32 = arith.constant 0 : i32
    %c0_i32_0 = arith.constant 0 : i32
    %c0_i32_1 = arith.constant 0 : i32
    return %c0_i32, %c0_i32_0 : i32, i32
  }
  func.func @transform_6(%arg0: i32, %arg1: i32) -> (i32, i32) {
    %c0_i32 = arith.constant 0 : i32
    %c0_i32_0 = arith.constant 0 : i32
    %c0_i32_1 = arith.constant 0 : i32
    return %c0_i32, %c0_i32_0 : i32, i32
  }
  func.func @transform_7(%arg0: i32, %arg1: i32) -> (i32, i32) {
    %c0_i32 = arith.constant 0 : i32
    %c0_i32_0 = arith.constant 0 : i32
    %c0_i32_1 = arith.constant 0 : i32
    return %c0_i32, %c0_i32_0 : i32, i32
  }
  func.func @transform_8(%arg0: i32, %arg1: i32) -> (i32, i32) {
    %c0_i32 = arith.constant 0 : i32
    %c0_i32_0 = arith.constant 0 : i32
    %c0_i32_1 = arith.constant 0 : i32
    return %c0_i32, %c0_i32_0 : i32, i32
  }
  func.func @transform_9(%arg0: i32, %arg1: i32) -> (i32, i32) {
    %c0_i32 = arith.constant 0 : i32
    %c0_i32_0 = arith.constant 0 : i32
    return %arg0, %c0_i32 : i32, i32
  }
  func.func @transform_10(%arg0: i32, %arg1: i32) -> (i32, i32) {
    %c0_i32 = arith.constant 0 : i32
    %c0_i32_0 = arith.constant 0 : i32
    return %arg0, %c0_i32 : i32, i32
  }
}

</mosaic_0001>

<llo_original>
// kernel: bmi_predictor_heads.1
$region0: #{bmi_predictor_heads.1}
  #allocation0 [shape = 'u32[]', space=smem, size = 0x4, offset = 0x4, fixed_abs, tag = 'smem constant byte address 0x4 - core index']
  #allocation1 [shape = 'u32[144,128]{1,0:T(1,128)}', space=vmem, size = 0x12000, scoped, tag = 'internal scratch']
  #allocation2 [shape = 'f32[8,960]{1,0:T(8,128)}', space=vmem, size = 0x8000, scoped, tag = 'scratch operand']
  %s0 = inlined_call_operand.vmem [shape: bf16[8,16,960], index: 0, kind: input, shape index: {}]
  %s1 = inlined_call_operand.vmem [shape: bf16[960,1024], index: 1, kind: input, shape index: {}]
  %s2 = inlined_call_operand.vmem [shape: f32[1,512], index: 2, kind: input, shape index: {}]
  %s3 = inlined_call_operand.vmem [shape: bf16[512,128], index: 3, kind: input, shape index: {}]
  %s4 = inlined_call_operand.vmem [shape: f32[1,128], index: 4, kind: input, shape index: {}]
  %s5 = inlined_call_operand.vmem [shape: f32[2,512], index: 5, kind: input, shape index: {}]
  %s6 = inlined_call_operand.vmem [shape: f32[1,512], index: 6, kind: input, shape index: {}]
  %s7 = inlined_call_operand.vmem [shape: bf16[512,128], index: 7, kind: input, shape index: {}]
  %s8 = inlined_call_operand.vmem [shape: f32[1,128], index: 8, kind: input, shape index: {}]
  %s9 = inlined_call_operand.vmem [shape: f32[8,128], index: 9, kind: output, shape index: {0}]
  %s10 = inlined_call_operand.vmem [shape: f32[8,128], index: 10, kind: output, shape index: {1}]
  %11 = xla_tuple %s9, %s10
  %s12 = sld [smem:[#allocation0]]
  $region62: #{bmi_predictor_heads.1} parent=0
    _
  %s14 = ssub.s32 1, %s12
  %s15 = scalar_select 0, %s14, %s12
  // Predicated region
  $region2: #{bmi_predictor_heads.1} parent=0 // pred_check
    _
  $region3: #{bmi_predictor_heads.1} parent=0 // pred_check_branch
    %17 = sbr.rel (0) target = $region5
  $region4: #{bmi_predictor_heads.1} parent=0 // pred_region
    _
  $region5: #{bmi_predictor_heads.1} parent=0 // pred_fallthru
    _
  // Predicated region
  $region6: #{bmi_predictor_heads.1} parent=0 // pred_check
    _
  $region7: #{bmi_predictor_heads.1} parent=0 // pred_check_branch
    %19 = sbr.rel (0) target = $region9
  $region8: #{bmi_predictor_heads.1} parent=0 // pred_region
    _
  $region9: #{bmi_predictor_heads.1} parent=0 // pred_fallthru
    _
  // Predicated region
  $region10: #{bmi_predictor_heads.1} parent=0 // pred_check
    _
  $region11: #{bmi_predictor_heads.1} parent=0 // pred_check_branch
    %21 = sbr.rel (0) target = $region13
  $region12: #{bmi_predictor_heads.1} parent=0 // pred_region
    _
  $region13: #{bmi_predictor_heads.1} parent=0 // pred_fallthru
    _
  // Predicated region
  $region14: #{bmi_predictor_heads.1} parent=0 // pred_check
    _
  $region15: #{bmi_predictor_heads.1} parent=0 // pred_check_branch
    %23 = sbr.rel (0) target = $region17
  $region16: #{bmi_predictor_heads.1} parent=0 // pred_region
    _
  $region17: #{bmi_predictor_heads.1} parent=0 // pred_fallthru
    _
  // Predicated region
  $region18: #{bmi_predictor_heads.1} parent=0 // pred_check
    _
  $region19: #{bmi_predictor_heads.1} parent=0 // pred_check_branch
    %25 = sbr.rel (0) target = $region21
  $region20: #{bmi_predictor_heads.1} parent=0 // pred_region
    _
  $region21: #{bmi_predictor_heads.1} parent=0 // pred_fallthru
    _
  // Predicated region
  $region22: #{bmi_predictor_heads.1} parent=0 // pred_check
    _
  $region23: #{bmi_predictor_heads.1} parent=0 // pred_check_branch
    %27 = sbr.rel (0) target = $region25
  $region24: #{bmi_predictor_heads.1} parent=0 // pred_region
    _
  $region25: #{bmi_predictor_heads.1} parent=0 // pred_fallthru
    _
  // Predicated region
  $region26: #{bmi_predictor_heads.1} parent=0 // pred_check
    _
  $region27: #{bmi_predictor_heads.1} parent=0 // pred_check_branch
    %29 = sbr.rel (0) target = $region29
  $region28: #{bmi_predictor_heads.1} parent=0 // pred_region
    _
  $region29: #{bmi_predictor_heads.1} parent=0 // pred_fallthru
    _
  // Predicated region
  $region30: #{bmi_predictor_heads.1} parent=0 // pred_check
    _
  $region31: #{bmi_predictor_heads.1} parent=0 // pred_check_branch
    %31 = sbr.rel (0) target = $region33
  $region32: #{bmi_predictor_heads.1} parent=0 // pred_region
    _
  $region33: #{bmi_predictor_heads.1} parent=0 // pred_fallthru
    _
  // Predicated region
  $region34: #{bmi_predictor_heads.1} parent=0 // pred_check
    _
  $region35: #{bmi_predictor_heads.1} parent=0 // pred_check_branch
    %33 = sbr.rel (0) target = $region37
  $region36: #{bmi_predictor_heads.1} parent=0 // pred_region
    _
  $region37: #{bmi_predictor_heads.1} parent=0 // pred_fallthru
    _
  %p35 = scmp.eq.s32.totalorder 0, 0
  // Predicated region
  $region38: #{bmi_predictor_heads.1} parent=0 // pred_check
    %p36 = pneg %p35
  $region39: #{bmi_predictor_heads.1} parent=0 // pred_check_branch
    %38 = sbr.rel (%p36) target = $region41
  $region40: #{bmi_predictor_heads.1} parent=0 // pred_region
    %39 = vst [vmem:[#allocation2] sm:$0xff] 0.0
    %40 = vst [vmem:[#allocation2 + $0x8] sm:$0xff] 0.0
    %41 = vst [vmem:[#allocation2 + $0x10] sm:$0xff] 0.0
    %42 = vst [vmem:[#allocation2 + $0x18] sm:$0xff] 0.0
    %43 = vst [vmem:[#allocation2 + $0x20] sm:$0xff] 0.0
    %44 = vst [vmem:[#allocation2 + $0x28] sm:$0xff] 0.0
    %45 = vst [vmem:[#allocation2 + $0x30] sm:$0xff] 0.0
    %vm46 = vcmask 523264
    %47 = vst.msk [vmem:[#allocation2 + $0x38] sm:$0xff] %vm46, 0.0
  $region41: #{bmi_predictor_heads.1} parent=0 // pred_fallthru
    _
  %v48 = vld [vmem:[#allocation2] sm:$0xff]
  %v49 = vld [vmem:[#allocation2 + $0x8] sm:$0xff]
  %v50 = vld [vmem:[#allocation2 + $0x10] sm:$0xff]
  %v51 = vld [vmem:[#allocation2 + $0x18] sm:$0xff]
  %v52 = vld [vmem:[#allocation2 + $0x20] sm:$0xff]
  %v53 = vld [vmem:[#allocation2 + $0x28] sm:$0xff]
  %v54 = vld [vmem:[#allocation2 + $0x30] sm:$0xff]
  %v55 = vld [vmem:[#allocation2 + $0x38] sm:$0xff]
  %s56 = smul.u32 0, 8
  %s57 = smul.addr %s56, 4
  %s58 = scalar_lea.vmem %s0, %s57
  %v59 = vld [vmem:[%s58] sm:$0xff]
  %v60 = vld [vmem:[%s58 + $0x8] sm:$0xff]
  %v61 = vld [vmem:[%s58 + $0x10] sm:$0xff]
  %v62 = vld [vmem:[%s58 + $0x18] sm:$0xff]
  %v63 = vld [vmem:[%s58 + $0x40] sm:$0xff]
  %v64 = vld [vmem:[%s58 + $0x48] sm:$0xff]
  %v65 = vld [vmem:[%s58 + $0x50] sm:$0xff]
  %v66 = vld [vmem:[%s58 + $0x58] sm:$0xff]
  %v67 = vld [vmem:[%s58 + $0x80] sm:$0xff]
  %v68 = vld [vmem:[%s58 + $0x88] sm:$0xff]
  %v69 = vld [vmem:[%s58 + $0x90] sm:$0xff]
  %v70 = vld [vmem:[%s58 + $0x98] sm:$0xff]
  %v71 = vld [vmem:[%s58 + $0xc0] sm:$0xff]
  %v72 = vld [vmem:[%s58 + $0xc8] sm:$0xff]
  %v73 = vld [vmem:[%s58 + $0xd0] sm:$0xff]
  %v74 = vld [vmem:[%s58 + $0xd8] sm:$0xff]
  %v75 = vld [vmem:[%s58 + $0x100] sm:$0xff]
  %v76 = vld [vmem:[%s58 + $0x108] sm:$0xff]
  %v77 = vld [vmem:[%s58 + $0x110] sm:$0xff]
  %v78 = vld [vmem:[%s58 + $0x118] sm:$0xff]
  %v79 = vld [vmem:[%s58 + $0x140] sm:$0xff]
  %v80 = vld [vmem:[%s58 + $0x148] sm:$0xff]
  %v81 = vld [vmem:[%s58 + $0x150] sm:$0xff]
  %v82 = vld [vmem:[%s58 + $0x158] sm:$0xff]
  %v83 = vld [vmem:[%s58 + $0x180] sm:$0xff]
  %v84 = vld [vmem:[%s58 + $0x188] sm:$0xff]
  %v85 = vld [vmem:[%s58 + $0x190] sm:$0xff]
  %v86 = vld [vmem:[%s58 + $0x198] sm:$0xff]
  %v87 = vld [vmem:[%s58 + $0x1c0] sm:$0xff]
  %v88 = vld [vmem:[%s58 + $0x1c8] sm:$0xff]
  %v89 = vld [vmem:[%s58 + $0x1d0] sm:$0xff]
  %v90 = vld [vmem:[%s58 + $0x1d8] sm:$0xff]
  %v91 = vunpack.c.l.bf16 %v59
  %v92 = vunpack.c.h.bf16 %v59
  %v93 = vunpack.c.l.bf16 %v60
  %v94 = vunpack.c.h.bf16 %v60
  %v95 = vunpack.c.l.bf16 %v61
  %v96 = vunpack.c.h.bf16 %v61
  %v97 = vunpack.c.l.bf16 %v62
  %v98 = vunpack.c.h.bf16 %v62
  %v99 = vunpack.c.l.bf16 %v63
  %v100 = vunpack.c.h.bf16 %v63
  %v101 = vunpack.c.l.bf16 %v64
  %v102 = vunpack.c.h.bf16 %v64
  %v103 = vunpack.c.l.bf16 %v65
  %v104 = vunpack.c.h.bf16 %v65
  %v105 = vunpack.c.l.bf16 %v66
  %v106 = vunpack.c.h.bf16 %v66
  %v107 = vunpack.c.l.bf16 %v67
  %v108 = vunpack.c.h.bf16 %v67
  %v109 = vunpack.c.l.bf16 %v68
  %v110 = vunpack.c.h.bf16 %v68
  %v111 = vunpack.c.l.bf16 %v69
  %v112 = vunpack.c.h.bf16 %v69
  %v113 = vunpack.c.l.bf16 %v70
  %v114 = vunpack.c.h.bf16 %v70
  %v115 = vunpack.c.l.bf16 %v71
  %v116 = vunpack.c.h.bf16 %v71
  %v117 = vunpack.c.l.bf16 %v72
  %v118 = vunpack.c.h.bf16 %v72
  %v119 = vunpack.c.l.bf16 %v73
  %v120 = vunpack.c.h.bf16 %v73
  %v121 = vunpack.c.l.bf16 %v74
  %v122 = vunpack.c.h.bf16 %v74
  %v123 = vunpack.c.l.bf16 %v75
  %v124 = vunpack.c.h.bf16 %v75
  %v125 = vunpack.c.l.bf16 %v76
  %v126 = vunpack.c.h.bf16 %v76
  %v127 = vunpack.c.l.bf16 %v77
  %v128 = vunpack.c.h.bf16 %v77
  %v129 = vunpack.c.l.bf16 %v78
  %v130 = vunpack.c.h.bf16 %v78
  %v131 = vunpack.c.l.bf16 %v79
  %v132 = vunpack.c.h.bf16 %v79
  %v133 = vunpack.c.l.bf16 %v80
  %v134 = vunpack.c.h.bf16 %v80
  %v135 = vunpack.c.l.bf16 %v81
  %v136 = vunpack.c.h.bf16 %v81
  %v137 = vunpack.c.l.bf16 %v82
  %v138 = vunpack.c.h.bf16 %v82
  %v139 = vunpack.c.l.bf16 %v83
  %v140 = vunpack.c.h.bf16 %v83
  %v141 = vunpack.c.l.bf16 %v84
  %v142 = vunpack.c.h.bf16 %v84
  %v143 = vunpack.c.l.bf16 %v85
  %v144 = vunpack.c.h.bf16 %v85
  %v145 = vunpack.c.l.bf16 %v86
  %v146 = vunpack.c.h.bf16 %v86
  %v147 = vunpack.c.l.bf16 %v87
  %v148 = vunpack.c.h.bf16 %v87
  %v149 = vunpack.c.l.bf16 %v88
  %v150 = vunpack.c.h.bf16 %v88
  %v151 = vunpack.c.l.bf16 %v89
  %v152 = vunpack.c.h.bf16 %v89
  %v153 = vunpack.c.l.bf16 %v90
  %v154 = vunpack.c.h.bf16 %v90
  %v155 = vrot.slane %v91, 4
  %v156 = vadd.f32 %v91, %v155
  %v157 = vrot.slane %v156, 2
  %v158 = vadd.f32 %v156, %v157
  %v159 = vrot.slane %v158, 1
  %v160 = vadd.f32 %v158, %v159
  %v161 = vrot.slane %v92, 4
  %v162 = vadd.f32 %v92, %v161
  %v163 = vrot.slane %v162, 2
  %v164 = vadd.f32 %v162, %v163
  %v165 = vrot.slane %v164, 1
  %v166 = vadd.f32 %v164, %v165
  %v167 = vrot.slane %v93, 4
  %v168 = vadd.f32 %v93, %v167
  %v169 = vrot.slane %v168, 2
  %v170 = vadd.f32 %v168, %v169
  %v171 = vrot.slane %v170, 1
  %v172 = vadd.f32 %v170, %v171
  %v173 = vrot.slane %v94, 4
  %v174 = vadd.f32 %v94, %v173
  %v175 = vrot.slane %v174, 2
  %v176 = vadd.f32 %v174, %v175
  %v177 = vrot.slane %v176, 1
  %v178 = vadd.f32 %v176, %v177
  %v179 = vrot.slane %v95, 4
  %v180 = vadd.f32 %v95, %v179
  %v181 = vrot.slane %v180, 2
  %v182 = vadd.f32 %v180, %v181
  %v183 = vrot.slane %v182, 1
  %v184 = vadd.f32 %v182, %v183
  %v185 = vrot.slane %v96, 4
  %v186 = vadd.f32 %v96, %v185
  %v187 = vrot.slane %v186, 2
  %v188 = vadd.f32 %v186, %v187
  %v189 = vrot.slane %v188, 1
  %v190 = vadd.f32 %v188, %v189
  %v191 = vrot.slane %v97, 4
  %v192 = vadd.f32 %v97, %v191
  %v193 = vrot.slane %v192, 2
  %v194 = vadd.f32 %v192, %v193
  %v195 = vrot.slane %v194, 1
  %v196 = vadd.f32 %v194, %v195
  %vm197 = vcmask 523264
  %v198 = vsel %vm197, %v98, 0.0
  %v199 = vrot.slane %v198, 4
  %v200 = vadd.f32 %v198, %v199
  %v201 = vrot.slane %v200, 2
  %v202 = vadd.f32 %v200, %v201
  %v203 = vrot.slane %v202, 1
  %v204 = vadd.f32 %v202, %v203
  %v205 = vrot.slane %v99, 4
  %v206 = vadd.f32 %v99, %v205
  %v207 = vrot.slane %v206, 2
  %v208 = vadd.f32 %v206, %v207
  %v209 = vrot.slane %v208, 1
  %v210 = vadd.f32 %v208, %v209
  %v211 = vrot.slane %v100, 4
  %v212 = vadd.f32 %v100, %v211
  %v213 = vrot.slane %v212, 2
  %v214 = vadd.f32 %v212, %v213
  %v215 = vrot.slane %v214, 1
  %v216 = vadd.f32 %v214, %v215
  %v217 = vrot.slane %v101, 4
  %v218 = vadd.f32 %v101, %v217
  %v219 = vrot.slane %v218, 2
  %v220 = vadd.f32 %v218, %v219
  %v221 = vrot.slane %v220, 1
  %v222 = vadd.f32 %v220, %v221
  %v223 = vrot.slane %v102, 4
  %v224 = vadd.f32 %v102, %v223
  %v225 = vrot.slane %v224, 2
  %v226 = vadd.f32 %v224, %v225
  %v227 = vrot.slane %v226, 1
  %v228 = vadd.f32 %v226, %v227
  %v229 = vrot.slane %v103, 4
  %v230 = vadd.f32 %v103, %v229
  %v231 = vrot.slane %v230, 2
  %v232 = vadd.f32 %v230, %v231
  %v233 = vrot.slane %v232, 1
  %v234 = vadd.f32 %v232, %v233
  %v235 = vrot.slane %v104, 4
  %v236 = vadd.f32 %v104, %v235
  %v237 = vrot.slane %v236, 2
  %v238 = vadd.f32 %v236, %v237
  %v239 = vrot.slane %v238, 1
  %v240 = vadd.f32 %v238, %v239
  %v241 = vrot.slane %v105, 4
  %v242 = vadd.f32 %v105, %v241
  %v243 = vrot.slane %v242, 2
  %v244 = vadd.f32 %v242, %v243
  %v245 = vrot.slane %v244, 1
  %v246 = vadd.f32 %v244, %v245
  %v247 = vsel %vm197, %v106, 0.0
  %v248 = vrot.slane %v247, 4
  %v249 = vadd.f32 %v247, %v248
  %v250 = vrot.slane %v249, 2
  %v251 = vadd.f32 %v249, %v250
  %v252 = vrot.slane %v251, 1
  %v253 = vadd.f32 %v251, %v252
  %v254 = vrot.slane %v107, 4
  %v255 = vadd.f32 %v107, %v254
  %v256 = vrot.slane %v255, 2
  %v257 = vadd.f32 %v255, %v256
  %v258 = vrot.slane %v257, 1
  %v259 = vadd.f32 %v257, %v258
  %v260 = vrot.slane %v108, 4
  %v261 = vadd.f32 %v108, %v260
  %v262 = vrot.slane %v261, 2
  %v263 = vadd.f32 %v261, %v262
  %v264 = vrot.slane %v263, 1
  %v265 = vadd.f32 %v263, %v264
  %v266 = vrot.slane %v109, 4
  %v267 = vadd.f32 %v109, %v266
  %v268 = vrot.slane %v267, 2
  %v269 = vadd.f32 %v267, %v268
  %v270 = vrot.slane %v269, 1
  %v271 = vadd.f32 %v269, %v270
  %v272 = vrot.slane %v110, 4
  %v273 = vadd.f32 %v110, %v272
  %v274 = vrot.slane %v273, 2
  %v275 = vadd.f32 %v273, %v274
  %v276 = vrot.slane %v275, 1
  %v277 = vadd.f32 %v275, %v276
  %v278 = vrot.slane %v111, 4
  %v279 = vadd.f32 %v111, %v278
  %v280 = vrot.slane %v279, 2
  %v281 = vadd.f32 %v279, %v280
  %v282 = vrot.slane %v281, 1
  %v283 = vadd.f32 %v281, %v282
  %v284 = vrot.slane %v112, 4
  %v285 = vadd.f32 %v112, %v284
  %v286 = vrot.slane %v285, 2
  %v287 = vadd.f32 %v285, %v286
  %v288 = vrot.slane %v287, 1
  %v289 = vadd.f32 %v287, %v288
  %v290 = vrot.slane %v113, 4
  %v291 = vadd.f32 %v113, %v290
  %v292 = vrot.slane %v291, 2
  %v293 = vadd.f32 %v291, %v292
  %v294 = vrot.slane %v293, 1
  %v295 = vadd.f32 %v293, %v294
  %v296 = vsel %vm197, %v114, 0.0
  %v297 = vrot.slane %v296, 4
  %v298 = vadd.f32 %v296, %v297
  %v299 = vrot.slane %v298, 2
  %v300 = vadd.f32 %v298, %v299
  %v301 = vrot.slane %v300, 1
  %v302 = vadd.f32 %v300, %v301
  %v303 = vrot.slane %v115, 4
  %v304 = vadd.f32 %v115, %v303
  %v305 = vrot.slane %v304, 2
  %v306 = vadd.f32 %v304, %v305
  %v307 = vrot.slane %v306, 1
  %v308 = vadd.f32 %v306, %v307
  %v309 = vrot.slane %v116, 4
  %v310 = vadd.f32 %v116, %v309
  %v311 = vrot.slane %v310, 2
  %v312 = vadd.f32 %v310, %v311
  %v313 = vrot.slane %v312, 1
  %v314 = vadd.f32 %v312, %v313
  %v315 = vrot.slane %v117, 4
  %v316 = vadd.f32 %v117, %v315
  %v317 = vrot.slane %v316, 2
  %v318 = vadd.f32 %v316, %v317
  %v319 = vrot.slane %v318, 1
  %v320 = vadd.f32 %v318, %v319
  %v321 = vrot.slane %v118, 4
  %v322 = vadd.f32 %v118, %v321
  %v323 = vrot.slane %v322, 2
  %v324 = vadd.f32 %v322, %v323
  %v325 = vrot.slane %v324, 1
  %v326 = vadd.f32 %v324, %v325
  %v327 = vrot.slane %v119, 4
  %v328 = vadd.f32 %v119, %v327
  %v329 = vrot.slane %v328, 2
  %v330 = vadd.f32 %v328, %v329
  %v331 = vrot.slane %v330, 1
  %v332 = vadd.f32 %v330, %v331
  %v333 = vrot.slane %v120, 4
  %v334 = vadd.f32 %v120, %v333
  %v335 = vrot.slane %v334, 2
  %v336 = vadd.f32 %v334, %v335
  %v337 = vrot.slane %v336, 1
  %v338 = vadd.f32 %v336, %v337
  %v339 = vrot.slane %v121, 4
  %v340 = vadd.f32 %v121, %v339
  %v341 = vrot.slane %v340, 2
  %v342 = vadd.f32 %v340, %v341
  %v343 = vrot.slane %v342, 1
  %v344 = vadd.f32 %v342, %v343
  %v345 = vsel %vm197, %v122, 0.0
  %v346 = vrot.slane %v345, 4
  %v347 = vadd.f32 %v345, %v346
  %v348 = vrot.slane %v347, 2
  %v349 = vadd.f32 %v347, %v348
  %v350 = vrot.slane %v349, 1
  %v351 = vadd.f32 %v349, %v350
  %v352 = vrot.slane %v123, 4
  %v353 = vadd.f32 %v123, %v352
  %v354 = vrot.slane %v353, 2
  %v355 = vadd.f32 %v353, %v354
  %v356 = vrot.slane %v355, 1
  %v357 = vadd.f32 %v355, %v356
  %v358 = vrot.slane %v124, 4
  %v359 = vadd.f32 %v124, %v358
  %v360 = vrot.slane %v359, 2
  %v361 = vadd.f32 %v359, %v360
  %v362 = vrot.slane %v361, 1
  %v363 = vadd.f32 %v361, %v362
  %v364 = vrot.slane %v125, 4
  %v365 = vadd.f32 %v125, %v364
  %v366 = vrot.slane %v365, 2
  %v367 = vadd.f32 %v365, %v366
  %v368 = vrot.slane %v367, 1
  %v369 = vadd.f32 %v367, %v368
  %v370 = vrot.slane %v126, 4
  %v371 = vadd.f32 %v126, %v370
  %v372 = vrot.slane %v371, 2
  %v373 = vadd.f32 %v371, %v372
  %v374 = vrot.slane %v373, 1
  %v375 = vadd.f32 %v373, %v374
  %v376 = vrot.slane %v127, 4
  %v377 = vadd.f32 %v127, %v376
  %v378 = vrot.slane %v377, 2
  %v379 = vadd.f32 %v377, %v378
  %v380 = vrot.slane %v379, 1
  %v381 = vadd.f32 %v379, %v380
  %v382 = vrot.slane %v128, 4
  %v383 = vadd.f32 %v128, %v382
  %v384 = vrot.slane %v383, 2
  %v385 = vadd.f32 %v383, %v384
  %v386 = vrot.slane %v385, 1
  %v387 = vadd.f32 %v385, %v386
  %v388 = vrot.slane %v129, 4
  %v389 = vadd.f32 %v129, %v388
  %v390 = vrot.slane %v389, 2
  %v391 = vadd.f32 %v389, %v390
  %v392 = vrot.slane %v391, 1
  %v393 = vadd.f32 %v391, %v392
  %v394 = vsel %vm197, %v130, 0.0
  %v395 = vrot.slane %v394, 4
  %v396 = vadd.f32 %v394, %v395
  %v397 = vrot.slane %v396, 2
  %v398 = vadd.f32 %v396, %v397
  %v399 = vrot.slane %v398, 1
  %v400 = vadd.f32 %v398, %v399
  %v401 = vrot.slane %v131, 4
  %v402 = vadd.f32 %v131, %v401
  %v403 = vrot.slane %v402, 2
  %v404 = vadd.f32 %v402, %v403
  %v405 = vrot.slane %v404, 1
  %v406 = vadd.f32 %v404, %v405
  %v407 = vrot.slane %v132, 4
  %v408 = vadd.f32 %v132, %v407
  %v409 = vrot.slane %v408, 2
  %v410 = vadd.f32 %v408, %v409
  %v411 = vrot.slane %v410, 1
  %v412 = vadd.f32 %v410, %v411
  %v413 = vrot.slane %v133, 4
  %v414 = vadd.f32 %v133, %v413
  %v415 = vrot.slane %v414, 2
  %v416 = vadd.f32 %v414, %v415
  %v417 = vrot.slane %v416, 1
  %v418 = vadd.f32 %v416, %v417
  %v419 = vrot.slane %v134, 4
  %v420 = vadd.f32 %v134, %v419
  %v421 = vrot.slane %v420, 2
  %v422 = vadd.f32 %v420, %v421
  %v423 = vrot.slane %v422, 1
  %v424 = vadd.f32 %v422, %v423
  %v425 = vrot.slane %v135, 4
  %v426 = vadd.f32 %v135, %v425
  %v427 = vrot.slane %v426, 2
  %v428 = vadd.f32 %v426, %v427
  %v429 = vrot.slane %v428, 1
  %v430 = vadd.f32 %v428, %v429
  %v431 = vrot.slane %v136, 4
  %v432 = vadd.f32 %v136, %v431
  %v433 = vrot.slane %v432, 2
  %v434 = vadd.f32 %v432, %v433
  %v435 = vrot.slane %v434, 1
  %v436 = vadd.f32 %v434, %v435
  %v437 = vrot.slane %v137, 4
  %v438 = vadd.f32 %v137, %v437
  %v439 = vrot.slane %v438, 2
  %v440 = vadd.f32 %v438, %v439
  %v441 = vrot.slane %v440, 1
  %v442 = vadd.f32 %v440, %v441
  %v443 = vsel %vm197, %v138, 0.0
  %v444 = vrot.slane %v443, 4
  %v445 = vadd.f32 %v443, %v444
  %v446 = vrot.slane %v445, 2
  %v447 = vadd.f32 %v445, %v446
  %v448 = vrot.slane %v447, 1
  %v449 = vadd.f32 %v447, %v448
  %v450 = vrot.slane %v139, 4
  %v451 = vadd.f32 %v139, %v450
  %v452 = vrot.slane %v451, 2
  %v453 = vadd.f32 %v451, %v452
  %v454 = vrot.slane %v453, 1
  %v455 = vadd.f32 %v453, %v454
  %v456 = vrot.slane %v140, 4
  %v457 = vadd.f32 %v140, %v456
  %v458 = vrot.slane %v457, 2
  %v459 = vadd.f32 %v457, %v458
  %v460 = vrot.slane %v459, 1
  %v461 = vadd.f32 %v459, %v460
  %v462 = vrot.slane %v141, 4
  %v463 = vadd.f32 %v141, %v462
  %v464 = vrot.slane %v463, 2
  %v465 = vadd.f32 %v463, %v464
  %v466 = vrot.slane %v465, 1
  %v467 = vadd.f32 %v465, %v466
  %v468 = vrot.slane %v142, 4
  %v469 = vadd.f32 %v142, %v468
  %v470 = vrot.slane %v469, 2
  %v471 = vadd.f32 %v469, %v470
  %v472 = vrot.slane %v471, 1
  %v473 = vadd.f32 %v471, %v472
  %v474 = vrot.slane %v143, 4
  %v475 = vadd.f32 %v143, %v474
  %v476 = vrot.slane %v475, 2
  %v477 = vadd.f32 %v475, %v476
  %v478 = vrot.slane %v477, 1
  %v479 = vadd.f32 %v477, %v478
  %v480 = vrot.slane %v144, 4
  %v481 = vadd.f32 %v144, %v480
  %v482 = vrot.slane %v481, 2
  %v483 = vadd.f32 %v481, %v482
  %v484 = vrot.slane %v483, 1
  %v485 = vadd.f32 %v483, %v484
  %v486 = vrot.slane %v145, 4
  %v487 = vadd.f32 %v145, %v486
  %v488 = vrot.slane %v487, 2
  %v489 = vadd.f32 %v487, %v488
  %v490 = vrot.slane %v489, 1
  %v491 = vadd.f32 %v489, %v490
  %v492 = vsel %vm197, %v146, 0.0
  %v493 = vrot.slane %v492, 4
  %v494 = vadd.f32 %v492, %v493
  %v495 = vrot.slane %v494, 2
  %v496 = vadd.f32 %v494, %v495
  %v497 = vrot.slane %v496, 1
  %v498 = vadd.f32 %v496, %v497
  %v499 = vrot.slane %v147, 4
  %v500 = vadd.f32 %v147, %v499
  %v501 = vrot.slane %v500, 2
  %v502 = vadd.f32 %v500, %v501
  %v503 = vrot.slane %v502, 1
  %v504 = vadd.f32 %v502, %v503
  %v505 = vrot.slane %v148, 4
  %v506 = vadd.f32 %v148, %v505
  %v507 = vrot.slane %v506, 2
  %v508 = vadd.f32 %v506, %v507
  %v509 = vrot.slane %v508, 1
  %v510 = vadd.f32 %v508, %v509
  %v511 = vrot.slane %v149, 4
  %v512 = vadd.f32 %v149, %v511
  %v513 = vrot.slane %v512, 2
  %v514 = vadd.f32 %v512, %v513
  %v515 = vrot.slane %v514, 1
  %v516 = vadd.f32 %v514, %v515
  %v517 = vrot.slane %v150, 4
  %v518 = vadd.f32 %v150, %v517
  %v519 = vrot.slane %v518, 2
  %v520 = vadd.f32 %v518, %v519
  %v521 = vrot.slane %v520, 1
  %v522 = vadd.f32 %v520, %v521
  %v523 = vrot.slane %v151, 4
  %v524 = vadd.f32 %v151, %v523
  %v525 = vrot.slane %v524, 2
  %v526 = vadd.f32 %v524, %v525
  %v527 = vrot.slane %v526, 1
  %v528 = vadd.f32 %v526, %v527
  %v529 = vrot.slane %v152, 4
  %v530 = vadd.f32 %v152, %v529
  %v531 = vrot.slane %v530, 2
  %v532 = vadd.f32 %v530, %v531
  %v533 = vrot.slane %v532, 1
  %v534 = vadd.f32 %v532, %v533
  %v535 = vrot.slane %v153, 4
  %v536 = vadd.f32 %v153, %v535
  %v537 = vrot.slane %v536, 2
  %v538 = vadd.f32 %v536, %v537
  %v539 = vrot.slane %v538, 1
  %v540 = vadd.f32 %v538, %v539
  %v541 = vsel %vm197, %v154, 0.0
  %v542 = vrot.slane %v541, 4
  %v543 = vadd.f32 %v541, %v542
  %v544 = vrot.slane %v543, 2
  %v545 = vadd.f32 %v543, %v544
  %v546 = vrot.slane %v545, 1
  %v547 = vadd.f32 %v545, %v546
  %v548 = vadd.f32 %v160, 0.0
  %v549 = vadd.f32 %v166, 0.0
  %v550 = vadd.f32 %v172, 0.0
  %v551 = vadd.f32 %v178, 0.0
  %v552 = vadd.f32 %v184, 0.0
  %v553 = vadd.f32 %v190, 0.0
  %v554 = vadd.f32 %v196, 0.0
  %v555 = vadd.f32 %v204, 0.0
  %v556 = vadd.f32 %v210, 0.0
  %v557 = vadd.f32 %v216, 0.0
  %v558 = vadd.f32 %v222, 0.0
  %v559 = vadd.f32 %v228, 0.0
  %v560 = vadd.f32 %v234, 0.0
  %v561 = vadd.f32 %v240, 0.0
  %v562 = vadd.f32 %v246, 0.0
  %v563 = vadd.f32 %v253, 0.0
  %v564 = vadd.f32 %v259, 0.0
  %v565 = vadd.f32 %v265, 0.0
  %v566 = vadd.f32 %v271, 0.0
  %v567 = vadd.f32 %v277, 0.0
  %v568 = vadd.f32 %v283, 0.0
  %v569 = vadd.f32 %v289, 0.0
  %v570 = vadd.f32 %v295, 0.0
  %v571 = vadd.f32 %v302, 0.0
  %v572 = vadd.f32 %v308, 0.0
  %v573 = vadd.f32 %v314, 0.0
  %v574 = vadd.f32 %v320, 0.0
  %v575 = vadd.f32 %v326, 0.0
  %v576 = vadd.f32 %v332, 0.0
  %v577 = vadd.f32 %v338, 0.0
  %v578 = vadd.f32 %v344, 0.0
  %v579 = vadd.f32 %v351, 0.0
  %v580 = vadd.f32 %v357, 0.0
  %v581 = vadd.f32 %v363, 0.0
  %v582 = vadd.f32 %v369, 0.0
  %v583 = vadd.f32 %v375, 0.0
  %v584 = vadd.f32 %v381, 0.0
  %v585 = vadd.f32 %v387, 0.0
  %v586 = vadd.f32 %v393, 0.0
  %v587 = vadd.f32 %v400, 0.0
  %v588 = vadd.f32 %v406, 0.0
  %v589 = vadd.f32 %v412, 0.0
  %v590 = vadd.f32 %v418, 0.0
  %v591 = vadd.f32 %v424, 0.0
  %v592 = vadd.f32 %v430, 0.0
  %v593 = vadd.f32 %v436, 0.0
  %v594 = vadd.f32 %v442, 0.0
  %v595 = vadd.f32 %v449, 0.0
  %v596 = vadd.f32 %v455, 0.0
  %v597 = vadd.f32 %v461, 0.0
  %v598 = vadd.f32 %v467, 0.0
  %v599 = vadd.f32 %v473, 0.0
  %v600 = vadd.f32 %v479, 0.0
  %v601 = vadd.f32 %v485, 0.0
  %v602 = vadd.f32 %v491, 0.0
  %v603 = vadd.f32 %v498, 0.0
  %v604 = vadd.f32 %v504, 0.0
  %v605 = vadd.f32 %v510, 0.0
  %v606 = vadd.f32 %v516, 0.0
  %v607 = vadd.f32 %v522, 0.0
  %v608 = vadd.f32 %v528, 0.0
  %v609 = vadd.f32 %v534, 0.0
  %v610 = vadd.f32 %v540, 0.0
  %v611 = vadd.f32 %v547, 0.0
  %s612 = smul.u32 1, 8
  %s613 = smul.addr %s612, 4
  %s614 = scalar_lea.vmem %s0, %s613
  %v615 = vld [vmem:[%s614] sm:$0xff]
  %v616 = vld [vmem:[%s614 + $0x8] sm:$0xff]
  %v617 = vld [vmem:[%s614 + $0x10] sm:$0xff]
  %v618 = vld [vmem:[%s614 + $0x18] sm:$0xff]
  %v619 = vld [vmem:[%s614 + $0x40] sm:$0xff]
  %v620 = vld [vmem:[%s614 + $0x48] sm:$0xff]
  %v621 = vld [vmem:[%s614 + $0x50] sm:$0xff]
  %v622 = vld [vmem:[%s614 + $0x58] sm:$0xff]
  %v623 = vld [vmem:[%s614 + $0x80] sm:$0xff]
  %v624 = vld [vmem:[%s614 + $0x88] sm:$0xff]
  %v625 = vld [vmem:[%s614 + $0x90] sm:$0xff]
  %v626 = vld [vmem:[%s614 + $0x98] sm:$0xff]
  %v627 = vld [vmem:[%s614 + $0xc0] sm:$0xff]
  %v628 = vld [vmem:[%s614 + $0xc8] sm:$0xff]
  %v629 = vld [vmem:[%s614 + $0xd0] sm:$0xff]
  %v630 = vld [vmem:[%s614 + $0xd8] sm:$0xff]
  %v631 = vld [vmem:[%s614 + $0x100] sm:$0xff]
  %v632 = vld [vmem:[%s614 + $0x108] sm:$0xff]
  %v633 = vld [vmem:[%s614 + $0x110] sm:$0xff]
  %v634 = vld [vmem:[%s614 + $0x118] sm:$0xff]
  %v635 = vld [vmem:[%s614 + $0x140] sm:$0xff]
  %v636 = vld [vmem:[%s614 + $0x148] sm:$0xff]
  %v637 = vld [vmem:[%s614 + $0x150] sm:$0xff]
  %v638 = vld [vmem:[%s614 + $0x158] sm:$0xff]
  %v639 = vld [vmem:[%s614 + $0x180] sm:$0xff]
  %v640 = vld [vmem:[%s614 + $0x188] sm:$0xff]
  %v641 = vld [vmem:[%s614 + $0x190] sm:$0xff]
  %v642 = vld [vmem:[%s614 + $0x198] sm:$0xff]
  %v643 = vld [vmem:[%s614 + $0x1c0] sm:$0xff]
  %v644 = vld [vmem:[%s614 + $0x1c8] sm:$0xff]
  %v645 = vld [vmem:[%s614 + $0x1d0] sm:$0xff]
  %v646 = vld [vmem:[%s614 + $0x1d8] sm:$0xff]
  %v647 = vunpack.c.l.bf16 %v615
  %v648 = vunpack.c.h.bf16 %v615
  %v649 = vunpack.c.l.bf16 %v616
  %v650 = vunpack.c.h.bf16 %v616
  %v651 = vunpack.c.l.bf16 %v617
  %v652 = vunpack.c.h.bf16 %v617
  %v653 = vunpack.c.l.bf16 %v618
  %v654 = vunpack.c.h.bf16 %v618
  %v655 = vunpack.c.l.bf16 %v619
  %v656 = vunpack.c.h.bf16 %v619
  %v657 = vunpack.c.l.bf16 %v620
  %v658 = vunpack.c.h.bf16 %v620
  %v659 = vunpack.c.l.bf16 %v621
  %v660 = vunpack.c.h.bf16 %v621
  %v661 = vunpack.c.l.bf16 %v622
  %v662 = vunpack.c.h.bf16 %v622
  %v663 = vunpack.c.l.bf16 %v623
  %v664 = vunpack.c.h.bf16 %v623
  %v665 = vunpack.c.l.bf16 %v624
  %v666 = vunpack.c.h.bf16 %v624
  %v667 = vunpack.c.l.bf16 %v625
  %v668 = vunpack.c.h.bf16 %v625
  %v669 = vunpack.c.l.bf16 %v626
  %v670 = vunpack.c.h.bf16 %v626
  %v671 = vunpack.c.l.bf16 %v627
  %v672 = vunpack.c.h.bf16 %v627
  %v673 = vunpack.c.l.bf16 %v628
  %v674 = vunpack.c.h.bf16 %v628
  %v675 = vunpack.c.l.bf16 %v629
  %v676 = vunpack.c.h.bf16 %v629
  %v677 = vunpack.c.l.bf16 %v630
  %v678 = vunpack.c.h.bf16 %v630
  %v679 = vunpack.c.l.bf16 %v631
  %v680 = vunpack.c.h.bf16 %v631
  %v681 = vunpack.c.l.bf16 %v632
  %v682 = vunpack.c.h.bf16 %v632
  %v683 = vunpack.c.l.bf16 %v633
  %v684 = vunpack.c.h.bf16 %v633
  %v685 = vunpack.c.l.bf16 %v634
  %v686 = vunpack.c.h.bf16 %v634
  %v687 = vunpack.c.l.bf16 %v635
  %v688 = vunpack.c.h.bf16 %v635
  %v689 = vunpack.c.l.bf16 %v636
  %v690 = vunpack.c.h.bf16 %v636
  %v691 = vunpack.c.l.bf16 %v637
  %v692 = vunpack.c.h.bf16 %v637
  %v693 = vunpack.c.l.bf16 %v638
  %v694 = vunpack.c.h.bf16 %v638
  %v695 = vunpack.c.l.bf16 %v639
  %v696 = vunpack.c.h.bf16 %v639
  %v697 = vunpack.c.l.bf16 %v640
  %v698 = vunpack.c.h.bf16 %v640
  %v699 = vunpack.c.l.bf16 %v641
  %v700 = vunpack.c.h.bf16 %v641
  %v701 = vunpack.c.l.bf16 %v642
  %v702 = vunpack.c.h.bf16 %v642
  %v703 = vunpack.c.l.bf16 %v643
  %v704 = vunpack.c.h.bf16 %v643
  %v705 = vunpack.c.l.bf16 %v644
  %v706 = vunpack.c.h.bf16 %v644
  %v707 = vunpack.c.l.bf16 %v645
  %v708 = vunpack.c.h.bf16 %v645
  %v709 = vunpack.c.l.bf16 %v646
  %v710 = vunpack.c.h.bf16 %v646
  %v711 = vrot.slane %v647, 4
  %v712 = vadd.f32 %v647, %v711
  %v713 = vrot.slane %v712, 2
  %v714 = vadd.f32 %v712, %v713
  %v715 = vrot.slane %v714, 1
  %v716 = vadd.f32 %v714, %v715
  %v717 = vrot.slane %v648, 4
  %v718 = vadd.f32 %v648, %v717
  %v719 = vrot.slane %v718, 2
  %v720 = vadd.f32 %v718, %v719
  %v721 = vrot.slane %v720, 1
  %v722 = vadd.f32 %v720, %v721
  %v723 = vrot.slane %v649, 4
  %v724 = vadd.f32 %v649, %v723
  %v725 = vrot.slane %v724, 2
  %v726 = vadd.f32 %v724, %v725
  %v727 = vrot.slane %v726, 1
  %v728 = vadd.f32 %v726, %v727
  %v729 = vrot.slane %v650, 4
  %v730 = vadd.f32 %v650, %v729
  %v731 = vrot.slane %v730, 2
  %v732 = vadd.f32 %v730, %v731
  %v733 = vrot.slane %v732, 1
  %v734 = vadd.f32 %v732, %v733
  %v735 = vrot.slane %v651, 4
  %v736 = vadd.f32 %v651, %v735
  %v737 = vrot.slane %v736, 2
  %v738 = vadd.f32 %v736, %v737
  %v739 = vrot.slane %v738, 1
  %v740 = vadd.f32 %v738, %v739
  %v741 = vrot.slane %v652, 4
  %v742 = vadd.f32 %v652, %v741
  %v743 = vrot.slane %v742, 2
  %v744 = vadd.f32 %v742, %v743
  %v745 = vrot.slane %v744, 1
  %v746 = vadd.f32 %v744, %v745
  %v747 = vrot.slane %v653, 4
  %v748 = vadd.f32 %v653, %v747
  %v749 = vrot.slane %v748, 2
  %v750 = vadd.f32 %v748, %v749
  %v751 = vrot.slane %v750, 1
  %v752 = vadd.f32 %v750, %v751
  %v753 = vsel %vm197, %v654, 0.0
  %v754 = vrot.slane %v753, 4
  %v755 = vadd.f32 %v753, %v754
  %v756 = vrot.slane %v755, 2
  %v757 = vadd.f32 %v755, %v756
  %v758 = vrot.slane %v757, 1
  %v759 = vadd.f32 %v757, %v758
  %v760 = vrot.slane %v655, 4
  %v761 = vadd.f32 %v655, %v760
  %v762 = vrot.slane %v761, 2
  %v763 = vadd.f32 %v761, %v762
  %v764 = vrot.slane %v763, 1
  %v765 = vadd.f32 %v763, %v764
  %v766 = vrot.slane %v656, 4
  %v767 = vadd.f32 %v656, %v766
  %v768 = vrot.slane %v767, 2
  %v769 = vadd.f32 %v767, %v768
  %v770 = vrot.slane %v769, 1
  %v771 = vadd.f32 %v769, %v770
  %v772 = vrot.slane %v657, 4
  %v773 = vadd.f32 %v657, %v772
  %v774 = vrot.slane %v773, 2
  %v775 = vadd.f32 %v773, %v774
  %v776 = vrot.slane %v775, 1
  %v777 = vadd.f32 %v775, %v776
  %v778 = vrot.slane %v658, 4
  %v779 = vadd.f32 %v658, %v778
  %v780 = vrot.slane %v779, 2
  %v781 = vadd.f32 %v779, %v780
  %v782 = vrot.slane %v781, 1
  %v783 = vadd.f32 %v781, %v782
  %v784 = vrot.slane %v659, 4
  %v785 = vadd.f32 %v659, %v784
  %v786 = vrot.slane %v785, 2
  %v787 = vadd.f32 %v785, %v786
  %v788 = vrot.slane %v787, 1
  %v789 = vadd.f32 %v787, %v788
  %v790 = vrot.slane %v660, 4
  %v791 = vadd.f32 %v660, %v790
  %v792 = vrot.slane %v791, 2
  %v793 = vadd.f32 %v791, %v792
  %v794 = vrot.slane %v793, 1
  %v795 = vadd.f32 %v793, %v794
  %v796 = vrot.slane %v661, 4
  %v797 = vadd.f32 %v661, %v796
  %v798 = vrot.slane %v797, 2
  %v799 = vadd.f32 %v797, %v798
  %v800 = vrot.slane %v799, 1
  %v801 = vadd.f32 %v799, %v800
  %v802 = vsel %vm197, %v662, 0.0
  %v803 = vrot.slane %v802, 4
  %v804 = vadd.f32 %v802, %v803
  %v805 = vrot.slane %v804, 2
  %v806 = vadd.f32 %v804, %v805
  %v807 = vrot.slane %v806, 1
  %v808 = vadd.f32 %v806, %v807
  %v809 = vrot.slane %v663, 4
  %v810 = vadd.f32 %v663, %v809
  %v811 = vrot.slane %v810, 2
  %v812 = vadd.f32 %v810, %v811
  %v813 = vrot.slane %v812, 1
  %v814 = vadd.f32 %v812, %v813
  %v815 = vrot.slane %v664, 4
  %v816 = vadd.f32 %v664, %v815
  %v817 = vrot.slane %v816, 2
  %v818 = vadd.f32 %v816, %v817
  %v819 = vrot.slane %v818, 1
  %v820 = vadd.f32 %v818, %v819
  %v821 = vrot.slane %v665, 4
  %v822 = vadd.f32 %v665, %v821
  %v823 = vrot.slane %v822, 2
  %v824 = vadd.f32 %v822, %v823
  %v825 = vrot.slane %v824, 1
  %v826 = vadd.f32 %v824, %v825
  %v827 = vrot.slane %v666, 4
  %v828 = vadd.f32 %v666, %v827
  %v829 = vrot.slane %v828, 2
  %v830 = vadd.f32 %v828, %v829
  %v831 = vrot.slane %v830, 1
  %v832 = vadd.f32 %v830, %v831
  %v833 = vrot.slane %v667, 4
  %v834 = vadd.f32 %v667, %v833
  %v835 = vrot.slane %v834, 2
  %v836 = vadd.f32 %v834, %v835
  %v837 = vrot.slane %v836, 1
  %v838 = vadd.f32 %v836, %v837
  %v839 = vrot.slane %v668, 4
  %v840 = vadd.f32 %v668, %v839
  %v841 = vrot.slane %v840, 2
  %v842 = vadd.f32 %v840, %v841
  %v843 = vrot.slane %v842, 1
  %v844 = vadd.f32 %v842, %v843
  %v845 = vrot.slane %v669, 4
  %v846 = vadd.f32 %v669, %v845
  %v847 = vrot.slane %v846, 2
  %v848 = vadd.f32 %v846, %v847
  %v849 = vrot.slane %v848, 1
  %v850 = vadd.f32 %v848, %v849
  %v851 = vsel %vm197, %v670, 0.0
  %v852 = vrot.slane %v851, 4
  %v853 = vadd.f32 %v851, %v852
  %v854 = vrot.slane %v853, 2
  %v855 = vadd.f32 %v853, %v854
  %v856 = vrot.slane %v855, 1
  %v857 = vadd.f32 %v855, %v856
  %v858 = vrot.slane %v671, 4
  %v859 = vadd.f32 %v671, %v858
  %v860 = vrot.slane %v859, 2
  %v861 = vadd.f32 %v859, %v860
  %v862 = vrot.slane %v861, 1
  %v863 = vadd.f32 %v861, %v862
  %v864 = vrot.slane %v672, 4
  %v865 = vadd.f32 %v672, %v864
  %v866 = vrot.slane %v865, 2
  %v867 = vadd.f32 %v865, %v866
  %v868 = vrot.slane %v867, 1
  %v869 = vadd.f32 %v867, %v868
  %v870 = vrot.slane %v673, 4
  %v871 = vadd.f32 %v673, %v870
  %v872 = vrot.slane %v871, 2
  %v873 = vadd.f32 %v871, %v872
  %v874 = vrot.slane %v873, 1
  %v875 = vadd.f32 %v873, %v874
  %v876 = vrot.slane %v674, 4
  %v877 = vadd.f32 %v674, %v876
  %v878 = vrot.slane %v877, 2
  %v879 = vadd.f32 %v877, %v878
  %v880 = vrot.slane %v879, 1
  %v881 = vadd.f32 %v879, %v880
  %v882 = vrot.slane %v675, 4
  %v883 = vadd.f32 %v675, %v882
  %v884 = vrot.slane %v883, 2
  %v885 = vadd.f32 %v883, %v884
  %v886 = vrot.slane %v885, 1
  %v887 = vadd.f32 %v885, %v886
  %v888 = vrot.slane %v676, 4
  %v889 = vadd.f32 %v676, %v888
  %v890 = vrot.slane %v889, 2
  %v891 = vadd.f32 %v889, %v890
  %v892 = vrot.slane %v891, 1
  %v893 = vadd.f32 %v891, %v892
  %v894 = vrot.slane %v677, 4
  %v895 = vadd.f32 %v677, %v894
  %v896 = vrot.slane %v895, 2
  %v897 = vadd.f32 %v895, %v896
  %v898 = vrot.slane %v897, 1
  %v899 = vadd.f32 %v897, %v898
  %v900 = vsel %vm197, %v678, 0.0
  %v901 = vrot.slane %v900, 4
  %v902 = vadd.f32 %v900, %v901
  %v903 = vrot.slane %v902, 2
  %v904 = vadd.f32 %v902, %v903
  %v905 = vrot.slane %v904, 1
  %v906 = vadd.f32 %v904, %v905
  %v907 = vrot.slane %v679, 4
  %v908 = vadd.f32 %v679, %v907
  %v909 = vrot.slane %v908, 2
  %v910 = vadd.f32 %v908, %v909
  %v911 = vrot.slane %v910, 1
  %v912 = vadd.f32 %v910, %v911
  %v913 = vrot.slane %v680, 4
  %v914 = vadd.f32 %v680, %v913
  %v915 = vrot.slane %v914, 2
  %v916 = vadd.f32 %v914, %v915
  %v917 = vrot.slane %v916, 1
  %v918 = vadd.f32 %v916, %v917
  %v919 = vrot.slane %v681, 4
  %v920 = vadd.f32 %v681, %v919
  %v921 = vrot.slane %v920, 2
  %v922 = vadd.f32 %v920, %v921
  %v923 = vrot.slane %v922, 1
  %v924 = vadd.f32 %v922, %v923
  %v925 = vrot.slane %v682, 4
  %v926 = vadd.f32 %v682, %v925
  %v927 = vrot.slane %v926, 2
  %v928 = vadd.f32 %v926, %v927
  %v929 = vrot.slane %v928, 1
  %v930 = vadd.f32 %v928, %v929
  %v931 = vrot.slane %v683, 4
  %v932 = vadd.f32 %v683, %v931
  %v933 = vrot.slane %v932, 2
  %v934 = vadd.f32 %v932, %v933
  %v935 = vrot.slane %v934, 1
  %v936 = vadd.f32 %v934, %v935
  %v937 = vrot.slane %v684, 4
  %v938 = vadd.f32 %v684, %v937
  %v939 = vrot.slane %v938, 2
  %v940 = vadd.f32 %v938, %v939
  %v941 = vrot.slane %v940, 1
  %v942 = vadd.f32 %v940, %v941
  %v943 = vrot.slane %v685, 4
  %v944 = vadd.f32 %v685, %v943
  %v945 = vrot.slane %v944, 2
  %v946 = vadd.f32 %v944, %v945
  %v947 = vrot.slane %v946, 1
  %v948 = vadd.f32 %v946, %v947
  %v949 = vsel %vm197, %v686, 0.0
  %v950 = vrot.slane %v949, 4
  %v951 = vadd.f32 %v949, %v950
  %v952 = vrot.slane %v951, 2
  %v953 = vadd.f32 %v951, %v952
  %v954 = vrot.slane %v953, 1
  %v955 = vadd.f32 %v953, %v954
  %v956 = vrot.slane %v687, 4
  %v957 = vadd.f32 %v687, %v956
  %v958 = vrot.slane %v957, 2
  %v959 = vadd.f32 %v957, %v958
  %v960 = vrot.slane %v959, 1
  %v961 = vadd.f32 %v959, %v960
  %v962 = vrot.slane %v688, 4
  %v963 = vadd.f32 %v688, %v962
  %v964 = vrot.slane %v963, 2
  %v965 = vadd.f32 %v963, %v964
  %v966 = vrot.slane %v965, 1
  %v967 = vadd.f32 %v965, %v966
  %v968 = vrot.slane %v689, 4
  %v969 = vadd.f32 %v689, %v968
  %v970 = vrot.slane %v969, 2
  %v971 = vadd.f32 %v969, %v970
  %v972 = vrot.slane %v971, 1
  %v973 = vadd.f32 %v971, %v972
  %v974 = vrot.slane %v690, 4
  %v975 = vadd.f32 %v690, %v974
  %v976 = vrot.slane %v975, 2
  %v977 = vadd.f32 %v975, %v976
  %v978 = vrot.slane %v977, 1
  %v979 = vadd.f32 %v977, %v978
  %v980 = vrot.slane %v691, 4
  %v981 = vadd.f32 %v691, %v980
  %v982 = vrot.slane %v981, 2
  %v983 = vadd.f32 %v981, %v982
  %v984 = vrot.slane %v983, 1
  %v985 = vadd.f32 %v983, %v984
  %v986 = vrot.slane %v692, 4
  %v987 = vadd.f32 %v692, %v986
  %v988 = vrot.slane %v987, 2
  %v989 = vadd.f32 %v987, %v988
  %v990 = vrot.slane %v989, 1
  %v991 = vadd.f32 %v989, %v990
  %v992 = vrot.slane %v693, 4
  %v993 = vadd.f32 %v693, %v992
  %v994 = vrot.slane %v993, 2
  %v995 = vadd.f32 %v993, %v994
  %v996 = vrot.slane %v995, 1
  %v997 = vadd.f32 %v995, %v996
  %v998 = vsel %vm197, %v694, 0.0
  %v999 = vrot.slane %v998, 4
  %v1000 = vadd.f32 %v998, %v999
  %v1001 = vrot.slane %v1000, 2
  %v1002 = vadd.f32 %v1000, %v1001
  %v1003 = vrot.slane %v1002, 1
  %v1004 = vadd.f32 %v1002, %v1003
  %v1005 = vrot.slane %v695, 4
  %v1006 = vadd.f32 %v695, %v1005
  %v1007 = vrot.slane %v1006, 2
  %v1008 = vadd.f32 %v1006, %v1007
  %v1009 = vrot.slane %v1008, 1
  %v1010 = vadd.f32 %v1008, %v1009
  %v1011 = vrot.slane %v696, 4
  %v1012 = vadd.f32 %v696, %v1011
  %v1013 = vrot.slane %v1012, 2
  %v1014 = vadd.f32 %v1012, %v1013
  %v1015 = vrot.slane %v1014, 1
  %v1016 = vadd.f32 %v1014, %v1015
  %v1017 = vrot.slane %v697, 4
  %v1018 = vadd.f32 %v697, %v1017
  %v1019 = vrot.slane %v1018, 2
  %v1020 = vadd.f32 %v1018, %v1019
  %v1021 = vrot.slane %v1020, 1
  %v1022 = vadd.f32 %v1020, %v1021
  %v1023 = vrot.slane %v698, 4
  %v1024 = vadd.f32 %v698, %v1023
  %v1025 = vrot.slane %v1024, 2
  %v1026 = vadd.f32 %v1024, %v1025
  %v1027 = vrot.slane %v1026, 1
  %v1028 = vadd.f32 %v1026, %v1027
  %v1029 = vrot.slane %v699, 4
  %v1030 = vadd.f32 %v699, %v1029
  %v1031 = vrot.slane %v1030, 2
  %v1032 = vadd.f32 %v1030, %v1031
  %v1033 = vrot.slane %v1032, 1
  %v1034 = vadd.f32 %v1032, %v1033
  %v1035 = vrot.slane %v700, 4
  %v1036 = vadd.f32 %v700, %v1035
  %v1037 = vrot.slane %v1036, 2
  %v1038 = vadd.f32 %v1036, %v1037
  %v1039 = vrot.slane %v1038, 1
  %v1040 = vadd.f32 %v1038, %v1039
  %v1041 = vrot.slane %v701, 4
  %v1042 = vadd.f32 %v701, %v1041
  %v1043 = vrot.slane %v1042, 2
  %v1044 = vadd.f32 %v1042, %v1043
  %v1045 = vrot.slane %v1044, 1
  %v1046 = vadd.f32 %v1044, %v1045
  %v1047 = vsel %vm197, %v702, 0.0
  %v1048 = vrot.slane %v1047, 4
  %v1049 = vadd.f32 %v1047, %v1048
  %v1050 = vrot.slane %v1049, 2
  %v1051 = vadd.f32 %v1049, %v1050
  %v1052 = vrot.slane %v1051, 1
  %v1053 = vadd.f32 %v1051, %v1052
  %v1054 = vrot.slane %v703, 4
  %v1055 = vadd.f32 %v703, %v1054
  %v1056 = vrot.slane %v1055, 2
  %v1057 = vadd.f32 %v1055, %v1056
  %v1058 = vrot.slane %v1057, 1
  %v1059 = vadd.f32 %v1057, %v1058
  %v1060 = vrot.slane %v704, 4
  %v1061 = vadd.f32 %v704, %v1060
  %v1062 = vrot.slane %v1061, 2
  %v1063 = vadd.f32 %v1061, %v1062
  %v1064 = vrot.slane %v1063, 1
  %v1065 = vadd.f32 %v1063, %v1064
  %v1066 = vrot.slane %v705, 4
  %v1067 = vadd.f32 %v705, %v1066
  %v1068 = vrot.slane %v1067, 2
  %v1069 = vadd.f32 %v1067, %v1068
  %v1070 = vrot.slane %v1069, 1
  %v1071 = vadd.f32 %v1069, %v1070
  %v1072 = vrot.slane %v706, 4
  %v1073 = vadd.f32 %v706, %v1072
  %v1074 = vrot.slane %v1073, 2
  %v1075 = vadd.f32 %v1073, %v1074
  %v1076 = vrot.slane %v1075, 1
  %v1077 = vadd.f32 %v1075, %v1076
  %v1078 = vrot.slane %v707, 4
  %v1079 = vadd.f32 %v707, %v1078
  %v1080 = vrot.slane %v1079, 2
  %v1081 = vadd.f32 %v1079, %v1080
  %v1082 = vrot.slane %v1081, 1
  %v1083 = vadd.f32 %v1081, %v1082
  %v1084 = vrot.slane %v708, 4
  %v1085 = vadd.f32 %v708, %v1084
  %v1086 = vrot.slane %v1085, 2
  %v1087 = vadd.f32 %v1085, %v1086
  %v1088 = vrot.slane %v1087, 1
  %v1089 = vadd.f32 %v1087, %v1088
  %v1090 = vrot.slane %v709, 4
  %v1091 = vadd.f32 %v709, %v1090
  %v1092 = vrot.slane %v1091, 2
  %v1093 = vadd.f32 %v1091, %v1092
  %v1094 = vrot.slane %v1093, 1
  %v1095 = vadd.f32 %v1093, %v1094
  %v1096 = vsel %vm197, %v710, 0.0
  %v1097 = vrot.slane %v1096, 4
  %v1098 = vadd.f32 %v1096, %v1097
  %v1099 = vrot.slane %v1098, 2
  %v1100 = vadd.f32 %v1098, %v1099
  %v1101 = vrot.slane %v1100, 1
  %v1102 = vadd.f32 %v1100, %v1101
  %v1103 = vadd.f32 %v548, %v716
  %v1104 = vadd.f32 %v549, %v722
  %v1105 = vadd.f32 %v550, %v728
  %v1106 = vadd.f32 %v551, %v734
  %v1107 = vadd.f32 %v552, %v740
  %v1108 = vadd.f32 %v553, %v746
  %v1109 = vadd.f32 %v554, %v752
  %v1110 = vadd.f32 %v555, %v759
  %v1111 = vadd.f32 %v556, %v765
  %v1112 = vadd.f32 %v557, %v771
  %v1113 = vadd.f32 %v558, %v777
  %v1114 = vadd.f32 %v559, %v783
  %v1115 = vadd.f32 %v560, %v789
  %v1116 = vadd.f32 %v561, %v795
  %v1117 = vadd.f32 %v562, %v801
  %v1118 = vadd.f32 %v563, %v808
  %v1119 = vadd.f32 %v564, %v814
  %v1120 = vadd.f32 %v565, %v820
  %v1121 = vadd.f32 %v566, %v826
  %v1122 = vadd.f32 %v567, %v832
  %v1123 = vadd.f32 %v568, %v838
  %v1124 = vadd.f32 %v569, %v844
  %v1125 = vadd.f32 %v570, %v850
  %v1126 = vadd.f32 %v571, %v857
  %v1127 = vadd.f32 %v572, %v863
  %v1128 = vadd.f32 %v573, %v869
  %v1129 = vadd.f32 %v574, %v875
  %v1130 = vadd.f32 %v575, %v881
  %v1131 = vadd.f32 %v576, %v887
  %v1132 = vadd.f32 %v577, %v893
  %v1133 = vadd.f32 %v578, %v899
  %v1134 = vadd.f32 %v579, %v906
  %v1135 = vadd.f32 %v580, %v912
  %v1136 = vadd.f32 %v581, %v918
  %v1137 = vadd.f32 %v582, %v924
  %v1138 = vadd.f32 %v583, %v930
  %v1139 = vadd.f32 %v584, %v936
  %v1140 = vadd.f32 %v585, %v942
  %v1141 = vadd.f32 %v586, %v948
  %v1142 = vadd.f32 %v587, %v955
  %v1143 = vadd.f32 %v588, %v961
  %v1144 = vadd.f32 %v589, %v967
  %v1145 = vadd.f32 %v590, %v973
  %v1146 = vadd.f32 %v591, %v979
  %v1147 = vadd.f32 %v592, %v985
  %v1148 = vadd.f32 %v593, %v991
  %v1149 = vadd.f32 %v594, %v997
  %v1150 = vadd.f32 %v595, %v1004
  %v1151 = vadd.f32 %v596, %v1010
  %v1152 = vadd.f32 %v597, %v1016
  %v1153 = vadd.f32 %v598, %v1022
  %v1154 = vadd.f32 %v599, %v1028
  %v1155 = vadd.f32 %v600, %v1034
  %v1156 = vadd.f32 %v601, %v1040
  %v1157 = vadd.f32 %v602, %v1046
  %v1158 = vadd.f32 %v603, %v1053
  %v1159 = vadd.f32 %v604, %v1059
  %v1160 = vadd.f32 %v605, %v1065
  %v1161 = vadd.f32 %v606, %v1071
  %v1162 = vadd.f32 %v607, %v1077
  %v1163 = vadd.f32 %v608, %v1083
  %v1164 = vadd.f32 %v609, %v1089
  %v1165 = vadd.f32 %v610, %v1095
  %v1166 = vadd.f32 %v611, %v1102
  %vm1231 = vcmask 1041409
  %v1232 = vsel %vm1231, %v1111, %v1103
  %vm1233 = vcmask 1042434
  %v1234 = vsel %vm1233, %v1119, %v1232
  %vm1235 = vcmask 1043459
  %v1236 = vsel %vm1235, %v1127, %v1234
  %vm1237 = vcmask 1044484
  %v1238 = vsel %vm1237, %v1135, %v1236
  %vm1239 = vcmask 1045509
  %v1240 = vsel %vm1239, %v1143, %v1238
  %vm1241 = vcmask 1046534
  %v1242 = vsel %vm1241, %v1151, %v1240
  %vm1243 = vcmask 1047559
  %v1244 = vsel %vm1243, %v1159, %v1242
  %v1245 = vsel %vm1231, %v1112, %v1104
  %v1246 = vsel %vm1233, %v1120, %v1245
  %v1247 = vsel %vm1235, %v1128, %v1246
  %v1248 = vsel %vm1237, %v1136, %v1247
  %v1249 = vsel %vm1239, %v1144, %v1248
  %v1250 = vsel %vm1241, %v1152, %v1249
  %v1251 = vsel %vm1243, %v1160, %v1250
  %v1252 = vsel %vm1231, %v1113, %v1105
  %v1253 = vsel %vm1233, %v1121, %v1252
  %v1254 = vsel %vm1235, %v1129, %v1253
  %v1255 = vsel %vm1237, %v1137, %v1254
  %v1256 = vsel %vm1239, %v1145, %v1255
  %v1257 = vsel %vm1241, %v1153, %v1256
  %v1258 = vsel %vm1243, %v1161, %v1257
  %v1259 = vsel %vm1231, %v1114, %v1106
  %v1260 = vsel %vm1233, %v1122, %v1259
  %v1261 = vsel %vm1235, %v1130, %v1260
  %v1262 = vsel %vm1237, %v1138, %v1261
  %v1263 = vsel %vm1239, %v1146, %v1262
  %v1264 = vsel %vm1241, %v1154, %v1263
  %v1265 = vsel %vm1243, %v1162, %v1264
  %v1266 = vsel %vm1231, %v1115, %v1107
  %v1267 = vsel %vm1233, %v1123, %v1266
  %v1268 = vsel %vm1235, %v1131, %v1267
  %v1269 = vsel %vm1237, %v1139, %v1268
  %v1270 = vsel %vm1239, %v1147, %v1269
  %v1271 = vsel %vm1241, %v1155, %v1270
  %v1272 = vsel %vm1243, %v1163, %v1271
  %v1273 = vsel %vm1231, %v1116, %v1108
  %v1274 = vsel %vm1233, %v1124, %v1273
  %v1275 = vsel %vm1235, %v1132, %v1274
  %v1276 = vsel %vm1237, %v1140, %v1275
  %v1277 = vsel %vm1239, %v1148, %v1276
  %v1278 = vsel %vm1241, %v1156, %v1277
  %v1279 = vsel %vm1243, %v1164, %v1278
  %v1280 = vsel %vm1231, %v1117, %v1109
  %v1281 = vsel %vm1233, %v1125, %v1280
  %v1282 = vsel %vm1235, %v1133, %v1281
  %v1283 = vsel %vm1237, %v1141, %v1282
  %v1284 = vsel %vm1239, %v1149, %v1283
  %v1285 = vsel %vm1241, %v1157, %v1284
  %v1286 = vsel %vm1243, %v1165, %v1285
  %v1287 = vsel %vm1231, %v1118, %v1110
  %v1288 = vsel %vm1233, %v1126, %v1287
  %v1289 = vsel %vm1235, %v1134, %v1288
  %v1290 = vsel %vm1237, %v1142, %v1289
  %v1291 = vsel %vm1239, %v1150, %v1290
  %v1292 = vsel %vm1241, %v1158, %v1291
  %v1293 = vsel %vm1243, %v1166, %v1292
  %v1302 = vadd.f32 %v48, %v1244
  %v1303 = vadd.f32 %v49, %v1251
  %v1304 = vadd.f32 %v50, %v1258
  %v1305 = vadd.f32 %v51, %v1265
  %v1306 = vadd.f32 %v52, %v1272
  %v1307 = vadd.f32 %v53, %v1279
  %v1308 = vadd.f32 %v54, %v1286
  %v1309 = vadd.f32 %v55, %v1293
  %1310 = vst [vmem:[#allocation2] sm:$0xff] %v1302
  %1311 = vst [vmem:[#allocation2 + $0x8] sm:$0xff] %v1303
  %1312 = vst [vmem:[#allocation2 + $0x10] sm:$0xff] %v1304
  %1313 = vst [vmem:[#allocation2 + $0x18] sm:$0xff] %v1305
  %1314 = vst [vmem:[#allocation2 + $0x20] sm:$0xff] %v1306
  %1315 = vst [vmem:[#allocation2 + $0x28] sm:$0xff] %v1307
  %1316 = vst [vmem:[#allocation2 + $0x30] sm:$0xff] %v1308
  %1317 = vst.msk [vmem:[#allocation2 + $0x38] sm:$0xff] %vm197, %v1309
  // Predicated region
  $region42: #{bmi_predictor_heads.1} parent=0 // pred_check
    %p1318 = pneg %p35
  $region43: #{bmi_predictor_heads.1} parent=0 // pred_check_branch
    %1320 = sbr.rel (%p1318) target = $region45
  $region44: #{bmi_predictor_heads.1} parent=0 // pred_region
    %v1321 = vld [vmem:[#allocation2] sm:$0xff]
    %v1322 = vld [vmem:[#allocation2 + $0x8] sm:$0xff]
    %v1323 = vld [vmem:[#allocation2 + $0x10] sm:$0xff]
    %v1324 = vld [vmem:[#allocation2 + $0x18] sm:$0xff]
    %v1325 = vld [vmem:[#allocation2 + $0x20] sm:$0xff]
    %v1326 = vld [vmem:[#allocation2 + $0x28] sm:$0xff]
    %v1327 = vld [vmem:[#allocation2 + $0x30] sm:$0xff]
    %v1328 = vld [vmem:[#allocation2 + $0x38] sm:$0xff]
    %v1329 = vpack.c.bf16 %v1321, %v1321
    %v1330 = vpack.c.bf16 %v1322, %v1322
    %v1331 = vpack.c.bf16 %v1323, %v1323
    %v1332 = vpack.c.bf16 %v1324, %v1324
    %v1333 = vpack.c.bf16 %v1325, %v1325
    %v1334 = vpack.c.bf16 %v1326, %v1326
    %v1335 = vpack.c.bf16 %v1327, %v1327
    %v1336 = vpack.c.bf16 %v1328, %v1328
    %v1337 = vld [vmem:[%s1] sm:$0xff]
    %v1338 = vld [vmem:[%s1 + $0x8] sm:$0xff]
    %v1339 = vld [vmem:[%s1 + $0x10] sm:$0xff]
    %v1340 = vld [vmem:[%s1 + $0x18] sm:$0xff]
    %v1341 = vld [vmem:[%s1 + $0x20] sm:$0xff]
    %v1342 = vld [vmem:[%s1 + $0x28] sm:$0xff]
    %v1343 = vld [vmem:[%s1 + $0x30] sm:$0xff]
    %v1344 = vld [vmem:[%s1 + $0x38] sm:$0xff]
    %v1345 = vld [vmem:[%s1 + $0x40] sm:$0xff]
    %v1346 = vld [vmem:[%s1 + $0x48] sm:$0xff]
    %v1347 = vld [vmem:[%s1 + $0x50] sm:$0xff]
    %v1348 = vld [vmem:[%s1 + $0x58] sm:$0xff]
    %v1349 = vld [vmem:[%s1 + $0x60] sm:$0xff]
    %v1350 = vld [vmem:[%s1 + $0x68] sm:$0xff]
    %v1351 = vld [vmem:[%s1 + $0x70] sm:$0xff]
    %v1352 = vld [vmem:[%s1 + $0x78] sm:$0xff]
    %v1353 = vld [vmem:[%s1 + $0x80] sm:$0xff]
    %v1354 = vld [vmem:[%s1 + $0x88] sm:$0xff]
    %v1355 = vld [vmem:[%s1 + $0x90] sm:$0xff]
    %v1356 = vld [vmem:[%s1 + $0x98] sm:$0xff]
    %v1357 = vld [vmem:[%s1 + $0xa0] sm:$0xff]
    %v1358 = vld [vmem:[%s1 + $0xa8] sm:$0xff]
    %v1359 = vld [vmem:[%s1 + $0xb0] sm:$0xff]
    %v1360 = vld [vmem:[%s1 + $0xb8] sm:$0xff]
    %v1361 = vld [vmem:[%s1 + $0xc0] sm:$0xff]
    %v1362 = vld [vmem:[%s1 + $0xc8] sm:$0xff]
    %v1363 = vld [vmem:[%s1 + $0xd0] sm:$0xff]
    %v1364 = vld [vmem:[%s1 + $0xd8] sm:$0xff]
    %v1365 = vld [vmem:[%s1 + $0xe0] sm:$0xff]
    %v1366 = vld [vmem:[%s1 + $0xe8] sm:$0xff]
    %v1367 = vld [vmem:[%s1 + $0xf0] sm:$0xff]
    %v1368 = vld [vmem:[%s1 + $0xf8] sm:$0xff]
    %v1369 = vld [vmem:[%s1 + $0x100] sm:$0xff]
    %v1370 = vld [vmem:[%s1 + $0x108] sm:$0xff]
    %v1371 = vld [vmem:[%s1 + $0x110] sm:$0xff]
    %v1372 = vld [vmem:[%s1 + $0x118] sm:$0xff]
    %v1373 = vld [vmem:[%s1 + $0x120] sm:$0xff]
    %v1374 = vld [vmem:[%s1 + $0x128] sm:$0xff]
    %v1375 = vld [vmem:[%s1 + $0x130] sm:$0xff]
    %v1376 = vld [vmem:[%s1 + $0x138] sm:$0xff]
    %v1377 = vld [vmem:[%s1 + $0x140] sm:$0xff]
    %v1378 = vld [vmem:[%s1 + $0x148] sm:$0xff]
    %v1379 = vld [vmem:[%s1 + $0x150] sm:$0xff]
    %v1380 = vld [vmem:[%s1 + $0x158] sm:$0xff]
    %v1381 = vld [vmem:[%s1 + $0x160] sm:$0xff]
    %v1382 = vld [vmem:[%s1 + $0x168] sm:$0xff]
    %v1383 = vld [vmem:[%s1 + $0x170] sm:$0xff]
    %v1384 = vld [vmem:[%s1 + $0x178] sm:$0xff]
    %v1385 = vld [vmem:[%s1 + $0x180] sm:$0xff]
    %v1386 = vld [vmem:[%s1 + $0x188] sm:$0xff]
    %v1387 = vld [vmem:[%s1 + $0x190] sm:$0xff]
    %v1388 = vld [vmem:[%s1 + $0x198] sm:$0xff]
    %v1389 = vld [vmem:[%s1 + $0x1a0] sm:$0xff]
    %v1390 = vld [vmem:[%s1 + $0x1a8] sm:$0xff]
    %v1391 = vld [vmem:[%s1 + $0x1b0] sm:$0xff]
    %v1392 = vld [vmem:[%s1 + $0x1b8] sm:$0xff]
    %v1393 = vld [vmem:[%s1 + $0x1c0] sm:$0xff]
    %v1394 = vld [vmem:[%s1 + $0x1c8] sm:$0xff]
    %v1395 = vld [vmem:[%s1 + $0x1d0] sm:$0xff]
    %v1396 = vld [vmem:[%s1 + $0x1d8] sm:$0xff]
    %v1397 = vld [vmem:[%s1 + $0x1e0] sm:$0xff]
    %v1398 = vld [vmem:[%s1 + $0x1e8] sm:$0xff]
    %v1399 = vld [vmem:[%s1 + $0x1f0] sm:$0xff]
    %v1400 = vld [vmem:[%s1 + $0x1f8] sm:$0xff]
    %v1401 = vld [vmem:[%s1 + $0x200] sm:$0xff]
    %v1402 = vld [vmem:[%s1 + $0x208] sm:$0xff]
    %v1403 = vld [vmem:[%s1 + $0x210] sm:$0xff]
    %v1404 = vld [vmem:[%s1 + $0x218] sm:$0xff]
    %v1405 = vld [vmem:[%s1 + $0x220] sm:$0xff]
    %v1406 = vld [vmem:[%s1 + $0x228] sm:$0xff]
    %v1407 = vld [vmem:[%s1 + $0x230] sm:$0xff]
    %v1408 = vld [vmem:[%s1 + $0x238] sm:$0xff]
    %v1409 = vld [vmem:[%s1 + $0x240] sm:$0xff]
    %v1410 = vld [vmem:[%s1 + $0x248] sm:$0xff]
    %v1411 = vld [vmem:[%s1 + $0x250] sm:$0xff]
    %v1412 = vld [vmem:[%s1 + $0x258] sm:$0xff]
    %v1413 = vld [vmem:[%s1 + $0x260] sm:$0xff]
    %v1414 = vld [vmem:[%s1 + $0x268] sm:$0xff]
    %v1415 = vld [vmem:[%s1 + $0x270] sm:$0xff]
    %v1416 = vld [vmem:[%s1 + $0x278] sm:$0xff]
    %v1417 = vld [vmem:[%s1 + $0x280] sm:$0xff]
    %v1418 = vld [vmem:[%s1 + $0x288] sm:$0xff]
    %v1419 = vld [vmem:[%s1 + $0x290] sm:$0xff]
    %v1420 = vld [vmem:[%s1 + $0x298] sm:$0xff]
    %v1421 = vld [vmem:[%s1 + $0x2a0] sm:$0xff]
    %v1422 = vld [vmem:[%s1 + $0x2a8] sm:$0xff]
    %v1423 = vld [vmem:[%s1 + $0x2b0] sm:$0xff]
    %v1424 = vld [vmem:[%s1 + $0x2b8] sm:$0xff]
    %v1425 = vld [vmem:[%s1 + $0x2c0] sm:$0xff]
    %v1426 = vld [vmem:[%s1 + $0x2c8] sm:$0xff]
    %v1427 = vld [vmem:[%s1 + $0x2d0] sm:$0xff]
    %v1428 = vld [vmem:[%s1 + $0x2d8] sm:$0xff]
    %v1429 = vld [vmem:[%s1 + $0x2e0] sm:$0xff]
    %v1430 = vld [vmem:[%s1 + $0x2e8] sm:$0xff]
    %v1431 = vld [vmem:[%s1 + $0x2f0] sm:$0xff]
    %v1432 = vld [vmem:[%s1 + $0x2f8] sm:$0xff]
    %v1433 = vld [vmem:[%s1 + $0x300] sm:$0xff]
    %v1434 = vld [vmem:[%s1 + $0x308] sm:$0xff]
    %v1435 = vld [vmem:[%s1 + $0x310] sm:$0xff]
    %v1436 = vld [vmem:[%s1 + $0x318] sm:$0xff]
    %v1437 = vld [vmem:[%s1 + $0x320] sm:$0xff]
    %v1438 = vld [vmem:[%s1 + $0x328] sm:$0xff]
    %v1439 = vld [vmem:[%s1 + $0x330] sm:$0xff]
    %v1440 = vld [vmem:[%s1 + $0x338] sm:$0xff]
    %v1441 = vld [vmem:[%s1 + $0x340] sm:$0xff]
    %v1442 = vld [vmem:[%s1 + $0x348] sm:$0xff]
    %v1443 = vld [vmem:[%s1 + $0x350] sm:$0xff]
    %v1444 = vld [vmem:[%s1 + $0x358] sm:$0xff]
    %v1445 = vld [vmem:[%s1 + $0x360] sm:$0xff]
    %v1446 = vld [vmem:[%s1 + $0x368] sm:$0xff]
    %v1447 = vld [vmem:[%s1 + $0x370] sm:$0xff]
    %v1448 = vld [vmem:[%s1 + $0x378] sm:$0xff]
    %v1449 = vld [vmem:[%s1 + $0x380] sm:$0xff]
    %v1450 = vld [vmem:[%s1 + $0x388] sm:$0xff]
    %v1451 = vld [vmem:[%s1 + $0x390] sm:$0xff]
    %v1452 = vld [vmem:[%s1 + $0x398] sm:$0xff]
    %v1453 = vld [vmem:[%s1 + $0x3a0] sm:$0xff]
    %v1454 = vld [vmem:[%s1 + $0x3a8] sm:$0xff]
    %v1455 = vld [vmem:[%s1 + $0x3b0] sm:$0xff]
    %v1456 = vld [vmem:[%s1 + $0x3b8] sm:$0xff]
    %v1457 = vld [vmem:[%s1 + $0x3c0] sm:$0xff]
    %v1458 = vld [vmem:[%s1 + $0x3c8] sm:$0xff]
    %v1459 = vld [vmem:[%s1 + $0x3d0] sm:$0xff]
    %v1460 = vld [vmem:[%s1 + $0x3d8] sm:$0xff]
    %v1461 = vld [vmem:[%s1 + $0x3e0] sm:$0xff]
    %v1462 = vld [vmem:[%s1 + $0x3e8] sm:$0xff]
    %v1463 = vld [vmem:[%s1 + $0x3f0] sm:$0xff]
    %v1464 = vld [vmem:[%s1 + $0x3f8] sm:$0xff]
    %v1465 = vld [vmem:[%s1 + $0x400] sm:$0xff]
    %v1466 = vld [vmem:[%s1 + $0x408] sm:$0xff]
    %v1467 = vld [vmem:[%s1 + $0x410] sm:$0xff]
    %v1468 = vld [vmem:[%s1 + $0x418] sm:$0xff]
    %v1469 = vld [vmem:[%s1 + $0x420] sm:$0xff]
    %v1470 = vld [vmem:[%s1 + $0x428] sm:$0xff]
    %v1471 = vld [vmem:[%s1 + $0x430] sm:$0xff]
    %v1472 = vld [vmem:[%s1 + $0x438] sm:$0xff]
    %v1473 = vld [vmem:[%s1 + $0x440] sm:$0xff]
    %v1474 = vld [vmem:[%s1 + $0x448] sm:$0xff]
    %v1475 = vld [vmem:[%s1 + $0x450] sm:$0xff]
    %v1476 = vld [vmem:[%s1 + $0x458] sm:$0xff]
    %v1477 = vld [vmem:[%s1 + $0x460] sm:$0xff]
    %v1478 = vld [vmem:[%s1 + $0x468] sm:$0xff]
    %v1479 = vld [vmem:[%s1 + $0x470] sm:$0xff]
    %v1480 = vld [vmem:[%s1 + $0x478] sm:$0xff]
    %v1481 = vld [vmem:[%s1 + $0x480] sm:$0xff]
    %v1482 = vld [vmem:[%s1 + $0x488] sm:$0xff]
    %v1483 = vld [vmem:[%s1 + $0x490] sm:$0xff]
    %v1484 = vld [vmem:[%s1 + $0x498] sm:$0xff]
    %v1485 = vld [vmem:[%s1 + $0x4a0] sm:$0xff]
    %v1486 = vld [vmem:[%s1 + $0x4a8] sm:$0xff]
    %v1487 = vld [vmem:[%s1 + $0x4b0] sm:$0xff]
    %v1488 = vld [vmem:[%s1 + $0x4b8] sm:$0xff]
    %v1489 = vld [vmem:[%s1 + $0x4c0] sm:$0xff]
    %v1490 = vld [vmem:[%s1 + $0x4c8] sm:$0xff]
    %v1491 = vld [vmem:[%s1 + $0x4d0] sm:$0xff]
    %v1492 = vld [vmem:[%s1 + $0x4d8] sm:$0xff]
    %v1493 = vld [vmem:[%s1 + $0x4e0] sm:$0xff]
    %v1494 = vld [vmem:[%s1 + $0x4e8] sm:$0xff]
    %v1495 = vld [vmem:[%s1 + $0x4f0] sm:$0xff]
    %v1496 = vld [vmem:[%s1 + $0x4f8] sm:$0xff]
    %v1497 = vld [vmem:[%s1 + $0x500] sm:$0xff]
    %v1498 = vld [vmem:[%s1 + $0x508] sm:$0xff]
    %v1499 = vld [vmem:[%s1 + $0x510] sm:$0xff]
    %v1500 = vld [vmem:[%s1 + $0x518] sm:$0xff]
    %v1501 = vld [vmem:[%s1 + $0x520] sm:$0xff]
    %v1502 = vld [vmem:[%s1 + $0x528] sm:$0xff]
    %v1503 = vld [vmem:[%s1 + $0x530] sm:$0xff]
    %v1504 = vld [vmem:[%s1 + $0x538] sm:$0xff]
    %v1505 = vld [vmem:[%s1 + $0x540] sm:$0xff]
    %v1506 = vld [vmem:[%s1 + $0x548] sm:$0xff]
    %v1507 = vld [vmem:[%s1 + $0x550] sm:$0xff]
    %v1508 = vld [vmem:[%s1 + $0x558] sm:$0xff]
    %v1509 = vld [vmem:[%s1 + $0x560] sm:$0xff]
    %v1510 = vld [vmem:[%s1 + $0x568] sm:$0xff]
    %v1511 = vld [vmem:[%s1 + $0x570] sm:$0xff]
    %v1512 = vld [vmem:[%s1 + $0x578] sm:$0xff]
    %v1513 = vld [vmem:[%s1 + $0x580] sm:$0xff]
    %v1514 = vld [vmem:[%s1 + $0x588] sm:$0xff]
    %v1515 = vld [vmem:[%s1 + $0x590] sm:$0xff]
    %v1516 = vld [vmem:[%s1 + $0x598] sm:$0xff]
    %v1517 = vld [vmem:[%s1 + $0x5a0] sm:$0xff]
    %v1518 = vld [vmem:[%s1 + $0x5a8] sm:$0xff]
    %v1519 = vld [vmem:[%s1 + $0x5b0] sm:$0xff]
    %v1520 = vld [vmem:[%s1 + $0x5b8] sm:$0xff]
    %v1521 = vld [vmem:[%s1 + $0x5c0] sm:$0xff]
    %v1522 = vld [vmem:[%s1 + $0x5c8] sm:$0xff]
    %v1523 = vld [vmem:[%s1 + $0x5d0] sm:$0xff]
    %v1524 = vld [vmem:[%s1 + $0x5d8] sm:$0xff]
    %v1525 = vld [vmem:[%s1 + $0x5e0] sm:$0xff]
    %v1526 = vld [vmem:[%s1 + $0x5e8] sm:$0xff]
    %v1527 = vld [vmem:[%s1 + $0x5f0] sm:$0xff]
    %v1528 = vld [vmem:[%s1 + $0x5f8] sm:$0xff]
    %v1529 = vld [vmem:[%s1 + $0x600] sm:$0xff]
    %v1530 = vld [vmem:[%s1 + $0x608] sm:$0xff]
    %v1531 = vld [vmem:[%s1 + $0x610] sm:$0xff]
    %v1532 = vld [vmem:[%s1 + $0x618] sm:$0xff]
    %v1533 = vld [vmem:[%s1 + $0x620] sm:$0xff]
    %v1534 = vld [vmem:[%s1 + $0x628] sm:$0xff]
    %v1535 = vld [vmem:[%s1 + $0x630] sm:$0xff]
    %v1536 = vld [vmem:[%s1 + $0x638] sm:$0xff]
    %v1537 = vld [vmem:[%s1 + $0x640] sm:$0xff]
    %v1538 = vld [vmem:[%s1 + $0x648] sm:$0xff]
    %v1539 = vld [vmem:[%s1 + $0x650] sm:$0xff]
    %v1540 = vld [vmem:[%s1 + $0x658] sm:$0xff]
    %v1541 = vld [vmem:[%s1 + $0x660] sm:$0xff]
    %v1542 = vld [vmem:[%s1 + $0x668] sm:$0xff]
    %v1543 = vld [vmem:[%s1 + $0x670] sm:$0xff]
    %v1544 = vld [vmem:[%s1 + $0x678] sm:$0xff]
    %v1545 = vld [vmem:[%s1 + $0x680] sm:$0xff]
    %v1546 = vld [vmem:[%s1 + $0x688] sm:$0xff]
    %v1547 = vld [vmem:[%s1 + $0x690] sm:$0xff]
    %v1548 = vld [vmem:[%s1 + $0x698] sm:$0xff]
    %v1549 = vld [vmem:[%s1 + $0x6a0] sm:$0xff]
    %v1550 = vld [vmem:[%s1 + $0x6a8] sm:$0xff]
    %v1551 = vld [vmem:[%s1 + $0x6b0] sm:$0xff]
    %v1552 = vld [vmem:[%s1 + $0x6b8] sm:$0xff]
    %v1553 = vld [vmem:[%s1 + $0x6c0] sm:$0xff]
    %v1554 = vld [vmem:[%s1 + $0x6c8] sm:$0xff]
    %v1555 = vld [vmem:[%s1 + $0x6d0] sm:$0xff]
    %v1556 = vld [vmem:[%s1 + $0x6d8] sm:$0xff]
    %v1557 = vld [vmem:[%s1 + $0x6e0] sm:$0xff]
    %v1558 = vld [vmem:[%s1 + $0x6e8] sm:$0xff]
    %v1559 = vld [vmem:[%s1 + $0x6f0] sm:$0xff]
    %v1560 = vld [vmem:[%s1 + $0x6f8] sm:$0xff]
    %v1561 = vld [vmem:[%s1 + $0x700] sm:$0xff]
    %v1562 = vld [vmem:[%s1 + $0x708] sm:$0xff]
    %v1563 = vld [vmem:[%s1 + $0x710] sm:$0xff]
    %v1564 = vld [vmem:[%s1 + $0x718] sm:$0xff]
    %v1565 = vld [vmem:[%s1 + $0x720] sm:$0xff]
    %v1566 = vld [vmem:[%s1 + $0x728] sm:$0xff]
    %v1567 = vld [vmem:[%s1 + $0x730] sm:$0xff]
    %v1568 = vld [vmem:[%s1 + $0x738] sm:$0xff]
    %v1569 = vld [vmem:[%s1 + $0x740] sm:$0xff]
    %v1570 = vld [vmem:[%s1 + $0x748] sm:$0xff]
    %v1571 = vld [vmem:[%s1 + $0x750] sm:$0xff]
    %v1572 = vld [vmem:[%s1 + $0x758] sm:$0xff]
    %v1573 = vld [vmem:[%s1 + $0x760] sm:$0xff]
    %v1574 = vld [vmem:[%s1 + $0x768] sm:$0xff]
    %v1575 = vld [vmem:[%s1 + $0x770] sm:$0xff]
    %v1576 = vld [vmem:[%s1 + $0x778] sm:$0xff]
    %v1577 = vld [vmem:[%s1 + $0x780] sm:$0xff]
    %v1578 = vld [vmem:[%s1 + $0x788] sm:$0xff]
    %v1579 = vld [vmem:[%s1 + $0x790] sm:$0xff]
    %v1580 = vld [vmem:[%s1 + $0x798] sm:$0xff]
    %v1581 = vld [vmem:[%s1 + $0x7a0] sm:$0xff]
    %v1582 = vld [vmem:[%s1 + $0x7a8] sm:$0xff]
    %v1583 = vld [vmem:[%s1 + $0x7b0] sm:$0xff]
    %v1584 = vld [vmem:[%s1 + $0x7b8] sm:$0xff]
    %v1585 = vld [vmem:[%s1 + $0x7c0] sm:$0xff]
    %v1586 = vld [vmem:[%s1 + $0x7c8] sm:$0xff]
    %v1587 = vld [vmem:[%s1 + $0x7d0] sm:$0xff]
    %v1588 = vld [vmem:[%s1 + $0x7d8] sm:$0xff]
    %v1589 = vld [vmem:[%s1 + $0x7e0] sm:$0xff]
    %v1590 = vld [vmem:[%s1 + $0x7e8] sm:$0xff]
    %v1591 = vld [vmem:[%s1 + $0x7f0] sm:$0xff]
    %v1592 = vld [vmem:[%s1 + $0x7f8] sm:$0xff]
    %v1593 = vld [vmem:[%s1 + $0x800] sm:$0xff]
    %v1594 = vld [vmem:[%s1 + $0x808] sm:$0xff]
    %v1595 = vld [vmem:[%s1 + $0x810] sm:$0xff]
    %v1596 = vld [vmem:[%s1 + $0x818] sm:$0xff]
    %v1597 = vld [vmem:[%s1 + $0x820] sm:$0xff]
    %v1598 = vld [vmem:[%s1 + $0x828] sm:$0xff]
    %v1599 = vld [vmem:[%s1 + $0x830] sm:$0xff]
    %v1600 = vld [vmem:[%s1 + $0x838] sm:$0xff]
    %v1601 = vld [vmem:[%s1 + $0x840] sm:$0xff]
    %v1602 = vld [vmem:[%s1 + $0x848] sm:$0xff]
    %v1603 = vld [vmem:[%s1 + $0x850] sm:$0xff]
    %v1604 = vld [vmem:[%s1 + $0x858] sm:$0xff]
    %v1605 = vld [vmem:[%s1 + $0x860] sm:$0xff]
    %v1606 = vld [vmem:[%s1 + $0x868] sm:$0xff]
    %v1607 = vld [vmem:[%s1 + $0x870] sm:$0xff]
    %v1608 = vld [vmem:[%s1 + $0x878] sm:$0xff]
    %v1609 = vld [vmem:[%s1 + $0x880] sm:$0xff]
    %v1610 = vld [vmem:[%s1 + $0x888] sm:$0xff]
    %v1611 = vld [vmem:[%s1 + $0x890] sm:$0xff]
    %v1612 = vld [vmem:[%s1 + $0x898] sm:$0xff]
    %v1613 = vld [vmem:[%s1 + $0x8a0] sm:$0xff]
    %v1614 = vld [vmem:[%s1 + $0x8a8] sm:$0xff]
    %v1615 = vld [vmem:[%s1 + $0x8b0] sm:$0xff]
    %v1616 = vld [vmem:[%s1 + $0x8b8] sm:$0xff]
    %v1617 = vld [vmem:[%s1 + $0x8c0] sm:$0xff]
    %v1618 = vld [vmem:[%s1 + $0x8c8] sm:$0xff]
    %v1619 = vld [vmem:[%s1 + $0x8d0] sm:$0xff]
    %v1620 = vld [vmem:[%s1 + $0x8d8] sm:$0xff]
    %v1621 = vld [vmem:[%s1 + $0x8e0] sm:$0xff]
    %v1622 = vld [vmem:[%s1 + $0x8e8] sm:$0xff]
    %v1623 = vld [vmem:[%s1 + $0x8f0] sm:$0xff]
    %v1624 = vld [vmem:[%s1 + $0x8f8] sm:$0xff]
    %v1625 = vld [vmem:[%s1 + $0x900] sm:$0xff]
    %v1626 = vld [vmem:[%s1 + $0x908] sm:$0xff]
    %v1627 = vld [vmem:[%s1 + $0x910] sm:$0xff]
    %v1628 = vld [vmem:[%s1 + $0x918] sm:$0xff]
    %v1629 = vld [vmem:[%s1 + $0x920] sm:$0xff]
    %v1630 = vld [vmem:[%s1 + $0x928] sm:$0xff]
    %v1631 = vld [vmem:[%s1 + $0x930] sm:$0xff]
    %v1632 = vld [vmem:[%s1 + $0x938] sm:$0xff]
    %v1633 = vld [vmem:[%s1 + $0x940] sm:$0xff]
    %v1634 = vld [vmem:[%s1 + $0x948] sm:$0xff]
    %v1635 = vld [vmem:[%s1 + $0x950] sm:$0xff]
    %v1636 = vld [vmem:[%s1 + $0x958] sm:$0xff]
    %v1637 = vld [vmem:[%s1 + $0x960] sm:$0xff]
    %v1638 = vld [vmem:[%s1 + $0x968] sm:$0xff]
    %v1639 = vld [vmem:[%s1 + $0x970] sm:$0xff]
    %v1640 = vld [vmem:[%s1 + $0x978] sm:$0xff]
    %v1641 = vld [vmem:[%s1 + $0x980] sm:$0xff]
    %v1642 = vld [vmem:[%s1 + $0x988] sm:$0xff]
    %v1643 = vld [vmem:[%s1 + $0x990] sm:$0xff]
    %v1644 = vld [vmem:[%s1 + $0x998] sm:$0xff]
    %v1645 = vld [vmem:[%s1 + $0x9a0] sm:$0xff]
    %v1646 = vld [vmem:[%s1 + $0x9a8] sm:$0xff]
    %v1647 = vld [vmem:[%s1 + $0x9b0] sm:$0xff]
    %v1648 = vld [vmem:[%s1 + $0x9b8] sm:$0xff]
    %v1649 = vld [vmem:[%s1 + $0x9c0] sm:$0xff]
    %v1650 = vld [vmem:[%s1 + $0x9c8] sm:$0xff]
    %v1651 = vld [vmem:[%s1 + $0x9d0] sm:$0xff]
    %v1652 = vld [vmem:[%s1 + $0x9d8] sm:$0xff]
    %v1653 = vld [vmem:[%s1 + $0x9e0] sm:$0xff]
    %v1654 = vld [vmem:[%s1 + $0x9e8] sm:$0xff]
    %v1655 = vld [vmem:[%s1 + $0x9f0] sm:$0xff]
    %v1656 = vld [vmem:[%s1 + $0x9f8] sm:$0xff]
    %v1657 = vld [vmem:[%s1 + $0xa00] sm:$0xff]
    %v1658 = vld [vmem:[%s1 + $0xa08] sm:$0xff]
    %v1659 = vld [vmem:[%s1 + $0xa10] sm:$0xff]
    %v1660 = vld [vmem:[%s1 + $0xa18] sm:$0xff]
    %v1661 = vld [vmem:[%s1 + $0xa20] sm:$0xff]
    %v1662 = vld [vmem:[%s1 + $0xa28] sm:$0xff]
    %v1663 = vld [vmem:[%s1 + $0xa30] sm:$0xff]
    %v1664 = vld [vmem:[%s1 + $0xa38] sm:$0xff]
    %v1665 = vld [vmem:[%s1 + $0xa40] sm:$0xff]
    %v1666 = vld [vmem:[%s1 + $0xa48] sm:$0xff]
    %v1667 = vld [vmem:[%s1 + $0xa50] sm:$0xff]
    %v1668 = vld [vmem:[%s1 + $0xa58] sm:$0xff]
    %v1669 = vld [vmem:[%s1 + $0xa60] sm:$0xff]
    %v1670 = vld [vmem:[%s1 + $0xa68] sm:$0xff]
    %v1671 = vld [vmem:[%s1 + $0xa70] sm:$0xff]
    %v1672 = vld [vmem:[%s1 + $0xa78] sm:$0xff]
    %v1673 = vld [vmem:[%s1 + $0xa80] sm:$0xff]
    %v1674 = vld [vmem:[%s1 + $0xa88] sm:$0xff]
    %v1675 = vld [vmem:[%s1 + $0xa90] sm:$0xff]
    %v1676 = vld [vmem:[%s1 + $0xa98] sm:$0xff]
    %v1677 = vld [vmem:[%s1 + $0xaa0] sm:$0xff]
    %v1678 = vld [vmem:[%s1 + $0xaa8] sm:$0xff]
    %v1679 = vld [vmem:[%s1 + $0xab0] sm:$0xff]
    %v1680 = vld [vmem:[%s1 + $0xab8] sm:$0xff]
    %v1681 = vld [vmem:[%s1 + $0xac0] sm:$0xff]
    %v1682 = vld [vmem:[%s1 + $0xac8] sm:$0xff]
    %v1683 = vld [vmem:[%s1 + $0xad0] sm:$0xff]
    %v1684 = vld [vmem:[%s1 + $0xad8] sm:$0xff]
    %v1685 = vld [vmem:[%s1 + $0xae0] sm:$0xff]
    %v1686 = vld [vmem:[%s1 + $0xae8] sm:$0xff]
    %v1687 = vld [vmem:[%s1 + $0xaf0] sm:$0xff]
    %v1688 = vld [vmem:[%s1 + $0xaf8] sm:$0xff]
    %v1689 = vld [vmem:[%s1 + $0xb00] sm:$0xff]
    %v1690 = vld [vmem:[%s1 + $0xb08] sm:$0xff]
    %v1691 = vld [vmem:[%s1 + $0xb10] sm:$0xff]
    %v1692 = vld [vmem:[%s1 + $0xb18] sm:$0xff]
    %v1693 = vld [vmem:[%s1 + $0xb20] sm:$0xff]
    %v1694 = vld [vmem:[%s1 + $0xb28] sm:$0xff]
    %v1695 = vld [vmem:[%s1 + $0xb30] sm:$0xff]
    %v1696 = vld [vmem:[%s1 + $0xb38] sm:$0xff]
    %v1697 = vld [vmem:[%s1 + $0xb40] sm:$0xff]
    %v1698 = vld [vmem:[%s1 + $0xb48] sm:$0xff]
    %v1699 = vld [vmem:[%s1 + $0xb50] sm:$0xff]
    %v1700 = vld [vmem:[%s1 + $0xb58] sm:$0xff]
    %v1701 = vld [vmem:[%s1 + $0xb60] sm:$0xff]
    %v1702 = vld [vmem:[%s1 + $0xb68] sm:$0xff]
    %v1703 = vld [vmem:[%s1 + $0xb70] sm:$0xff]
    %v1704 = vld [vmem:[%s1 + $0xb78] sm:$0xff]
    %v1705 = vld [vmem:[%s1 + $0xb80] sm:$0xff]
    %v1706 = vld [vmem:[%s1 + $0xb88] sm:$0xff]
    %v1707 = vld [vmem:[%s1 + $0xb90] sm:$0xff]
    %v1708 = vld [vmem:[%s1 + $0xb98] sm:$0xff]
    %v1709 = vld [vmem:[%s1 + $0xba0] sm:$0xff]
    %v1710 = vld [vmem:[%s1 + $0xba8] sm:$0xff]
    %v1711 = vld [vmem:[%s1 + $0xbb0] sm:$0xff]
    %v1712 = vld [vmem:[%s1 + $0xbb8] sm:$0xff]
    %v1713 = vld [vmem:[%s1 + $0xbc0] sm:$0xff]
    %v1714 = vld [vmem:[%s1 + $0xbc8] sm:$0xff]
    %v1715 = vld [vmem:[%s1 + $0xbd0] sm:$0xff]
    %v1716 = vld [vmem:[%s1 + $0xbd8] sm:$0xff]
    %v1717 = vld [vmem:[%s1 + $0xbe0] sm:$0xff]
    %v1718 = vld [vmem:[%s1 + $0xbe8] sm:$0xff]
    %v1719 = vld [vmem:[%s1 + $0xbf0] sm:$0xff]
    %v1720 = vld [vmem:[%s1 + $0xbf8] sm:$0xff]
    %v1721 = vld [vmem:[%s1 + $0xc00] sm:$0xff]
    %v1722 = vld [vmem:[%s1 + $0xc08] sm:$0xff]
    %v1723 = vld [vmem:[%s1 + $0xc10] sm:$0xff]
    %v1724 = vld [vmem:[%s1 + $0xc18] sm:$0xff]
    %v1725 = vld [vmem:[%s1 + $0xc20] sm:$0xff]
    %v1726 = vld [vmem:[%s1 + $0xc28] sm:$0xff]
    %v1727 = vld [vmem:[%s1 + $0xc30] sm:$0xff]
    %v1728 = vld [vmem:[%s1 + $0xc38] sm:$0xff]
    %v1729 = vld [vmem:[%s1 + $0xc40] sm:$0xff]
    %v1730 = vld [vmem:[%s1 + $0xc48] sm:$0xff]
    %v1731 = vld [vmem:[%s1 + $0xc50] sm:$0xff]
    %v1732 = vld [vmem:[%s1 + $0xc58] sm:$0xff]
    %v1733 = vld [vmem:[%s1 + $0xc60] sm:$0xff]
    %v1734 = vld [vmem:[%s1 + $0xc68] sm:$0xff]
    %v1735 = vld [vmem:[%s1 + $0xc70] sm:$0xff]
    %v1736 = vld [vmem:[%s1 + $0xc78] sm:$0xff]
    %v1737 = vld [vmem:[%s1 + $0xc80] sm:$0xff]
    %v1738 = vld [vmem:[%s1 + $0xc88] sm:$0xff]
    %v1739 = vld [vmem:[%s1 + $0xc90] sm:$0xff]
    %v1740 = vld [vmem:[%s1 + $0xc98] sm:$0xff]
    %v1741 = vld [vmem:[%s1 + $0xca0] sm:$0xff]
    %v1742 = vld [vmem:[%s1 + $0xca8] sm:$0xff]
    %v1743 = vld [vmem:[%s1 + $0xcb0] sm:$0xff]
    %v1744 = vld [vmem:[%s1 + $0xcb8] sm:$0xff]
    %v1745 = vld [vmem:[%s1 + $0xcc0] sm:$0xff]
    %v1746 = vld [vmem:[%s1 + $0xcc8] sm:$0xff]
    %v1747 = vld [vmem:[%s1 + $0xcd0] sm:$0xff]
    %v1748 = vld [vmem:[%s1 + $0xcd8] sm:$0xff]
    %v1749 = vld [vmem:[%s1 + $0xce0] sm:$0xff]
    %v1750 = vld [vmem:[%s1 + $0xce8] sm:$0xff]
    %v1751 = vld [vmem:[%s1 + $0xcf0] sm:$0xff]
    %v1752 = vld [vmem:[%s1 + $0xcf8] sm:$0xff]
    %v1753 = vld [vmem:[%s1 + $0xd00] sm:$0xff]
    %v1754 = vld [vmem:[%s1 + $0xd08] sm:$0xff]
    %v1755 = vld [vmem:[%s1 + $0xd10] sm:$0xff]
    %v1756 = vld [vmem:[%s1 + $0xd18] sm:$0xff]
    %v1757 = vld [vmem:[%s1 + $0xd20] sm:$0xff]
    %v1758 = vld [vmem:[%s1 + $0xd28] sm:$0xff]
    %v1759 = vld [vmem:[%s1 + $0xd30] sm:$0xff]
    %v1760 = vld [vmem:[%s1 + $0xd38] sm:$0xff]
    %v1761 = vld [vmem:[%s1 + $0xd40] sm:$0xff]
    %v1762 = vld [vmem:[%s1 + $0xd48] sm:$0xff]
    %v1763 = vld [vmem:[%s1 + $0xd50] sm:$0xff]
    %v1764 = vld [vmem:[%s1 + $0xd58] sm:$0xff]
    %v1765 = vld [vmem:[%s1 + $0xd60] sm:$0xff]
    %v1766 = vld [vmem:[%s1 + $0xd68] sm:$0xff]
    %v1767 = vld [vmem:[%s1 + $0xd70] sm:$0xff]
    %v1768 = vld [vmem:[%s1 + $0xd78] sm:$0xff]
    %v1769 = vld [vmem:[%s1 + $0xd80] sm:$0xff]
    %v1770 = vld [vmem:[%s1 + $0xd88] sm:$0xff]
    %v1771 = vld [vmem:[%s1 + $0xd90] sm:$0xff]
    %v1772 = vld [vmem:[%s1 + $0xd98] sm:$0xff]
    %v1773 = vld [vmem:[%s1 + $0xda0] sm:$0xff]
    %v1774 = vld [vmem:[%s1 + $0xda8] sm:$0xff]
    %v1775 = vld [vmem:[%s1 + $0xdb0] sm:$0xff]
    %v1776 = vld [vmem:[%s1 + $0xdb8] sm:$0xff]
    %v1777 = vld [vmem:[%s1 + $0xdc0] sm:$0xff]
    %v1778 = vld [vmem:[%s1 + $0xdc8] sm:$0xff]
    %v1779 = vld [vmem:[%s1 + $0xdd0] sm:$0xff]
    %v1780 = vld [vmem:[%s1 + $0xdd8] sm:$0xff]
    %v1781 = vld [vmem:[%s1 + $0xde0] sm:$0xff]
    %v1782 = vld [vmem:[%s1 + $0xde8] sm:$0xff]
    %v1783 = vld [vmem:[%s1 + $0xdf0] sm:$0xff]
    %v1784 = vld [vmem:[%s1 + $0xdf8] sm:$0xff]
    %v1785 = vld [vmem:[%s1 + $0xe00] sm:$0xff]
    %v1786 = vld [vmem:[%s1 + $0xe08] sm:$0xff]
    %v1787 = vld [vmem:[%s1 + $0xe10] sm:$0xff]
    %v1788 = vld [vmem:[%s1 + $0xe18] sm:$0xff]
    %v1789 = vld [vmem:[%s1 + $0xe20] sm:$0xff]
    %v1790 = vld [vmem:[%s1 + $0xe28] sm:$0xff]
    %v1791 = vld [vmem:[%s1 + $0xe30] sm:$0xff]
    %v1792 = vld [vmem:[%s1 + $0xe38] sm:$0xff]
    %v1793 = vld [vmem:[%s1 + $0xe40] sm:$0xff]
    %v1794 = vld [vmem:[%s1 + $0xe48] sm:$0xff]
    %v1795 = vld [vmem:[%s1 + $0xe50] sm:$0xff]
    %v1796 = vld [vmem:[%s1 + $0xe58] sm:$0xff]
    %v1797 = vld [vmem:[%s1 + $0xe60] sm:$0xff]
    %v1798 = vld [vmem:[%s1 + $0xe68] sm:$0xff]
    %v1799 = vld [vmem:[%s1 + $0xe70] sm:$0xff]
    %v1800 = vld [vmem:[%s1 + $0xe78] sm:$0xff]
    %v1801 = vld [vmem:[%s1 + $0xe80] sm:$0xff]
    %v1802 = vld [vmem:[%s1 + $0xe88] sm:$0xff]
    %v1803 = vld [vmem:[%s1 + $0xe90] sm:$0xff]
    %v1804 = vld [vmem:[%s1 + $0xe98] sm:$0xff]
    %v1805 = vld [vmem:[%s1 + $0xea0] sm:$0xff]
    %v1806 = vld [vmem:[%s1 + $0xea8] sm:$0xff]
    %v1807 = vld [vmem:[%s1 + $0xeb0] sm:$0xff]
    %v1808 = vld [vmem:[%s1 + $0xeb8] sm:$0xff]
    %v1809 = vld [vmem:[%s1 + $0xec0] sm:$0xff]
    %v1810 = vld [vmem:[%s1 + $0xec8] sm:$0xff]
    %v1811 = vld [vmem:[%s1 + $0xed0] sm:$0xff]
    %v1812 = vld [vmem:[%s1 + $0xed8] sm:$0xff]
    %v1813 = vld [vmem:[%s1 + $0xee0] sm:$0xff]
    %v1814 = vld [vmem:[%s1 + $0xee8] sm:$0xff]
    %v1815 = vld [vmem:[%s1 + $0xef0] sm:$0xff]
    %v1816 = vld [vmem:[%s1 + $0xef8] sm:$0xff]
    %v2297 = vunpack.c.l.b16 %v1337
    %v2298 = vunpack.c.h.b16 %v1337
    %v2299 = vunpack.c.l.b16 %v1338
    %v2300 = vunpack.c.h.b16 %v1338
    %v2301 = vunpack.c.l.b16 %v1339
    %v2302 = vunpack.c.h.b16 %v1339
    %v2303 = vunpack.c.l.b16 %v1340
    %v2304 = vunpack.c.h.b16 %v1340
    %v2305 = vunpack.c.l.b16 %v1341
    %v2306 = vunpack.c.h.b16 %v1341
    %v2307 = vunpack.c.l.b16 %v1342
    %v2308 = vunpack.c.h.b16 %v1342
    %v2309 = vunpack.c.l.b16 %v1343
    %v2310 = vunpack.c.h.b16 %v1343
    %v2311 = vunpack.c.l.b16 %v1344
    %v2312 = vunpack.c.h.b16 %v1344
    %v2313 = vunpack.c.l.b16 %v1345
    %v2314 = vunpack.c.h.b16 %v1345
    %v2315 = vunpack.c.l.b16 %v1346
    %v2316 = vunpack.c.h.b16 %v1346
    %v2317 = vunpack.c.l.b16 %v1347
    %v2318 = vunpack.c.h.b16 %v1347
    %v2319 = vunpack.c.l.b16 %v1348
    %v2320 = vunpack.c.h.b16 %v1348
    %v2321 = vunpack.c.l.b16 %v1349
    %v2322 = vunpack.c.h.b16 %v1349
    %v2323 = vunpack.c.l.b16 %v1350
    %v2324 = vunpack.c.h.b16 %v1350
    %v2325 = vunpack.c.l.b16 %v1351
    %v2326 = vunpack.c.h.b16 %v1351
    %v2327 = vunpack.c.l.b16 %v1352
    %v2328 = vunpack.c.h.b16 %v1352
    %v2329 = vunpack.c.l.b16 %v1353
    %v2330 = vunpack.c.h.b16 %v1353
    %v2331 = vunpack.c.l.b16 %v1354
    %v2332 = vunpack.c.h.b16 %v1354
    %v2333 = vunpack.c.l.b16 %v1355
    %v2334 = vunpack.c.h.b16 %v1355
    %v2335 = vunpack.c.l.b16 %v1356
    %v2336 = vunpack.c.h.b16 %v1356
    %v2337 = vunpack.c.l.b16 %v1357
    %v2338 = vunpack.c.h.b16 %v1357
    %v2339 = vunpack.c.l.b16 %v1358
    %v2340 = vunpack.c.h.b16 %v1358
    %v2341 = vunpack.c.l.b16 %v1359
    %v2342 = vunpack.c.h.b16 %v1359
    %v2343 = vunpack.c.l.b16 %v1360
    %v2344 = vunpack.c.h.b16 %v1360
    %v2345 = vunpack.c.l.b16 %v1361
    %v2346 = vunpack.c.h.b16 %v1361
    %v2347 = vunpack.c.l.b16 %v1362
    %v2348 = vunpack.c.h.b16 %v1362
    %v2349 = vunpack.c.l.b16 %v1363
    %v2350 = vunpack.c.h.b16 %v1363
    %v2351 = vunpack.c.l.b16 %v1364
    %v2352 = vunpack.c.h.b16 %v1364
    %v2353 = vunpack.c.l.b16 %v1365
    %v2354 = vunpack.c.h.b16 %v1365
    %v2355 = vunpack.c.l.b16 %v1366
    %v2356 = vunpack.c.h.b16 %v1366
    %v2357 = vunpack.c.l.b16 %v1367
    %v2358 = vunpack.c.h.b16 %v1367
    %v2359 = vunpack.c.l.b16 %v1368
    %v2360 = vunpack.c.h.b16 %v1368
    %v2361 = vunpack.c.l.b16 %v1369
    %v2362 = vunpack.c.h.b16 %v1369
    %v2363 = vunpack.c.l.b16 %v1370
    %v2364 = vunpack.c.h.b16 %v1370
    %v2365 = vunpack.c.l.b16 %v1371
    %v2366 = vunpack.c.h.b16 %v1371
    %v2367 = vunpack.c.l.b16 %v1372
    %v2368 = vunpack.c.h.b16 %v1372
    %v2369 = vunpack.c.l.b16 %v1373
    %v2370 = vunpack.c.h.b16 %v1373
    %v2371 = vunpack.c.l.b16 %v1374
    %v2372 = vunpack.c.h.b16 %v1374
    %v2373 = vunpack.c.l.b16 %v1375
    %v2374 = vunpack.c.h.b16 %v1375
    %v2375 = vunpack.c.l.b16 %v1376
    %v2376 = vunpack.c.h.b16 %v1376
    %v2377 = vunpack.c.l.b16 %v1377
    %v2378 = vunpack.c.h.b16 %v1377
    %v2379 = vunpack.c.l.b16 %v1378
    %v2380 = vunpack.c.h.b16 %v1378
    %v2381 = vunpack.c.l.b16 %v1379
    %v2382 = vunpack.c.h.b16 %v1379
    %v2383 = vunpack.c.l.b16 %v1380
    %v2384 = vunpack.c.h.b16 %v1380
    %v2385 = vunpack.c.l.b16 %v1381
    %v2386 = vunpack.c.h.b16 %v1381
    %v2387 = vunpack.c.l.b16 %v1382
    %v2388 = vunpack.c.h.b16 %v1382
    %v2389 = vunpack.c.l.b16 %v1383
    %v2390 = vunpack.c.h.b16 %v1383
    %v2391 = vunpack.c.l.b16 %v1384
    %v2392 = vunpack.c.h.b16 %v1384
    %v2393 = vunpack.c.l.b16 %v1385
    %v2394 = vunpack.c.h.b16 %v1385
    %v2395 = vunpack.c.l.b16 %v1386
    %v2396 = vunpack.c.h.b16 %v1386
    %v2397 = vunpack.c.l.b16 %v1387
    %v2398 = vunpack.c.h.b16 %v1387
    %v2399 = vunpack.c.l.b16 %v1388
    %v2400 = vunpack.c.h.b16 %v1388
    %v2401 = vunpack.c.l.b16 %v1389
    %v2402 = vunpack.c.h.b16 %v1389
    %v2403 = vunpack.c.l.b16 %v1390
    %v2404 = vunpack.c.h.b16 %v1390
    %v2405 = vunpack.c.l.b16 %v1391
    %v2406 = vunpack.c.h.b16 %v1391
    %v2407 = vunpack.c.l.b16 %v1392
    %v2408 = vunpack.c.h.b16 %v1392
    %v2409 = vunpack.c.l.b16 %v1393
    %v2410 = vunpack.c.h.b16 %v1393
    %v2411 = vunpack.c.l.b16 %v1394
    %v2412 = vunpack.c.h.b16 %v1394
    %v2413 = vunpack.c.l.b16 %v1395
    %v2414 = vunpack.c.h.b16 %v1395
    %v2415 = vunpack.c.l.b16 %v1396
    %v2416 = vunpack.c.h.b16 %v1396
    %v2417 = vunpack.c.l.b16 %v1397
    %v2418 = vunpack.c.h.b16 %v1397
    %v2419 = vunpack.c.l.b16 %v1398
    %v2420 = vunpack.c.h.b16 %v1398
    %v2421 = vunpack.c.l.b16 %v1399
    %v2422 = vunpack.c.h.b16 %v1399
    %v2423 = vunpack.c.l.b16 %v1400
    %v2424 = vunpack.c.h.b16 %v1400
    %v2425 = vunpack.c.l.b16 %v1401
    %v2426 = vunpack.c.h.b16 %v1401
    %v2427 = vunpack.c.l.b16 %v1402
    %v2428 = vunpack.c.h.b16 %v1402
    %v2429 = vunpack.c.l.b16 %v1403
    %v2430 = vunpack.c.h.b16 %v1403
    %v2431 = vunpack.c.l.b16 %v1404
    %v2432 = vunpack.c.h.b16 %v1404
    %v2433 = vunpack.c.l.b16 %v1405
    %v2434 = vunpack.c.h.b16 %v1405
    %v2435 = vunpack.c.l.b16 %v1406
    %v2436 = vunpack.c.h.b16 %v1406
    %v2437 = vunpack.c.l.b16 %v1407
    %v2438 = vunpack.c.h.b16 %v1407
    %v2439 = vunpack.c.l.b16 %v1408
    %v2440 = vunpack.c.h.b16 %v1408
    %v2441 = vunpack.c.l.b16 %v1409
    %v2442 = vunpack.c.h.b16 %v1409
    %v2443 = vunpack.c.l.b16 %v1410
    %v2444 = vunpack.c.h.b16 %v1410
    %v2445 = vunpack.c.l.b16 %v1411
    %v2446 = vunpack.c.h.b16 %v1411
    %v2447 = vunpack.c.l.b16 %v1412
    %v2448 = vunpack.c.h.b16 %v1412
    %v2449 = vunpack.c.l.b16 %v1413
    %v2450 = vunpack.c.h.b16 %v1413
    %v2451 = vunpack.c.l.b16 %v1414
    %v2452 = vunpack.c.h.b16 %v1414
    %v2453 = vunpack.c.l.b16 %v1415
    %v2454 = vunpack.c.h.b16 %v1415
    %v2455 = vunpack.c.l.b16 %v1416
    %v2456 = vunpack.c.h.b16 %v1416
    %v2457 = vunpack.c.l.b16 %v1417
    %v2458 = vunpack.c.h.b16 %v1417
    %v2459 = vunpack.c.l.b16 %v1418
    %v2460 = vunpack.c.h.b16 %v1418
    %v2461 = vunpack.c.l.b16 %v1419
    %v2462 = vunpack.c.h.b16 %v1419
    %v2463 = vunpack.c.l.b16 %v1420
    %v2464 = vunpack.c.h.b16 %v1420
    %v2465 = vunpack.c.l.b16 %v1421
    %v2466 = vunpack.c.h.b16 %v1421
    %v2467 = vunpack.c.l.b16 %v1422
    %v2468 = vunpack.c.h.b16 %v1422
    %v2469 = vunpack.c.l.b16 %v1423
    %v2470 = vunpack.c.h.b16 %v1423
    %v2471 = vunpack.c.l.b16 %v1424
    %v2472 = vunpack.c.h.b16 %v1424
    %v2473 = vunpack.c.l.b16 %v1425
    %v2474 = vunpack.c.h.b16 %v1425
    %v2475 = vunpack.c.l.b16 %v1426
    %v2476 = vunpack.c.h.b16 %v1426
    %v2477 = vunpack.c.l.b16 %v1427
    %v2478 = vunpack.c.h.b16 %v1427
    %v2479 = vunpack.c.l.b16 %v1428
    %v2480 = vunpack.c.h.b16 %v1428
    %v2481 = vunpack.c.l.b16 %v1429
    %v2482 = vunpack.c.h.b16 %v1429
    %v2483 = vunpack.c.l.b16 %v1430
    %v2484 = vunpack.c.h.b16 %v1430
    %v2485 = vunpack.c.l.b16 %v1431
    %v2486 = vunpack.c.h.b16 %v1431
    %v2487 = vunpack.c.l.b16 %v1432
    %v2488 = vunpack.c.h.b16 %v1432
    %v2489 = vunpack.c.l.b16 %v1433
    %v2490 = vunpack.c.h.b16 %v1433
    %v2491 = vunpack.c.l.b16 %v1434
    %v2492 = vunpack.c.h.b16 %v1434
    %v2493 = vunpack.c.l.b16 %v1435
    %v2494 = vunpack.c.h.b16 %v1435
    %v2495 = vunpack.c.l.b16 %v1436
    %v2496 = vunpack.c.h.b16 %v1436
    %v2497 = vunpack.c.l.b16 %v1437
    %v2498 = vunpack.c.h.b16 %v1437
    %v2499 = vunpack.c.l.b16 %v1438
    %v2500 = vunpack.c.h.b16 %v1438
    %v2501 = vunpack.c.l.b16 %v1439
    %v2502 = vunpack.c.h.b16 %v1439
    %v2503 = vunpack.c.l.b16 %v1440
    %v2504 = vunpack.c.h.b16 %v1440
    %v2505 = vunpack.c.l.b16 %v1441
    %v2506 = vunpack.c.h.b16 %v1441
    %v2507 = vunpack.c.l.b16 %v1442
    %v2508 = vunpack.c.h.b16 %v1442
    %v2509 = vunpack.c.l.b16 %v1443
    %v2510 = vunpack.c.h.b16 %v1443
    %v2511 = vunpack.c.l.b16 %v1444
    %v2512 = vunpack.c.h.b16 %v1444
    %v2513 = vunpack.c.l.b16 %v1445
    %v2514 = vunpack.c.h.b16 %v1445
    %v2515 = vunpack.c.l.b16 %v1446
    %v2516 = vunpack.c.h.b16 %v1446
    %v2517 = vunpack.c.l.b16 %v1447
    %v2518 = vunpack.c.h.b16 %v1447
    %v2519 = vunpack.c.l.b16 %v1448
    %v2520 = vunpack.c.h.b16 %v1448
    %v2521 = vunpack.c.l.b16 %v1449
    %v2522 = vunpack.c.h.b16 %v1449
    %v2523 = vunpack.c.l.b16 %v1450
    %v2524 = vunpack.c.h.b16 %v1450
    %v2525 = vunpack.c.l.b16 %v1451
    %v2526 = vunpack.c.h.b16 %v1451
    %v2527 = vunpack.c.l.b16 %v1452
    %v2528 = vunpack.c.h.b16 %v1452
    %v2529 = vunpack.c.l.b16 %v1453
    %v2530 = vunpack.c.h.b16 %v1453
    %v2531 = vunpack.c.l.b16 %v1454
    %v2532 = vunpack.c.h.b16 %v1454
    %v2533 = vunpack.c.l.b16 %v1455
    %v2534 = vunpack.c.h.b16 %v1455
    %v2535 = vunpack.c.l.b16 %v1456
    %v2536 = vunpack.c.h.b16 %v1456
    %v2537 = vunpack.c.l.b16 %v1457
    %v2538 = vunpack.c.h.b16 %v1457
    %v2539 = vunpack.c.l.b16 %v1458
    %v2540 = vunpack.c.h.b16 %v1458
    %v2541 = vunpack.c.l.b16 %v1459
    %v2542 = vunpack.c.h.b16 %v1459
    %v2543 = vunpack.c.l.b16 %v1460
    %v2544 = vunpack.c.h.b16 %v1460
    %v2545 = vunpack.c.l.b16 %v1461
    %v2546 = vunpack.c.h.b16 %v1461
    %v2547 = vunpack.c.l.b16 %v1462
    %v2548 = vunpack.c.h.b16 %v1462
    %v2549 = vunpack.c.l.b16 %v1463
    %v2550 = vunpack.c.h.b16 %v1463
    %v2551 = vunpack.c.l.b16 %v1464
    %v2552 = vunpack.c.h.b16 %v1464
    %v2553 = vunpack.c.l.b16 %v1465
    %v2554 = vunpack.c.h.b16 %v1465
    %v2555 = vunpack.c.l.b16 %v1466
    %v2556 = vunpack.c.h.b16 %v1466
    %v2557 = vunpack.c.l.b16 %v1467
    %v2558 = vunpack.c.h.b16 %v1467
    %v2559 = vunpack.c.l.b16 %v1468
    %v2560 = vunpack.c.h.b16 %v1468
    %v2561 = vunpack.c.l.b16 %v1469
    %v2562 = vunpack.c.h.b16 %v1469
    %v2563 = vunpack.c.l.b16 %v1470
    %v2564 = vunpack.c.h.b16 %v1470
    %v2565 = vunpack.c.l.b16 %v1471
    %v2566 = vunpack.c.h.b16 %v1471
    %v2567 = vunpack.c.l.b16 %v1472
    %v2568 = vunpack.c.h.b16 %v1472
    %v2569 = vunpack.c.l.b16 %v1473
    %v2570 = vunpack.c.h.b16 %v1473
    %v2571 = vunpack.c.l.b16 %v1474
    %v2572 = vunpack.c.h.b16 %v1474
    %v2573 = vunpack.c.l.b16 %v1475
    %v2574 = vunpack.c.h.b16 %v1475
    %v2575 = vunpack.c.l.b16 %v1476
    %v2576 = vunpack.c.h.b16 %v1476
    %v2577 = vunpack.c.l.b16 %v1477
    %v2578 = vunpack.c.h.b16 %v1477
    %v2579 = vunpack.c.l.b16 %v1478
    %v2580 = vunpack.c.h.b16 %v1478
    %v2581 = vunpack.c.l.b16 %v1479
    %v2582 = vunpack.c.h.b16 %v1479
    %v2583 = vunpack.c.l.b16 %v1480
    %v2584 = vunpack.c.h.b16 %v1480
    %v2585 = vunpack.c.l.b16 %v1481
    %v2586 = vunpack.c.h.b16 %v1481
    %v2587 = vunpack.c.l.b16 %v1482
    %v2588 = vunpack.c.h.b16 %v1482
    %v2589 = vunpack.c.l.b16 %v1483
    %v2590 = vunpack.c.h.b16 %v1483
    %v2591 = vunpack.c.l.b16 %v1484
    %v2592 = vunpack.c.h.b16 %v1484
    %v2593 = vunpack.c.l.b16 %v1485
    %v2594 = vunpack.c.h.b16 %v1485
    %v2595 = vunpack.c.l.b16 %v1486
    %v2596 = vunpack.c.h.b16 %v1486
    %v2597 = vunpack.c.l.b16 %v1487
    %v2598 = vunpack.c.h.b16 %v1487
    %v2599 = vunpack.c.l.b16 %v1488
    %v2600 = vunpack.c.h.b16 %v1488
    %v2601 = vunpack.c.l.b16 %v1489
    %v2602 = vunpack.c.h.b16 %v1489
    %v2603 = vunpack.c.l.b16 %v1490
    %v2604 = vunpack.c.h.b16 %v1490
    %v2605 = vunpack.c.l.b16 %v1491
    %v2606 = vunpack.c.h.b16 %v1491
    %v2607 = vunpack.c.l.b16 %v1492
    %v2608 = vunpack.c.h.b16 %v1492
    %v2609 = vunpack.c.l.b16 %v1493
    %v2610 = vunpack.c.h.b16 %v1493
    %v2611 = vunpack.c.l.b16 %v1494
    %v2612 = vunpack.c.h.b16 %v1494
    %v2613 = vunpack.c.l.b16 %v1495
    %v2614 = vunpack.c.h.b16 %v1495
    %v2615 = vunpack.c.l.b16 %v1496
    %v2616 = vunpack.c.h.b16 %v1496
    %v2617 = vunpack.c.l.b16 %v1497
    %v2618 = vunpack.c.h.b16 %v1497
    %v2619 = vunpack.c.l.b16 %v1498
    %v2620 = vunpack.c.h.b16 %v1498
    %v2621 = vunpack.c.l.b16 %v1499
    %v2622 = vunpack.c.h.b16 %v1499
    %v2623 = vunpack.c.l.b16 %v1500
    %v2624 = vunpack.c.h.b16 %v1500
    %v2625 = vunpack.c.l.b16 %v1501
    %v2626 = vunpack.c.h.b16 %v1501
    %v2627 = vunpack.c.l.b16 %v1502
    %v2628 = vunpack.c.h.b16 %v1502
    %v2629 = vunpack.c.l.b16 %v1503
    %v2630 = vunpack.c.h.b16 %v1503
    %v2631 = vunpack.c.l.b16 %v1504
    %v2632 = vunpack.c.h.b16 %v1504
    %v2633 = vunpack.c.l.b16 %v1505
    %v2634 = vunpack.c.h.b16 %v1505
    %v2635 = vunpack.c.l.b16 %v1506
    %v2636 = vunpack.c.h.b16 %v1506
    %v2637 = vunpack.c.l.b16 %v1507
    %v2638 = vunpack.c.h.b16 %v1507
    %v2639 = vunpack.c.l.b16 %v1508
    %v2640 = vunpack.c.h.b16 %v1508
    %v2641 = vunpack.c.l.b16 %v1509
    %v2642 = vunpack.c.h.b16 %v1509
    %v2643 = vunpack.c.l.b16 %v1510
    %v2644 = vunpack.c.h.b16 %v1510
    %v2645 = vunpack.c.l.b16 %v1511
    %v2646 = vunpack.c.h.b16 %v1511
    %v2647 = vunpack.c.l.b16 %v1512
    %v2648 = vunpack.c.h.b16 %v1512
    %v2649 = vunpack.c.l.b16 %v1513
    %v2650 = vunpack.c.h.b16 %v1513
    %v2651 = vunpack.c.l.b16 %v1514
    %v2652 = vunpack.c.h.b16 %v1514
    %v2653 = vunpack.c.l.b16 %v1515
    %v2654 = vunpack.c.h.b16 %v1515
    %v2655 = vunpack.c.l.b16 %v1516
    %v2656 = vunpack.c.h.b16 %v1516
    %v2657 = vunpack.c.l.b16 %v1517
    %v2658 = vunpack.c.h.b16 %v1517
    %v2659 = vunpack.c.l.b16 %v1518
    %v2660 = vunpack.c.h.b16 %v1518
    %v2661 = vunpack.c.l.b16 %v1519
    %v2662 = vunpack.c.h.b16 %v1519
    %v2663 = vunpack.c.l.b16 %v1520
    %v2664 = vunpack.c.h.b16 %v1520
    %v2665 = vunpack.c.l.b16 %v1521
    %v2666 = vunpack.c.h.b16 %v1521
    %v2667 = vunpack.c.l.b16 %v1522
    %v2668 = vunpack.c.h.b16 %v1522
    %v2669 = vunpack.c.l.b16 %v1523
    %v2670 = vunpack.c.h.b16 %v1523
    %v2671 = vunpack.c.l.b16 %v1524
    %v2672 = vunpack.c.h.b16 %v1524
    %v2673 = vunpack.c.l.b16 %v1525
    %v2674 = vunpack.c.h.b16 %v1525
    %v2675 = vunpack.c.l.b16 %v1526
    %v2676 = vunpack.c.h.b16 %v1526
    %v2677 = vunpack.c.l.b16 %v1527
    %v2678 = vunpack.c.h.b16 %v1527
    %v2679 = vunpack.c.l.b16 %v1528
    %v2680 = vunpack.c.h.b16 %v1528
    %v2681 = vunpack.c.l.b16 %v1529
    %v2682 = vunpack.c.h.b16 %v1529
    %v2683 = vunpack.c.l.b16 %v1530
    %v2684 = vunpack.c.h.b16 %v1530
    %v2685 = vunpack.c.l.b16 %v1531
    %v2686 = vunpack.c.h.b16 %v1531
    %v2687 = vunpack.c.l.b16 %v1532
    %v2688 = vunpack.c.h.b16 %v1532
    %v2689 = vunpack.c.l.b16 %v1533
    %v2690 = vunpack.c.h.b16 %v1533
    %v2691 = vunpack.c.l.b16 %v1534
    %v2692 = vunpack.c.h.b16 %v1534
    %v2693 = vunpack.c.l.b16 %v1535
    %v2694 = vunpack.c.h.b16 %v1535
    %v2695 = vunpack.c.l.b16 %v1536
    %v2696 = vunpack.c.h.b16 %v1536
    %v2697 = vunpack.c.l.b16 %v1537
    %v2698 = vunpack.c.h.b16 %v1537
    %v2699 = vunpack.c.l.b16 %v1538
    %v2700 = vunpack.c.h.b16 %v1538
    %v2701 = vunpack.c.l.b16 %v1539
    %v2702 = vunpack.c.h.b16 %v1539
    %v2703 = vunpack.c.l.b16 %v1540
    %v2704 = vunpack.c.h.b16 %v1540
    %v2705 = vunpack.c.l.b16 %v1541
    %v2706 = vunpack.c.h.b16 %v1541
    %v2707 = vunpack.c.l.b16 %v1542
    %v2708 = vunpack.c.h.b16 %v1542
    %v2709 = vunpack.c.l.b16 %v1543
    %v2710 = vunpack.c.h.b16 %v1543
    %v2711 = vunpack.c.l.b16 %v1544
    %v2712 = vunpack.c.h.b16 %v1544
    %v2713 = vunpack.c.l.b16 %v1545
    %v2714 = vunpack.c.h.b16 %v1545
    %v2715 = vunpack.c.l.b16 %v1546
    %v2716 = vunpack.c.h.b16 %v1546
    %v2717 = vunpack.c.l.b16 %v1547
    %v2718 = vunpack.c.h.b16 %v1547
    %v2719 = vunpack.c.l.b16 %v1548
    %v2720 = vunpack.c.h.b16 %v1548
    %v2721 = vunpack.c.l.b16 %v1549
    %v2722 = vunpack.c.h.b16 %v1549
    %v2723 = vunpack.c.l.b16 %v1550
    %v2724 = vunpack.c.h.b16 %v1550
    %v2725 = vunpack.c.l.b16 %v1551
    %v2726 = vunpack.c.h.b16 %v1551
    %v2727 = vunpack.c.l.b16 %v1552
    %v2728 = vunpack.c.h.b16 %v1552
    %v2729 = vunpack.c.l.b16 %v1553
    %v2730 = vunpack.c.h.b16 %v1553
    %v2731 = vunpack.c.l.b16 %v1554
    %v2732 = vunpack.c.h.b16 %v1554
    %v2733 = vunpack.c.l.b16 %v1555
    %v2734 = vunpack.c.h.b16 %v1555
    %v2735 = vunpack.c.l.b16 %v1556
    %v2736 = vunpack.c.h.b16 %v1556
    %v2737 = vunpack.c.l.b16 %v1557
    %v2738 = vunpack.c.h.b16 %v1557
    %v2739 = vunpack.c.l.b16 %v1558
    %v2740 = vunpack.c.h.b16 %v1558
    %v2741 = vunpack.c.l.b16 %v1559
    %v2742 = vunpack.c.h.b16 %v1559
    %v2743 = vunpack.c.l.b16 %v1560
    %v2744 = vunpack.c.h.b16 %v1560
    %v2745 = vunpack.c.l.b16 %v1561
    %v2746 = vunpack.c.h.b16 %v1561
    %v2747 = vunpack.c.l.b16 %v1562
    %v2748 = vunpack.c.h.b16 %v1562
    %v2749 = vunpack.c.l.b16 %v1563
    %v2750 = vunpack.c.h.b16 %v1563
    %v2751 = vunpack.c.l.b16 %v1564
    %v2752 = vunpack.c.h.b16 %v1564
    %v2753 = vunpack.c.l.b16 %v1565
    %v2754 = vunpack.c.h.b16 %v1565
    %v2755 = vunpack.c.l.b16 %v1566
    %v2756 = vunpack.c.h.b16 %v1566
    %v2757 = vunpack.c.l.b16 %v1567
    %v2758 = vunpack.c.h.b16 %v1567
    %v2759 = vunpack.c.l.b16 %v1568
    %v2760 = vunpack.c.h.b16 %v1568
    %v2761 = vunpack.c.l.b16 %v1569
    %v2762 = vunpack.c.h.b16 %v1569
    %v2763 = vunpack.c.l.b16 %v1570
    %v2764 = vunpack.c.h.b16 %v1570
    %v2765 = vunpack.c.l.b16 %v1571
    %v2766 = vunpack.c.h.b16 %v1571
    %v2767 = vunpack.c.l.b16 %v1572
    %v2768 = vunpack.c.h.b16 %v1572
    %v2769 = vunpack.c.l.b16 %v1573
    %v2770 = vunpack.c.h.b16 %v1573
    %v2771 = vunpack.c.l.b16 %v1574
    %v2772 = vunpack.c.h.b16 %v1574
    %v2773 = vunpack.c.l.b16 %v1575
    %v2774 = vunpack.c.h.b16 %v1575
    %v2775 = vunpack.c.l.b16 %v1576
    %v2776 = vunpack.c.h.b16 %v1576
    %v2777 = vunpack.c.l.b16 %v1577
    %v2778 = vunpack.c.h.b16 %v1577
    %v2779 = vunpack.c.l.b16 %v1578
    %v2780 = vunpack.c.h.b16 %v1578
    %v2781 = vunpack.c.l.b16 %v1579
    %v2782 = vunpack.c.h.b16 %v1579
    %v2783 = vunpack.c.l.b16 %v1580
    %v2784 = vunpack.c.h.b16 %v1580
    %v2785 = vunpack.c.l.b16 %v1581
    %v2786 = vunpack.c.h.b16 %v1581
    %v2787 = vunpack.c.l.b16 %v1582
    %v2788 = vunpack.c.h.b16 %v1582
    %v2789 = vunpack.c.l.b16 %v1583
    %v2790 = vunpack.c.h.b16 %v1583
    %v2791 = vunpack.c.l.b16 %v1584
    %v2792 = vunpack.c.h.b16 %v1584
    %v2793 = vunpack.c.l.b16 %v1585
    %v2794 = vunpack.c.h.b16 %v1585
    %v2795 = vunpack.c.l.b16 %v1586
    %v2796 = vunpack.c.h.b16 %v1586
    %v2797 = vunpack.c.l.b16 %v1587
    %v2798 = vunpack.c.h.b16 %v1587
    %v2799 = vunpack.c.l.b16 %v1588
    %v2800 = vunpack.c.h.b16 %v1588
    %v2801 = vunpack.c.l.b16 %v1589
    %v2802 = vunpack.c.h.b16 %v1589
    %v2803 = vunpack.c.l.b16 %v1590
    %v2804 = vunpack.c.h.b16 %v1590
    %v2805 = vunpack.c.l.b16 %v1591
    %v2806 = vunpack.c.h.b16 %v1591
    %v2807 = vunpack.c.l.b16 %v1592
    %v2808 = vunpack.c.h.b16 %v1592
    %v2809 = vunpack.c.l.b16 %v1593
    %v2810 = vunpack.c.h.b16 %v1593
    %v2811 = vunpack.c.l.b16 %v1594
    %v2812 = vunpack.c.h.b16 %v1594
    %v2813 = vunpack.c.l.b16 %v1595
    %v2814 = vunpack.c.h.b16 %v1595
    %v2815 = vunpack.c.l.b16 %v1596
    %v2816 = vunpack.c.h.b16 %v1596
    %v2817 = vunpack.c.l.b16 %v1597
    %v2818 = vunpack.c.h.b16 %v1597
    %v2819 = vunpack.c.l.b16 %v1598
    %v2820 = vunpack.c.h.b16 %v1598
    %v2821 = vunpack.c.l.b16 %v1599
    %v2822 = vunpack.c.h.b16 %v1599
    %v2823 = vunpack.c.l.b16 %v1600
    %v2824 = vunpack.c.h.b16 %v1600
    %v2825 = vunpack.c.l.b16 %v1601
    %v2826 = vunpack.c.h.b16 %v1601
    %v2827 = vunpack.c.l.b16 %v1602
    %v2828 = vunpack.c.h.b16 %v1602
    %v2829 = vunpack.c.l.b16 %v1603
    %v2830 = vunpack.c.h.b16 %v1603
    %v2831 = vunpack.c.l.b16 %v1604
    %v2832 = vunpack.c.h.b16 %v1604
    %v2833 = vunpack.c.l.b16 %v1605
    %v2834 = vunpack.c.h.b16 %v1605
    %v2835 = vunpack.c.l.b16 %v1606
    %v2836 = vunpack.c.h.b16 %v1606
    %v2837 = vunpack.c.l.b16 %v1607
    %v2838 = vunpack.c.h.b16 %v1607
    %v2839 = vunpack.c.l.b16 %v1608
    %v2840 = vunpack.c.h.b16 %v1608
    %v2841 = vunpack.c.l.b16 %v1609
    %v2842 = vunpack.c.h.b16 %v1609
    %v2843 = vunpack.c.l.b16 %v1610
    %v2844 = vunpack.c.h.b16 %v1610
    %v2845 = vunpack.c.l.b16 %v1611
    %v2846 = vunpack.c.h.b16 %v1611
    %v2847 = vunpack.c.l.b16 %v1612
    %v2848 = vunpack.c.h.b16 %v1612
    %v2849 = vunpack.c.l.b16 %v1613
    %v2850 = vunpack.c.h.b16 %v1613
    %v2851 = vunpack.c.l.b16 %v1614
    %v2852 = vunpack.c.h.b16 %v1614
    %v2853 = vunpack.c.l.b16 %v1615
    %v2854 = vunpack.c.h.b16 %v1615
    %v2855 = vunpack.c.l.b16 %v1616
    %v2856 = vunpack.c.h.b16 %v1616
    %v2857 = vunpack.c.l.b16 %v1617
    %v2858 = vunpack.c.h.b16 %v1617
    %v2859 = vunpack.c.l.b16 %v1618
    %v2860 = vunpack.c.h.b16 %v1618
    %v2861 = vunpack.c.l.b16 %v1619
    %v2862 = vunpack.c.h.b16 %v1619
    %v2863 = vunpack.c.l.b16 %v1620
    %v2864 = vunpack.c.h.b16 %v1620
    %v2865 = vunpack.c.l.b16 %v1621
    %v2866 = vunpack.c.h.b16 %v1621
    %v2867 = vunpack.c.l.b16 %v1622
    %v2868 = vunpack.c.h.b16 %v1622
    %v2869 = vunpack.c.l.b16 %v1623
    %v2870 = vunpack.c.h.b16 %v1623
    %v2871 = vunpack.c.l.b16 %v1624
    %v2872 = vunpack.c.h.b16 %v1624
    %v2873 = vunpack.c.l.b16 %v1625
    %v2874 = vunpack.c.h.b16 %v1625
    %v2875 = vunpack.c.l.b16 %v1626
    %v2876 = vunpack.c.h.b16 %v1626
    %v2877 = vunpack.c.l.b16 %v1627
    %v2878 = vunpack.c.h.b16 %v1627
    %v2879 = vunpack.c.l.b16 %v1628
    %v2880 = vunpack.c.h.b16 %v1628
    %v2881 = vunpack.c.l.b16 %v1629
    %v2882 = vunpack.c.h.b16 %v1629
    %v2883 = vunpack.c.l.b16 %v1630
    %v2884 = vunpack.c.h.b16 %v1630
    %v2885 = vunpack.c.l.b16 %v1631
    %v2886 = vunpack.c.h.b16 %v1631
    %v2887 = vunpack.c.l.b16 %v1632
    %v2888 = vunpack.c.h.b16 %v1632
    %v2889 = vunpack.c.l.b16 %v1633
    %v2890 = vunpack.c.h.b16 %v1633
    %v2891 = vunpack.c.l.b16 %v1634
    %v2892 = vunpack.c.h.b16 %v1634
    %v2893 = vunpack.c.l.b16 %v1635
    %v2894 = vunpack.c.h.b16 %v1635
    %v2895 = vunpack.c.l.b16 %v1636
    %v2896 = vunpack.c.h.b16 %v1636
    %v2897 = vunpack.c.l.b16 %v1637
    %v2898 = vunpack.c.h.b16 %v1637
    %v2899 = vunpack.c.l.b16 %v1638
    %v2900 = vunpack.c.h.b16 %v1638
    %v2901 = vunpack.c.l.b16 %v1639
    %v2902 = vunpack.c.h.b16 %v1639
    %v2903 = vunpack.c.l.b16 %v1640
    %v2904 = vunpack.c.h.b16 %v1640
    %v2905 = vunpack.c.l.b16 %v1641
    %v2906 = vunpack.c.h.b16 %v1641
    %v2907 = vunpack.c.l.b16 %v1642
    %v2908 = vunpack.c.h.b16 %v1642
    %v2909 = vunpack.c.l.b16 %v1643
    %v2910 = vunpack.c.h.b16 %v1643
    %v2911 = vunpack.c.l.b16 %v1644
    %v2912 = vunpack.c.h.b16 %v1644
    %v2913 = vunpack.c.l.b16 %v1645
    %v2914 = vunpack.c.h.b16 %v1645
    %v2915 = vunpack.c.l.b16 %v1646
    %v2916 = vunpack.c.h.b16 %v1646
    %v2917 = vunpack.c.l.b16 %v1647
    %v2918 = vunpack.c.h.b16 %v1647
    %v2919 = vunpack.c.l.b16 %v1648
    %v2920 = vunpack.c.h.b16 %v1648
    %v2921 = vunpack.c.l.b16 %v1649
    %v2922 = vunpack.c.h.b16 %v1649
    %v2923 = vunpack.c.l.b16 %v1650
    %v2924 = vunpack.c.h.b16 %v1650
    %v2925 = vunpack.c.l.b16 %v1651
    %v2926 = vunpack.c.h.b16 %v1651
    %v2927 = vunpack.c.l.b16 %v1652
    %v2928 = vunpack.c.h.b16 %v1652
    %v2929 = vunpack.c.l.b16 %v1653
    %v2930 = vunpack.c.h.b16 %v1653
    %v2931 = vunpack.c.l.b16 %v1654
    %v2932 = vunpack.c.h.b16 %v1654
    %v2933 = vunpack.c.l.b16 %v1655
    %v2934 = vunpack.c.h.b16 %v1655
    %v2935 = vunpack.c.l.b16 %v1656
    %v2936 = vunpack.c.h.b16 %v1656
    %v2937 = vunpack.c.l.b16 %v1657
    %v2938 = vunpack.c.h.b16 %v1657
    %v2939 = vunpack.c.l.b16 %v1658
    %v2940 = vunpack.c.h.b16 %v1658
    %v2941 = vunpack.c.l.b16 %v1659
    %v2942 = vunpack.c.h.b16 %v1659
    %v2943 = vunpack.c.l.b16 %v1660
    %v2944 = vunpack.c.h.b16 %v1660
    %v2945 = vunpack.c.l.b16 %v1661
    %v2946 = vunpack.c.h.b16 %v1661
    %v2947 = vunpack.c.l.b16 %v1662
    %v2948 = vunpack.c.h.b16 %v1662
    %v2949 = vunpack.c.l.b16 %v1663
    %v2950 = vunpack.c.h.b16 %v1663
    %v2951 = vunpack.c.l.b16 %v1664
    %v2952 = vunpack.c.h.b16 %v1664
    %v2953 = vunpack.c.l.b16 %v1665
    %v2954 = vunpack.c.h.b16 %v1665
    %v2955 = vunpack.c.l.b16 %v1666
    %v2956 = vunpack.c.h.b16 %v1666
    %v2957 = vunpack.c.l.b16 %v1667
    %v2958 = vunpack.c.h.b16 %v1667
    %v2959 = vunpack.c.l.b16 %v1668
    %v2960 = vunpack.c.h.b16 %v1668
    %v2961 = vunpack.c.l.b16 %v1669
    %v2962 = vunpack.c.h.b16 %v1669
    %v2963 = vunpack.c.l.b16 %v1670
    %v2964 = vunpack.c.h.b16 %v1670
    %v2965 = vunpack.c.l.b16 %v1671
    %v2966 = vunpack.c.h.b16 %v1671
    %v2967 = vunpack.c.l.b16 %v1672
    %v2968 = vunpack.c.h.b16 %v1672
    %v2969 = vunpack.c.l.b16 %v1673
    %v2970 = vunpack.c.h.b16 %v1673
    %v2971 = vunpack.c.l.b16 %v1674
    %v2972 = vunpack.c.h.b16 %v1674
    %v2973 = vunpack.c.l.b16 %v1675
    %v2974 = vunpack.c.h.b16 %v1675
    %v2975 = vunpack.c.l.b16 %v1676
    %v2976 = vunpack.c.h.b16 %v1676
    %v2977 = vunpack.c.l.b16 %v1677
    %v2978 = vunpack.c.h.b16 %v1677
    %v2979 = vunpack.c.l.b16 %v1678
    %v2980 = vunpack.c.h.b16 %v1678
    %v2981 = vunpack.c.l.b16 %v1679
    %v2982 = vunpack.c.h.b16 %v1679
    %v2983 = vunpack.c.l.b16 %v1680
    %v2984 = vunpack.c.h.b16 %v1680
    %v2985 = vunpack.c.l.b16 %v1681
    %v2986 = vunpack.c.h.b16 %v1681
    %v2987 = vunpack.c.l.b16 %v1682
    %v2988 = vunpack.c.h.b16 %v1682
    %v2989 = vunpack.c.l.b16 %v1683
    %v2990 = vunpack.c.h.b16 %v1683
    %v2991 = vunpack.c.l.b16 %v1684
    %v2992 = vunpack.c.h.b16 %v1684
    %v2993 = vunpack.c.l.b16 %v1685
    %v2994 = vunpack.c.h.b16 %v1685
    %v2995 = vunpack.c.l.b16 %v1686
    %v2996 = vunpack.c.h.b16 %v1686
    %v2997 = vunpack.c.l.b16 %v1687
    %v2998 = vunpack.c.h.b16 %v1687
    %v2999 = vunpack.c.l.b16 %v1688
    %v3000 = vunpack.c.h.b16 %v1688
    %v3001 = vunpack.c.l.b16 %v1689
    %v3002 = vunpack.c.h.b16 %v1689
    %v3003 = vunpack.c.l.b16 %v1690
    %v3004 = vunpack.c.h.b16 %v1690
    %v3005 = vunpack.c.l.b16 %v1691
    %v3006 = vunpack.c.h.b16 %v1691
    %v3007 = vunpack.c.l.b16 %v1692
    %v3008 = vunpack.c.h.b16 %v1692
    %v3009 = vunpack.c.l.b16 %v1693
    %v3010 = vunpack.c.h.b16 %v1693
    %v3011 = vunpack.c.l.b16 %v1694
    %v3012 = vunpack.c.h.b16 %v1694
    %v3013 = vunpack.c.l.b16 %v1695
    %v3014 = vunpack.c.h.b16 %v1695
    %v3015 = vunpack.c.l.b16 %v1696
    %v3016 = vunpack.c.h.b16 %v1696
    %v3017 = vunpack.c.l.b16 %v1697
    %v3018 = vunpack.c.h.b16 %v1697
    %v3019 = vunpack.c.l.b16 %v1698
    %v3020 = vunpack.c.h.b16 %v1698
    %v3021 = vunpack.c.l.b16 %v1699
    %v3022 = vunpack.c.h.b16 %v1699
    %v3023 = vunpack.c.l.b16 %v1700
    %v3024 = vunpack.c.h.b16 %v1700
    %v3025 = vunpack.c.l.b16 %v1701
    %v3026 = vunpack.c.h.b16 %v1701
    %v3027 = vunpack.c.l.b16 %v1702
    %v3028 = vunpack.c.h.b16 %v1702
    %v3029 = vunpack.c.l.b16 %v1703
    %v3030 = vunpack.c.h.b16 %v1703
    %v3031 = vunpack.c.l.b16 %v1704
    %v3032 = vunpack.c.h.b16 %v1704
    %v3033 = vunpack.c.l.b16 %v1705
    %v3034 = vunpack.c.h.b16 %v1705
    %v3035 = vunpack.c.l.b16 %v1706
    %v3036 = vunpack.c.h.b16 %v1706
    %v3037 = vunpack.c.l.b16 %v1707
    %v3038 = vunpack.c.h.b16 %v1707
    %v3039 = vunpack.c.l.b16 %v1708
    %v3040 = vunpack.c.h.b16 %v1708
    %v3041 = vunpack.c.l.b16 %v1709
    %v3042 = vunpack.c.h.b16 %v1709
    %v3043 = vunpack.c.l.b16 %v1710
    %v3044 = vunpack.c.h.b16 %v1710
    %v3045 = vunpack.c.l.b16 %v1711
    %v3046 = vunpack.c.h.b16 %v1711
    %v3047 = vunpack.c.l.b16 %v1712
    %v3048 = vunpack.c.h.b16 %v1712
    %v3049 = vunpack.c.l.b16 %v1713
    %v3050 = vunpack.c.h.b16 %v1713
    %v3051 = vunpack.c.l.b16 %v1714
    %v3052 = vunpack.c.h.b16 %v1714
    %v3053 = vunpack.c.l.b16 %v1715
    %v3054 = vunpack.c.h.b16 %v1715
    %v3055 = vunpack.c.l.b16 %v1716
    %v3056 = vunpack.c.h.b16 %v1716
    %v3057 = vunpack.c.l.b16 %v1717
    %v3058 = vunpack.c.h.b16 %v1717
    %v3059 = vunpack.c.l.b16 %v1718
    %v3060 = vunpack.c.h.b16 %v1718
    %v3061 = vunpack.c.l.b16 %v1719
    %v3062 = vunpack.c.h.b16 %v1719
    %v3063 = vunpack.c.l.b16 %v1720
    %v3064 = vunpack.c.h.b16 %v1720
    %v3065 = vunpack.c.l.b16 %v1721
    %v3066 = vunpack.c.h.b16 %v1721
    %v3067 = vunpack.c.l.b16 %v1722
    %v3068 = vunpack.c.h.b16 %v1722
    %v3069 = vunpack.c.l.b16 %v1723
    %v3070 = vunpack.c.h.b16 %v1723
    %v3071 = vunpack.c.l.b16 %v1724
    %v3072 = vunpack.c.h.b16 %v1724
    %v3073 = vunpack.c.l.b16 %v1725
    %v3074 = vunpack.c.h.b16 %v1725
    %v3075 = vunpack.c.l.b16 %v1726
    %v3076 = vunpack.c.h.b16 %v1726
    %v3077 = vunpack.c.l.b16 %v1727
    %v3078 = vunpack.c.h.b16 %v1727
    %v3079 = vunpack.c.l.b16 %v1728
    %v3080 = vunpack.c.h.b16 %v1728
    %v3081 = vunpack.c.l.b16 %v1729
    %v3082 = vunpack.c.h.b16 %v1729
    %v3083 = vunpack.c.l.b16 %v1730
    %v3084 = vunpack.c.h.b16 %v1730
    %v3085 = vunpack.c.l.b16 %v1731
    %v3086 = vunpack.c.h.b16 %v1731
    %v3087 = vunpack.c.l.b16 %v1732
    %v3088 = vunpack.c.h.b16 %v1732
    %v3089 = vunpack.c.l.b16 %v1733
    %v3090 = vunpack.c.h.b16 %v1733
    %v3091 = vunpack.c.l.b16 %v1734
    %v3092 = vunpack.c.h.b16 %v1734
    %v3093 = vunpack.c.l.b16 %v1735
    %v3094 = vunpack.c.h.b16 %v1735
    %v3095 = vunpack.c.l.b16 %v1736
    %v3096 = vunpack.c.h.b16 %v1736
    %v3097 = vunpack.c.l.b16 %v1737
    %v3098 = vunpack.c.h.b16 %v1737
    %v3099 = vunpack.c.l.b16 %v1738
    %v3100 = vunpack.c.h.b16 %v1738
    %v3101 = vunpack.c.l.b16 %v1739
    %v3102 = vunpack.c.h.b16 %v1739
    %v3103 = vunpack.c.l.b16 %v1740
    %v3104 = vunpack.c.h.b16 %v1740
    %v3105 = vunpack.c.l.b16 %v1741
    %v3106 = vunpack.c.h.b16 %v1741
    %v3107 = vunpack.c.l.b16 %v1742
    %v3108 = vunpack.c.h.b16 %v1742
    %v3109 = vunpack.c.l.b16 %v1743
    %v3110 = vunpack.c.h.b16 %v1743
    %v3111 = vunpack.c.l.b16 %v1744
    %v3112 = vunpack.c.h.b16 %v1744
    %v3113 = vunpack.c.l.b16 %v1745
    %v3114 = vunpack.c.h.b16 %v1745
    %v3115 = vunpack.c.l.b16 %v1746
    %v3116 = vunpack.c.h.b16 %v1746
    %v3117 = vunpack.c.l.b16 %v1747
    %v3118 = vunpack.c.h.b16 %v1747
    %v3119 = vunpack.c.l.b16 %v1748
    %v3120 = vunpack.c.h.b16 %v1748
    %v3121 = vunpack.c.l.b16 %v1749
    %v3122 = vunpack.c.h.b16 %v1749
    %v3123 = vunpack.c.l.b16 %v1750
    %v3124 = vunpack.c.h.b16 %v1750
    %v3125 = vunpack.c.l.b16 %v1751
    %v3126 = vunpack.c.h.b16 %v1751
    %v3127 = vunpack.c.l.b16 %v1752
    %v3128 = vunpack.c.h.b16 %v1752
    %v3129 = vunpack.c.l.b16 %v1753
    %v3130 = vunpack.c.h.b16 %v1753
    %v3131 = vunpack.c.l.b16 %v1754
    %v3132 = vunpack.c.h.b16 %v1754
    %v3133 = vunpack.c.l.b16 %v1755
    %v3134 = vunpack.c.h.b16 %v1755
    %v3135 = vunpack.c.l.b16 %v1756
    %v3136 = vunpack.c.h.b16 %v1756
    %v3137 = vunpack.c.l.b16 %v1757
    %v3138 = vunpack.c.h.b16 %v1757
    %v3139 = vunpack.c.l.b16 %v1758
    %v3140 = vunpack.c.h.b16 %v1758
    %v3141 = vunpack.c.l.b16 %v1759
    %v3142 = vunpack.c.h.b16 %v1759
    %v3143 = vunpack.c.l.b16 %v1760
    %v3144 = vunpack.c.h.b16 %v1760
    %v3145 = vunpack.c.l.b16 %v1761
    %v3146 = vunpack.c.h.b16 %v1761
    %v3147 = vunpack.c.l.b16 %v1762
    %v3148 = vunpack.c.h.b16 %v1762
    %v3149 = vunpack.c.l.b16 %v1763
    %v3150 = vunpack.c.h.b16 %v1763
    %v3151 = vunpack.c.l.b16 %v1764
    %v3152 = vunpack.c.h.b16 %v1764
    %v3153 = vunpack.c.l.b16 %v1765
    %v3154 = vunpack.c.h.b16 %v1765
    %v3155 = vunpack.c.l.b16 %v1766
    %v3156 = vunpack.c.h.b16 %v1766
    %v3157 = vunpack.c.l.b16 %v1767
    %v3158 = vunpack.c.h.b16 %v1767
    %v3159 = vunpack.c.l.b16 %v1768
    %v3160 = vunpack.c.h.b16 %v1768
    %v3161 = vunpack.c.l.b16 %v1769
    %v3162 = vunpack.c.h.b16 %v1769
    %v3163 = vunpack.c.l.b16 %v1770
    %v3164 = vunpack.c.h.b16 %v1770
    %v3165 = vunpack.c.l.b16 %v1771
    %v3166 = vunpack.c.h.b16 %v1771
    %v3167 = vunpack.c.l.b16 %v1772
    %v3168 = vunpack.c.h.b16 %v1772
    %v3169 = vunpack.c.l.b16 %v1773
    %v3170 = vunpack.c.h.b16 %v1773
    %v3171 = vunpack.c.l.b16 %v1774
    %v3172 = vunpack.c.h.b16 %v1774
    %v3173 = vunpack.c.l.b16 %v1775
    %v3174 = vunpack.c.h.b16 %v1775
    %v3175 = vunpack.c.l.b16 %v1776
    %v3176 = vunpack.c.h.b16 %v1776
    %v3177 = vunpack.c.l.b16 %v1777
    %v3178 = vunpack.c.h.b16 %v1777
    %v3179 = vunpack.c.l.b16 %v1778
    %v3180 = vunpack.c.h.b16 %v1778
    %v3181 = vunpack.c.l.b16 %v1779
    %v3182 = vunpack.c.h.b16 %v1779
    %v3183 = vunpack.c.l.b16 %v1780
    %v3184 = vunpack.c.h.b16 %v1780
    %v3185 = vunpack.c.l.b16 %v1781
    %v3186 = vunpack.c.h.b16 %v1781
    %v3187 = vunpack.c.l.b16 %v1782
    %v3188 = vunpack.c.h.b16 %v1782
    %v3189 = vunpack.c.l.b16 %v1783
    %v3190 = vunpack.c.h.b16 %v1783
    %v3191 = vunpack.c.l.b16 %v1784
    %v3192 = vunpack.c.h.b16 %v1784
    %v3193 = vunpack.c.l.b16 %v1785
    %v3194 = vunpack.c.h.b16 %v1785
    %v3195 = vunpack.c.l.b16 %v1786
    %v3196 = vunpack.c.h.b16 %v1786
    %v3197 = vunpack.c.l.b16 %v1787
    %v3198 = vunpack.c.h.b16 %v1787
    %v3199 = vunpack.c.l.b16 %v1788
    %v3200 = vunpack.c.h.b16 %v1788
    %v3201 = vunpack.c.l.b16 %v1789
    %v3202 = vunpack.c.h.b16 %v1789
    %v3203 = vunpack.c.l.b16 %v1790
    %v3204 = vunpack.c.h.b16 %v1790
    %v3205 = vunpack.c.l.b16 %v1791
    %v3206 = vunpack.c.h.b16 %v1791
    %v3207 = vunpack.c.l.b16 %v1792
    %v3208 = vunpack.c.h.b16 %v1792
    %v3209 = vunpack.c.l.b16 %v1793
    %v3210 = vunpack.c.h.b16 %v1793
    %v3211 = vunpack.c.l.b16 %v1794
    %v3212 = vunpack.c.h.b16 %v1794
    %v3213 = vunpack.c.l.b16 %v1795
    %v3214 = vunpack.c.h.b16 %v1795
    %v3215 = vunpack.c.l.b16 %v1796
    %v3216 = vunpack.c.h.b16 %v1796
    %v3217 = vunpack.c.l.b16 %v1797
    %v3218 = vunpack.c.h.b16 %v1797
    %v3219 = vunpack.c.l.b16 %v1798
    %v3220 = vunpack.c.h.b16 %v1798
    %v3221 = vunpack.c.l.b16 %v1799
    %v3222 = vunpack.c.h.b16 %v1799
    %v3223 = vunpack.c.l.b16 %v1800
    %v3224 = vunpack.c.h.b16 %v1800
    %v3225 = vunpack.c.l.b16 %v1801
    %v3226 = vunpack.c.h.b16 %v1801
    %v3227 = vunpack.c.l.b16 %v1802
    %v3228 = vunpack.c.h.b16 %v1802
    %v3229 = vunpack.c.l.b16 %v1803
    %v3230 = vunpack.c.h.b16 %v1803
    %v3231 = vunpack.c.l.b16 %v1804
    %v3232 = vunpack.c.h.b16 %v1804
    %v3233 = vunpack.c.l.b16 %v1805
    %v3234 = vunpack.c.h.b16 %v1805
    %v3235 = vunpack.c.l.b16 %v1806
    %v3236 = vunpack.c.h.b16 %v1806
    %v3237 = vunpack.c.l.b16 %v1807
    %v3238 = vunpack.c.h.b16 %v1807
    %v3239 = vunpack.c.l.b16 %v1808
    %v3240 = vunpack.c.h.b16 %v1808
    %v3241 = vunpack.c.l.b16 %v1809
    %v3242 = vunpack.c.h.b16 %v1809
    %v3243 = vunpack.c.l.b16 %v1810
    %v3244 = vunpack.c.h.b16 %v1810
    %v3245 = vunpack.c.l.b16 %v1811
    %v3246 = vunpack.c.h.b16 %v1811
    %v3247 = vunpack.c.l.b16 %v1812
    %v3248 = vunpack.c.h.b16 %v1812
    %v3249 = vunpack.c.l.b16 %v1813
    %v3250 = vunpack.c.h.b16 %v1813
    %v3251 = vunpack.c.l.b16 %v1814
    %v3252 = vunpack.c.h.b16 %v1814
    %v3253 = vunpack.c.l.b16 %v1815
    %v3254 = vunpack.c.h.b16 %v1815
    %v3255 = vunpack.c.l.b16 %v1816
    %v3256 = vunpack.c.h.b16 %v1816
    %v3257 = vpack.c.b16 %v2305, %v2297
    %v3258 = vpack.c.b16 %v2306, %v2298
    %v3259 = vpack.c.b16 %v2307, %v2299
    %v3260 = vpack.c.b16 %v2308, %v2300
    %v3261 = vpack.c.b16 %v2309, %v2301
    %v3262 = vpack.c.b16 %v2310, %v2302
    %v3263 = vpack.c.b16 %v2311, %v2303
    %v3264 = vpack.c.b16 %v2312, %v2304
    %v3265 = vpack.c.b16 %v2321, %v2313
    %v3266 = vpack.c.b16 %v2322, %v2314
    %v3267 = vpack.c.b16 %v2323, %v2315
    %v3268 = vpack.c.b16 %v2324, %v2316
    %v3269 = vpack.c.b16 %v2325, %v2317
    %v3270 = vpack.c.b16 %v2326, %v2318
    %v3271 = vpack.c.b16 %v2327, %v2319
    %v3272 = vpack.c.b16 %v2328, %v2320
    %v3273 = vpack.c.b16 %v2337, %v2329
    %v3274 = vpack.c.b16 %v2338, %v2330
    %v3275 = vpack.c.b16 %v2339, %v2331
    %v3276 = vpack.c.b16 %v2340, %v2332
    %v3277 = vpack.c.b16 %v2341, %v2333
    %v3278 = vpack.c.b16 %v2342, %v2334
    %v3279 = vpack.c.b16 %v2343, %v2335
    %v3280 = vpack.c.b16 %v2344, %v2336
    %v3281 = vpack.c.b16 %v2353, %v2345
    %v3282 = vpack.c.b16 %v2354, %v2346
    %v3283 = vpack.c.b16 %v2355, %v2347
    %v3284 = vpack.c.b16 %v2356, %v2348
    %v3285 = vpack.c.b16 %v2357, %v2349
    %v3286 = vpack.c.b16 %v2358, %v2350
    %v3287 = vpack.c.b16 %v2359, %v2351
    %v3288 = vpack.c.b16 %v2360, %v2352
    %v3289 = vpack.c.b16 %v2369, %v2361
    %v3290 = vpack.c.b16 %v2370, %v2362
    %v3291 = vpack.c.b16 %v2371, %v2363
    %v3292 = vpack.c.b16 %v2372, %v2364
    %v3293 = vpack.c.b16 %v2373, %v2365
    %v3294 = vpack.c.b16 %v2374, %v2366
    %v3295 = vpack.c.b16 %v2375, %v2367
    %v3296 = vpack.c.b16 %v2376, %v2368
    %v3297 = vpack.c.b16 %v2385, %v2377
    %v3298 = vpack.c.b16 %v2386, %v2378
    %v3299 = vpack.c.b16 %v2387, %v2379
    %v3300 = vpack.c.b16 %v2388, %v2380
    %v3301 = vpack.c.b16 %v2389, %v2381
    %v3302 = vpack.c.b16 %v2390, %v2382
    %v3303 = vpack.c.b16 %v2391, %v2383
    %v3304 = vpack.c.b16 %v2392, %v2384
    %v3305 = vpack.c.b16 %v2401, %v2393
    %v3306 = vpack.c.b16 %v2402, %v2394
    %v3307 = vpack.c.b16 %v2403, %v2395
    %v3308 = vpack.c.b16 %v2404, %v2396
    %v3309 = vpack.c.b16 %v2405, %v2397
    %v3310 = vpack.c.b16 %v2406, %v2398
    %v3311 = vpack.c.b16 %v2407, %v2399
    %v3312 = vpack.c.b16 %v2408, %v2400
    %v3313 = vpack.c.b16 %v2417, %v2409
    %v3314 = vpack.c.b16 %v2418, %v2410
    %v3315 = vpack.c.b16 %v2419, %v2411
    %v3316 = vpack.c.b16 %v2420, %v2412
    %v3317 = vpack.c.b16 %v2421, %v2413
    %v3318 = vpack.c.b16 %v2422, %v2414
    %v3319 = vpack.c.b16 %v2423, %v2415
    %v3320 = vpack.c.b16 %v2424, %v2416
    %v3321 = vpack.c.b16 %v2433, %v2425
    %v3322 = vpack.c.b16 %v2434, %v2426
    %v3323 = vpack.c.b16 %v2435, %v2427
    %v3324 = vpack.c.b16 %v2436, %v2428
    %v3325 = vpack.c.b16 %v2437, %v2429
    %v3326 = vpack.c.b16 %v2438, %v2430
    %v3327 = vpack.c.b16 %v2439, %v2431
    %v3328 = vpack.c.b16 %v2440, %v2432
    %v3329 = vpack.c.b16 %v2449, %v2441
    %v3330 = vpack.c.b16 %v2450, %v2442
    %v3331 = vpack.c.b16 %v2451, %v2443
    %v3332 = vpack.c.b16 %v2452, %v2444
    %v3333 = vpack.c.b16 %v2453, %v2445
    %v3334 = vpack.c.b16 %v2454, %v2446
    %v3335 = vpack.c.b16 %v2455, %v2447
    %v3336 = vpack.c.b16 %v2456, %v2448
    %v3337 = vpack.c.b16 %v2465, %v2457
    %v3338 = vpack.c.b16 %v2466, %v2458
    %v3339 = vpack.c.b16 %v2467, %v2459
    %v3340 = vpack.c.b16 %v2468, %v2460
    %v3341 = vpack.c.b16 %v2469, %v2461
    %v3342 = vpack.c.b16 %v2470, %v2462
    %v3343 = vpack.c.b16 %v2471, %v2463
    %v3344 = vpack.c.b16 %v2472, %v2464
    %v3345 = vpack.c.b16 %v2481, %v2473
    %v3346 = vpack.c.b16 %v2482, %v2474
    %v3347 = vpack.c.b16 %v2483, %v2475
    %v3348 = vpack.c.b16 %v2484, %v2476
    %v3349 = vpack.c.b16 %v2485, %v2477
    %v3350 = vpack.c.b16 %v2486, %v2478
    %v3351 = vpack.c.b16 %v2487, %v2479
    %v3352 = vpack.c.b16 %v2488, %v2480
    %v3353 = vpack.c.b16 %v2497, %v2489
    %v3354 = vpack.c.b16 %v2498, %v2490
    %v3355 = vpack.c.b16 %v2499, %v2491
    %v3356 = vpack.c.b16 %v2500, %v2492
    %v3357 = vpack.c.b16 %v2501, %v2493
    %v3358 = vpack.c.b16 %v2502, %v2494
    %v3359 = vpack.c.b16 %v2503, %v2495
    %v3360 = vpack.c.b16 %v2504, %v2496
    %v3361 = vpack.c.b16 %v2513, %v2505
    %v3362 = vpack.c.b16 %v2514, %v2506
    %v3363 = vpack.c.b16 %v2515, %v2507
    %v3364 = vpack.c.b16 %v2516, %v2508
    %v3365 = vpack.c.b16 %v2517, %v2509
    %v3366 = vpack.c.b16 %v2518, %v2510
    %v3367 = vpack.c.b16 %v2519, %v2511
    %v3368 = vpack.c.b16 %v2520, %v2512
    %v3369 = vpack.c.b16 %v2529, %v2521
    %v3370 = vpack.c.b16 %v2530, %v2522
    %v3371 = vpack.c.b16 %v2531, %v2523
    %v3372 = vpack.c.b16 %v2532, %v2524
    %v3373 = vpack.c.b16 %v2533, %v2525
    %v3374 = vpack.c.b16 %v2534, %v2526
    %v3375 = vpack.c.b16 %v2535, %v2527
    %v3376 = vpack.c.b16 %v2536, %v2528
    %v3377 = vpack.c.b16 %v2545, %v2537
    %v3378 = vpack.c.b16 %v2546, %v2538
    %v3379 = vpack.c.b16 %v2547, %v2539
    %v3380 = vpack.c.b16 %v2548, %v2540
    %v3381 = vpack.c.b16 %v2549, %v2541
    %v3382 = vpack.c.b16 %v2550, %v2542
    %v3383 = vpack.c.b16 %v2551, %v2543
    %v3384 = vpack.c.b16 %v2552, %v2544
    %v3385 = vpack.c.b16 %v2561, %v2553
    %v3386 = vpack.c.b16 %v2562, %v2554
    %v3387 = vpack.c.b16 %v2563, %v2555
    %v3388 = vpack.c.b16 %v2564, %v2556
    %v3389 = vpack.c.b16 %v2565, %v2557
    %v3390 = vpack.c.b16 %v2566, %v2558
    %v3391 = vpack.c.b16 %v2567, %v2559
    %v3392 = vpack.c.b16 %v2568, %v2560
    %v3393 = vpack.c.b16 %v2577, %v2569
    %v3394 = vpack.c.b16 %v2578, %v2570
    %v3395 = vpack.c.b16 %v2579, %v2571
    %v3396 = vpack.c.b16 %v2580, %v2572
    %v3397 = vpack.c.b16 %v2581, %v2573
    %v3398 = vpack.c.b16 %v2582, %v2574
    %v3399 = vpack.c.b16 %v2583, %v2575
    %v3400 = vpack.c.b16 %v2584, %v2576
    %v3401 = vpack.c.b16 %v2593, %v2585
    %v3402 = vpack.c.b16 %v2594, %v2586
    %v3403 = vpack.c.b16 %v2595, %v2587
    %v3404 = vpack.c.b16 %v2596, %v2588
    %v3405 = vpack.c.b16 %v2597, %v2589
    %v3406 = vpack.c.b16 %v2598, %v2590
    %v3407 = vpack.c.b16 %v2599, %v2591
    %v3408 = vpack.c.b16 %v2600, %v2592
    %v3409 = vpack.c.b16 %v2609, %v2601
    %v3410 = vpack.c.b16 %v2610, %v2602
    %v3411 = vpack.c.b16 %v2611, %v2603
    %v3412 = vpack.c.b16 %v2612, %v2604
    %v3413 = vpack.c.b16 %v2613, %v2605
    %v3414 = vpack.c.b16 %v2614, %v2606
    %v3415 = vpack.c.b16 %v2615, %v2607
    %v3416 = vpack.c.b16 %v2616, %v2608
    %v3417 = vpack.c.b16 %v2625, %v2617
    %v3418 = vpack.c.b16 %v2626, %v2618
    %v3419 = vpack.c.b16 %v2627, %v2619
    %v3420 = vpack.c.b16 %v2628, %v2620
    %v3421 = vpack.c.b16 %v2629, %v2621
    %v3422 = vpack.c.b16 %v2630, %v2622
    %v3423 = vpack.c.b16 %v2631, %v2623
    %v3424 = vpack.c.b16 %v2632, %v2624
    %v3425 = vpack.c.b16 %v2641, %v2633
    %v3426 = vpack.c.b16 %v2642, %v2634
    %v3427 = vpack.c.b16 %v2643, %v2635
    %v3428 = vpack.c.b16 %v2644, %v2636
    %v3429 = vpack.c.b16 %v2645, %v2637
    %v3430 = vpack.c.b16 %v2646, %v2638
    %v3431 = vpack.c.b16 %v2647, %v2639
    %v3432 = vpack.c.b16 %v2648, %v2640
    %v3433 = vpack.c.b16 %v2657, %v2649
    %v3434 = vpack.c.b16 %v2658, %v2650
    %v3435 = vpack.c.b16 %v2659, %v2651
    %v3436 = vpack.c.b16 %v2660, %v2652
    %v3437 = vpack.c.b16 %v2661, %v2653
    %v3438 = vpack.c.b16 %v2662, %v2654
    %v3439 = vpack.c.b16 %v2663, %v2655
    %v3440 = vpack.c.b16 %v2664, %v2656
    %v3441 = vpack.c.b16 %v2673, %v2665
    %v3442 = vpack.c.b16 %v2674, %v2666
    %v3443 = vpack.c.b16 %v2675, %v2667
    %v3444 = vpack.c.b16 %v2676, %v2668
    %v3445 = vpack.c.b16 %v2677, %v2669
    %v3446 = vpack.c.b16 %v2678, %v2670
    %v3447 = vpack.c.b16 %v2679, %v2671
    %v3448 = vpack.c.b16 %v2680, %v2672
    %v3449 = vpack.c.b16 %v2689, %v2681
    %v3450 = vpack.c.b16 %v2690, %v2682
    %v3451 = vpack.c.b16 %v2691, %v2683
    %v3452 = vpack.c.b16 %v2692, %v2684
    %v3453 = vpack.c.b16 %v2693, %v2685
    %v3454 = vpack.c.b16 %v2694, %v2686
    %v3455 = vpack.c.b16 %v2695, %v2687
    %v3456 = vpack.c.b16 %v2696, %v2688
    %v3457 = vpack.c.b16 %v2705, %v2697
    %v3458 = vpack.c.b16 %v2706, %v2698
    %v3459 = vpack.c.b16 %v2707, %v2699
    %v3460 = vpack.c.b16 %v2708, %v2700
    %v3461 = vpack.c.b16 %v2709, %v2701
    %v3462 = vpack.c.b16 %v2710, %v2702
    %v3463 = vpack.c.b16 %v2711, %v2703
    %v3464 = vpack.c.b16 %v2712, %v2704
    %v3465 = vpack.c.b16 %v2721, %v2713
    %v3466 = vpack.c.b16 %v2722, %v2714
    %v3467 = vpack.c.b16 %v2723, %v2715
    %v3468 = vpack.c.b16 %v2724, %v2716
    %v3469 = vpack.c.b16 %v2725, %v2717
    %v3470 = vpack.c.b16 %v2726, %v2718
    %v3471 = vpack.c.b16 %v2727, %v2719
    %v3472 = vpack.c.b16 %v2728, %v2720
    %v3473 = vpack.c.b16 %v2737, %v2729
    %v3474 = vpack.c.b16 %v2738, %v2730
    %v3475 = vpack.c.b16 %v2739, %v2731
    %v3476 = vpack.c.b16 %v2740, %v2732
    %v3477 = vpack.c.b16 %v2741, %v2733
    %v3478 = vpack.c.b16 %v2742, %v2734
    %v3479 = vpack.c.b16 %v2743, %v2735
    %v3480 = vpack.c.b16 %v2744, %v2736
    %v3481 = vpack.c.b16 %v2753, %v2745
    %v3482 = vpack.c.b16 %v2754, %v2746
    %v3483 = vpack.c.b16 %v2755, %v2747
    %v3484 = vpack.c.b16 %v2756, %v2748
    %v3485 = vpack.c.b16 %v2757, %v2749
    %v3486 = vpack.c.b16 %v2758, %v2750
    %v3487 = vpack.c.b16 %v2759, %v2751
    %v3488 = vpack.c.b16 %v2760, %v2752
    %v3489 = vpack.c.b16 %v2769, %v2761
    %v3490 = vpack.c.b16 %v2770, %v2762
    %v3491 = vpack.c.b16 %v2771, %v2763
    %v3492 = vpack.c.b16 %v2772, %v2764
    %v3493 = vpack.c.b16 %v2773, %v2765
    %v3494 = vpack.c.b16 %v2774, %v2766
    %v3495 = vpack.c.b16 %v2775, %v2767
    %v3496 = vpack.c.b16 %v2776, %v2768
    %v3497 = vpack.c.b16 %v2785, %v2777
    %v3498 = vpack.c.b16 %v2786, %v2778
    %v3499 = vpack.c.b16 %v2787, %v2779
    %v3500 = vpack.c.b16 %v2788, %v2780
    %v3501 = vpack.c.b16 %v2789, %v2781
    %v3502 = vpack.c.b16 %v2790, %v2782
    %v3503 = vpack.c.b16 %v2791, %v2783
    %v3504 = vpack.c.b16 %v2792, %v2784
    %v3505 = vpack.c.b16 %v2801, %v2793
    %v3506 = vpack.c.b16 %v2802, %v2794
    %v3507 = vpack.c.b16 %v2803, %v2795
    %v3508 = vpack.c.b16 %v2804, %v2796
    %v3509 = vpack.c.b16 %v2805, %v2797
    %v3510 = vpack.c.b16 %v2806, %v2798
    %v3511 = vpack.c.b16 %v2807, %v2799
    %v3512 = vpack.c.b16 %v2808, %v2800
    %v3513 = vpack.c.b16 %v2817, %v2809
    %v3514 = vpack.c.b16 %v2818, %v2810
    %v3515 = vpack.c.b16 %v2819, %v2811
    %v3516 = vpack.c.b16 %v2820, %v2812
    %v3517 = vpack.c.b16 %v2821, %v2813
    %v3518 = vpack.c.b16 %v2822, %v2814
    %v3519 = vpack.c.b16 %v2823, %v2815
    %v3520 = vpack.c.b16 %v2824, %v2816
    %v3521 = vpack.c.b16 %v2833, %v2825
    %v3522 = vpack.c.b16 %v2834, %v2826
    %v3523 = vpack.c.b16 %v2835, %v2827
    %v3524 = vpack.c.b16 %v2836, %v2828
    %v3525 = vpack.c.b16 %v2837, %v2829
    %v3526 = vpack.c.b16 %v2838, %v2830
    %v3527 = vpack.c.b16 %v2839, %v2831
    %v3528 = vpack.c.b16 %v2840, %v2832
    %v3529 = vpack.c.b16 %v2849, %v2841
    %v3530 = vpack.c.b16 %v2850, %v2842
    %v3531 = vpack.c.b16 %v2851, %v2843
    %v3532 = vpack.c.b16 %v2852, %v2844
    %v3533 = vpack.c.b16 %v2853, %v2845
    %v3534 = vpack.c.b16 %v2854, %v2846
    %v3535 = vpack.c.b16 %v2855, %v2847
    %v3536 = vpack.c.b16 %v2856, %v2848
    %v3537 = vpack.c.b16 %v2865, %v2857
    %v3538 = vpack.c.b16 %v2866, %v2858
    %v3539 = vpack.c.b16 %v2867, %v2859
    %v3540 = vpack.c.b16 %v2868, %v2860
    %v3541 = vpack.c.b16 %v2869, %v2861
    %v3542 = vpack.c.b16 %v2870, %v2862
    %v3543 = vpack.c.b16 %v2871, %v2863
    %v3544 = vpack.c.b16 %v2872, %v2864
    %v3545 = vpack.c.b16 %v2881, %v2873
    %v3546 = vpack.c.b16 %v2882, %v2874
    %v3547 = vpack.c.b16 %v2883, %v2875
    %v3548 = vpack.c.b16 %v2884, %v2876
    %v3549 = vpack.c.b16 %v2885, %v2877
    %v3550 = vpack.c.b16 %v2886, %v2878
    %v3551 = vpack.c.b16 %v2887, %v2879
    %v3552 = vpack.c.b16 %v2888, %v2880
    %v3553 = vpack.c.b16 %v2897, %v2889
    %v3554 = vpack.c.b16 %v2898, %v2890
    %v3555 = vpack.c.b16 %v2899, %v2891
    %v3556 = vpack.c.b16 %v2900, %v2892
    %v3557 = vpack.c.b16 %v2901, %v2893
    %v3558 = vpack.c.b16 %v2902, %v2894
    %v3559 = vpack.c.b16 %v2903, %v2895
    %v3560 = vpack.c.b16 %v2904, %v2896
    %v3561 = vpack.c.b16 %v2913, %v2905
    %v3562 = vpack.c.b16 %v2914, %v2906
    %v3563 = vpack.c.b16 %v2915, %v2907
    %v3564 = vpack.c.b16 %v2916, %v2908
    %v3565 = vpack.c.b16 %v2917, %v2909
    %v3566 = vpack.c.b16 %v2918, %v2910
    %v3567 = vpack.c.b16 %v2919, %v2911
    %v3568 = vpack.c.b16 %v2920, %v2912
    %v3569 = vpack.c.b16 %v2929, %v2921
    %v3570 = vpack.c.b16 %v2930, %v2922
    %v3571 = vpack.c.b16 %v2931, %v2923
    %v3572 = vpack.c.b16 %v2932, %v2924
    %v3573 = vpack.c.b16 %v2933, %v2925
    %v3574 = vpack.c.b16 %v2934, %v2926
    %v3575 = vpack.c.b16 %v2935, %v2927
    %v3576 = vpack.c.b16 %v2936, %v2928
    %v3577 = vpack.c.b16 %v2945, %v2937
    %v3578 = vpack.c.b16 %v2946, %v2938
    %v3579 = vpack.c.b16 %v2947, %v2939
    %v3580 = vpack.c.b16 %v2948, %v2940
    %v3581 = vpack.c.b16 %v2949, %v2941
    %v3582 = vpack.c.b16 %v2950, %v2942
    %v3583 = vpack.c.b16 %v2951, %v2943
    %v3584 = vpack.c.b16 %v2952, %v2944
    %v3585 = vpack.c.b16 %v2961, %v2953
    %v3586 = vpack.c.b16 %v2962, %v2954
    %v3587 = vpack.c.b16 %v2963, %v2955
    %v3588 = vpack.c.b16 %v2964, %v2956
    %v3589 = vpack.c.b16 %v2965, %v2957
    %v3590 = vpack.c.b16 %v2966, %v2958
    %v3591 = vpack.c.b16 %v2967, %v2959
    %v3592 = vpack.c.b16 %v2968, %v2960
    %v3593 = vpack.c.b16 %v2977, %v2969
    %v3594 = vpack.c.b16 %v2978, %v2970
    %v3595 = vpack.c.b16 %v2979, %v2971
    %v3596 = vpack.c.b16 %v2980, %v2972
    %v3597 = vpack.c.b16 %v2981, %v2973
    %v3598 = vpack.c.b16 %v2982, %v2974
    %v3599 = vpack.c.b16 %v2983, %v2975
    %v3600 = vpack.c.b16 %v2984, %v2976
    %v3601 = vpack.c.b16 %v2993, %v2985
    %v3602 = vpack.c.b16 %v2994, %v2986
    %v3603 = vpack.c.b16 %v2995, %v2987
    %v3604 = vpack.c.b16 %v2996, %v2988
    %v3605 = vpack.c.b16 %v2997, %v2989
    %v3606 = vpack.c.b16 %v2998, %v2990
    %v3607 = vpack.c.b16 %v2999, %v2991
    %v3608 = vpack.c.b16 %v3000, %v2992
    %v3609 = vpack.c.b16 %v3009, %v3001
    %v3610 = vpack.c.b16 %v3010, %v3002
    %v3611 = vpack.c.b16 %v3011, %v3003
    %v3612 = vpack.c.b16 %v3012, %v3004
    %v3613 = vpack.c.b16 %v3013, %v3005
    %v3614 = vpack.c.b16 %v3014, %v3006
    %v3615 = vpack.c.b16 %v3015, %v3007
    %v3616 = vpack.c.b16 %v3016, %v3008
    %v3617 = vpack.c.b16 %v3025, %v3017
    %v3618 = vpack.c.b16 %v3026, %v3018
    %v3619 = vpack.c.b16 %v3027, %v3019
    %v3620 = vpack.c.b16 %v3028, %v3020
    %v3621 = vpack.c.b16 %v3029, %v3021
    %v3622 = vpack.c.b16 %v3030, %v3022
    %v3623 = vpack.c.b16 %v3031, %v3023
    %v3624 = vpack.c.b16 %v3032, %v3024
    %v3625 = vpack.c.b16 %v3041, %v3033
    %v3626 = vpack.c.b16 %v3042, %v3034
    %v3627 = vpack.c.b16 %v3043, %v3035
    %v3628 = vpack.c.b16 %v3044, %v3036
    %v3629 = vpack.c.b16 %v3045, %v3037
    %v3630 = vpack.c.b16 %v3046, %v3038
    %v3631 = vpack.c.b16 %v3047, %v3039
    %v3632 = vpack.c.b16 %v3048, %v3040
    %v3633 = vpack.c.b16 %v3057, %v3049
    %v3634 = vpack.c.b16 %v3058, %v3050
    %v3635 = vpack.c.b16 %v3059, %v3051
    %v3636 = vpack.c.b16 %v3060, %v3052
    %v3637 = vpack.c.b16 %v3061, %v3053
    %v3638 = vpack.c.b16 %v3062, %v3054
    %v3639 = vpack.c.b16 %v3063, %v3055
    %v3640 = vpack.c.b16 %v3064, %v3056
    %v3641 = vpack.c.b16 %v3073, %v3065
    %v3642 = vpack.c.b16 %v3074, %v3066
    %v3643 = vpack.c.b16 %v3075, %v3067
    %v3644 = vpack.c.b16 %v3076, %v3068
    %v3645 = vpack.c.b16 %v3077, %v3069
    %v3646 = vpack.c.b16 %v3078, %v3070
    %v3647 = vpack.c.b16 %v3079, %v3071
    %v3648 = vpack.c.b16 %v3080, %v3072
    %v3649 = vpack.c.b16 %v3089, %v3081
    %v3650 = vpack.c.b16 %v3090, %v3082
    %v3651 = vpack.c.b16 %v3091, %v3083
    %v3652 = vpack.c.b16 %v3092, %v3084
    %v3653 = vpack.c.b16 %v3093, %v3085
    %v3654 = vpack.c.b16 %v3094, %v3086
    %v3655 = vpack.c.b16 %v3095, %v3087
    %v3656 = vpack.c.b16 %v3096, %v3088
    %v3657 = vpack.c.b16 %v3105, %v3097
    %v3658 = vpack.c.b16 %v3106, %v3098
    %v3659 = vpack.c.b16 %v3107, %v3099
    %v3660 = vpack.c.b16 %v3108, %v3100
    %v3661 = vpack.c.b16 %v3109, %v3101
    %v3662 = vpack.c.b16 %v3110, %v3102
    %v3663 = vpack.c.b16 %v3111, %v3103
    %v3664 = vpack.c.b16 %v3112, %v3104
    %v3665 = vpack.c.b16 %v3121, %v3113
    %v3666 = vpack.c.b16 %v3122, %v3114
    %v3667 = vpack.c.b16 %v3123, %v3115
    %v3668 = vpack.c.b16 %v3124, %v3116
    %v3669 = vpack.c.b16 %v3125, %v3117
    %v3670 = vpack.c.b16 %v3126, %v3118
    %v3671 = vpack.c.b16 %v3127, %v3119
    %v3672 = vpack.c.b16 %v3128, %v3120
    %v3673 = vpack.c.b16 %v3137, %v3129
    %v3674 = vpack.c.b16 %v3138, %v3130
    %v3675 = vpack.c.b16 %v3139, %v3131
    %v3676 = vpack.c.b16 %v3140, %v3132
    %v3677 = vpack.c.b16 %v3141, %v3133
    %v3678 = vpack.c.b16 %v3142, %v3134
    %v3679 = vpack.c.b16 %v3143, %v3135
    %v3680 = vpack.c.b16 %v3144, %v3136
    %v3681 = vpack.c.b16 %v3153, %v3145
    %v3682 = vpack.c.b16 %v3154, %v3146
    %v3683 = vpack.c.b16 %v3155, %v3147
    %v3684 = vpack.c.b16 %v3156, %v3148
    %v3685 = vpack.c.b16 %v3157, %v3149
    %v3686 = vpack.c.b16 %v3158, %v3150
    %v3687 = vpack.c.b16 %v3159, %v3151
    %v3688 = vpack.c.b16 %v3160, %v3152
    %v3689 = vpack.c.b16 %v3169, %v3161
    %v3690 = vpack.c.b16 %v3170, %v3162
    %v3691 = vpack.c.b16 %v3171, %v3163
    %v3692 = vpack.c.b16 %v3172, %v3164
    %v3693 = vpack.c.b16 %v3173, %v3165
    %v3694 = vpack.c.b16 %v3174, %v3166
    %v3695 = vpack.c.b16 %v3175, %v3167
    %v3696 = vpack.c.b16 %v3176, %v3168
    %v3697 = vpack.c.b16 %v3185, %v3177
    %v3698 = vpack.c.b16 %v3186, %v3178
    %v3699 = vpack.c.b16 %v3187, %v3179
    %v3700 = vpack.c.b16 %v3188, %v3180
    %v3701 = vpack.c.b16 %v3189, %v3181
    %v3702 = vpack.c.b16 %v3190, %v3182
    %v3703 = vpack.c.b16 %v3191, %v3183
    %v3704 = vpack.c.b16 %v3192, %v3184
    %v3705 = vpack.c.b16 %v3201, %v3193
    %v3706 = vpack.c.b16 %v3202, %v3194
    %v3707 = vpack.c.b16 %v3203, %v3195
    %v3708 = vpack.c.b16 %v3204, %v3196
    %v3709 = vpack.c.b16 %v3205, %v3197
    %v3710 = vpack.c.b16 %v3206, %v3198
    %v3711 = vpack.c.b16 %v3207, %v3199
    %v3712 = vpack.c.b16 %v3208, %v3200
    %v3713 = vpack.c.b16 %v3217, %v3209
    %v3714 = vpack.c.b16 %v3218, %v3210
    %v3715 = vpack.c.b16 %v3219, %v3211
    %v3716 = vpack.c.b16 %v3220, %v3212
    %v3717 = vpack.c.b16 %v3221, %v3213
    %v3718 = vpack.c.b16 %v3222, %v3214
    %v3719 = vpack.c.b16 %v3223, %v3215
    %v3720 = vpack.c.b16 %v3224, %v3216
    %v3721 = vpack.c.b16 %v3233, %v3225
    %v3722 = vpack.c.b16 %v3234, %v3226
    %v3723 = vpack.c.b16 %v3235, %v3227
    %v3724 = vpack.c.b16 %v3236, %v3228
    %v3725 = vpack.c.b16 %v3237, %v3229
    %v3726 = vpack.c.b16 %v3238, %v3230
    %v3727 = vpack.c.b16 %v3239, %v3231
    %v3728 = vpack.c.b16 %v3240, %v3232
    %v3729 = vpack.c.b16 %v3249, %v3241
    %v3730 = vpack.c.b16 %v3250, %v3242
    %v3731 = vpack.c.b16 %v3251, %v3243
    %v3732 = vpack.c.b16 %v3252, %v3244
    %v3733 = vpack.c.b16 %v3253, %v3245
    %v3734 = vpack.c.b16 %v3254, %v3246
    %v3735 = vpack.c.b16 %v3255, %v3247
    %v3736 = vpack.c.b16 %v3256, %v3248
    %v4218 = vsel %vm197, %v1336, 0
    %4220 = vmatprep.subr.bf16.mxu0 %v3258
    %4221 = vmatpush1.bf16.msra.mxu0 %v3257
    %4222 = vmatprep.subr.bf16.mxu0 %v3266
    %4223 = vmatpush1.bf16.msra.mxu0 %v3265
    %4224 = vmatprep.subr.bf16.mxu0 %v3274
    %4225 = vmatpush1.bf16.msra.mxu0 %v3273
    %4226 = vmatprep.subr.bf16.mxu0 %v3282
    %4227 = vmatpush1.bf16.msra.mxu0 %v3281
    %4228 = vmatprep.subr.bf16.mxu0 %v3290
    %4229 = vmatpush1.bf16.msra.mxu0 %v3289
    %4230 = vmatprep.subr.bf16.mxu0 %v3298
    %4231 = vmatpush1.bf16.msra.mxu0 %v3297
    %4232 = vmatprep.subr.bf16.mxu0 %v3306
    %4233 = vmatpush1.bf16.msra.mxu0 %v3305
    %4234 = vmatprep.subr.bf16.mxu0 %v3314
    %4235 = vmatpush1.bf16.msra.mxu0 %v3313
    %4236 = vmatprep.subr.bf16.mxu0 %v3322
    %4237 = vmatpush1.bf16.msra.mxu0 %v3321
    %4238 = vmatprep.subr.bf16.mxu0 %v3330
    %4239 = vmatpush1.bf16.msra.mxu0 %v3329
    %4240 = vmatprep.subr.bf16.mxu0 %v3338
    %4241 = vmatpush1.bf16.msra.mxu0 %v3337
    %4242 = vmatprep.subr.bf16.mxu0 %v3346
    %4243 = vmatpush1.bf16.msra.mxu0 %v3345
    %4244 = vmatprep.subr.bf16.mxu0 %v3354
    %4245 = vmatpush1.bf16.msra.mxu0 %v3353
    %4246 = vmatprep.subr.bf16.mxu0 %v3362
    %4247 = vmatpush1.bf16.msra.mxu0 %v3361
    %4248 = vmatprep.subr.bf16.mxu0 %v3370
    %4249 = vmatpush1.bf16.msra.mxu0 %v3369
    %4250 = vmatprep.subr.bf16.mxu0 %v3378
    %4251 = vmatpush1.bf16.msra.mxu0 %v3377
    %4252 = vmatprep.mubr.bf16.mxu0 %v1330
    %4253 = vmatmul.mubr.bf16.gmra.mrb[0].mxu0 %v1329
    %v4254 = vpop.f32.mrb[0].mxu0
    %v4255 = vadd.f32 0.0, %v4254
    %v4256 = vpop.f32.mrb[0].mxu0
    %v4257 = vadd.f32 0.0, %v4256
    %v4258 = vpop.f32.mrb[0].mxu0
    %v4259 = vpop.f32.mrb[0].mxu0
    %4260 = vdwg.mxu0
    %4261 = vmatprep.subr.bf16.mxu0 %v3386
    %4262 = vmatpush1.bf16.msra.mxu0 %v3385
    %4263 = vmatprep.subr.bf16.mxu0 %v3394
    %4264 = vmatpush1.bf16.msra.mxu0 %v3393
    %4265 = vmatprep.subr.bf16.mxu0 %v3402
    %4266 = vmatpush1.bf16.msra.mxu0 %v3401
    %4267 = vmatprep.subr.bf16.mxu0 %v3410
    %4268 = vmatpush1.bf16.msra.mxu0 %v3409
    %4269 = vmatprep.subr.bf16.mxu0 %v3418
    %4270 = vmatpush1.bf16.msra.mxu0 %v3417
    %4271 = vmatprep.subr.bf16.mxu0 %v3426
    %4272 = vmatpush1.bf16.msra.mxu0 %v3425
    %4273 = vmatprep.subr.bf16.mxu0 %v3434
    %4274 = vmatpush1.bf16.msra.mxu0 %v3433
    %4275 = vmatprep.subr.bf16.mxu0 %v3442
    %4276 = vmatpush1.bf16.msra.mxu0 %v3441
    %4277 = vmatprep.subr.bf16.mxu0 %v3450
    %4278 = vmatpush1.bf16.msra.mxu0 %v3449
    %4279 = vmatprep.subr.bf16.mxu0 %v3458
    %4280 = vmatpush1.bf16.msra.mxu0 %v3457
    %4281 = vmatprep.subr.bf16.mxu0 %v3466
    %4282 = vmatpush1.bf16.msra.mxu0 %v3465
    %4283 = vmatprep.subr.bf16.mxu0 %v3474
    %4284 = vmatpush1.bf16.msra.mxu0 %v3473
    %4285 = vmatprep.subr.bf16.mxu0 %v3482
    %4286 = vmatpush1.bf16.msra.mxu0 %v3481
    %4287 = vmatprep.subr.bf16.mxu0 %v3490
    %4288 = vmatpush1.bf16.msra.mxu0 %v3489
    %4289 = vmatprep.subr.bf16.mxu0 %v3498
    %4290 = vmatpush1.bf16.msra.mxu0 %v3497
    %4291 = vmatprep.subr.bf16.mxu0 %v3506
    %4292 = vmatpush1.bf16.msra.mxu0 %v3505
    %4293 = vmatprep.mubr.bf16.mxu0 %v1332
    %4294 = vmatmul.mubr.bf16.gmra.mrb[0].mxu0 %v1331
    %v4295 = vpop.f32.mrb[0].mxu0
    %v4296 = vadd.f32 %v4255, %v4295
    %v4297 = vpop.f32.mrb[0].mxu0
    %v4298 = vadd.f32 %v4257, %v4297
    %v4299 = vpop.f32.mrb[0].mxu0
    %v4300 = vpop.f32.mrb[0].mxu0
    %4301 = vdwg.mxu0
    %4302 = vmatprep.subr.bf16.mxu0 %v3514
    %4303 = vmatpush1.bf16.msra.mxu0 %v3513
    %4304 = vmatprep.subr.bf16.mxu0 %v3522
    %4305 = vmatpush1.bf16.msra.mxu0 %v3521
    %4306 = vmatprep.subr.bf16.mxu0 %v3530
    %4307 = vmatpush1.bf16.msra.mxu0 %v3529
    %4308 = vmatprep.subr.bf16.mxu0 %v3538
    %4309 = vmatpush1.bf16.msra.mxu0 %v3537
    %4310 = vmatprep.subr.bf16.mxu0 %v3546
    %4311 = vmatpush1.bf16.msra.mxu0 %v3545
    %4312 = vmatprep.subr.bf16.mxu0 %v3554
    %4313 = vmatpush1.bf16.msra.mxu0 %v3553
    %4314 = vmatprep.subr.bf16.mxu0 %v3562
    %4315 = vmatpush1.bf16.msra.mxu0 %v3561
    %4316 = vmatprep.subr.bf16.mxu0 %v3570
    %4317 = vmatpush1.bf16.msra.mxu0 %v3569
    %4318 = vmatprep.subr.bf16.mxu0 %v3578
    %4319 = vmatpush1.bf16.msra.mxu0 %v3577
    %4320 = vmatprep.subr.bf16.mxu0 %v3586
    %4321 = vmatpush1.bf16.msra.mxu0 %v3585
    %4322 = vmatprep.subr.bf16.mxu0 %v3594
    %4323 = vmatpush1.bf16.msra.mxu0 %v3593
    %4324 = vmatprep.subr.bf16.mxu0 %v3602
    %4325 = vmatpush1.bf16.msra.mxu0 %v3601
    %4326 = vmatprep.subr.bf16.mxu0 %v3610
    %4327 = vmatpush1.bf16.msra.mxu0 %v3609
    %4328 = vmatprep.subr.bf16.mxu0 %v3618
    %4329 = vmatpush1.bf16.msra.mxu0 %v3617
    %4330 = vmatprep.subr.bf16.mxu0 %v3626
    %4331 = vmatpush1.bf16.msra.mxu0 %v3625
    %4332 = vmatprep.subr.bf16.mxu0 %v3634
    %4333 = vmatpush1.bf16.msra.mxu0 %v3633
    %4334 = vmatprep.mubr.bf16.mxu0 %v1334
    %4335 = vmatmul.mubr.bf16.gmra.mrb[0].mxu0 %v1333
    %v4336 = vpop.f32.mrb[0].mxu0
    %v4337 = vadd.f32 %v4296, %v4336
    %v4338 = vpop.f32.mrb[0].mxu0
    %v4339 = vadd.f32 %v4298, %v4338
    %v4340 = vpop.f32.mrb[0].mxu0
    %v4341 = vpop.f32.mrb[0].mxu0
    %4342 = vdwg.mxu0
    %4343 = vmatprep.subr.bf16.mxu0 %v3642
    %4344 = vmatpush1.bf16.msra.mxu0 %v3641
    %4345 = vmatprep.subr.bf16.mxu0 %v3650
    %4346 = vmatpush1.bf16.msra.mxu0 %v3649
    %4347 = vmatprep.subr.bf16.mxu0 %v3658
    %4348 = vmatpush1.bf16.msra.mxu0 %v3657
    %4349 = vmatprep.subr.bf16.mxu0 %v3666
    %4350 = vmatpush1.bf16.msra.mxu0 %v3665
    %4351 = vmatprep.subr.bf16.mxu0 %v3674
    %4352 = vmatpush1.bf16.msra.mxu0 %v3673
    %4353 = vmatprep.subr.bf16.mxu0 %v3682
    %4354 = vmatpush1.bf16.msra.mxu0 %v3681
    %4355 = vmatprep.subr.bf16.mxu0 %v3690
    %4356 = vmatpush1.bf16.msra.mxu0 %v3689
    %4357 = vmatprep.subr.bf16.mxu0 %v3698
    %4358 = vmatpush1.bf16.msra.mxu0 %v3697
    %4359 = vmatprep.subr.bf16.mxu0 %v3706
    %4360 = vmatpush1.bf16.msra.mxu0 %v3705
    %4361 = vmatprep.subr.bf16.mxu0 %v3714
    %4362 = vmatpush1.bf16.msra.mxu0 %v3713
    %4363 = vmatprep.subr.bf16.mxu0 %v3722
    %4364 = vmatpush1.bf16.msra.mxu0 %v3721
    %4365 = vmatprep.subr.bf16.mxu0 %v3730
    %4366 = vmatpush1.bf16.msra.mxu0 %v3729
    %4367 = vmatprep.subr.bf16.mxu0 0
    %4368 = vmatpush1.bf16.msra.mxu0 0
    %4369 = vmatprep.subr.bf16.mxu0 0
    %4370 = vmatpush1.bf16.msra.mxu0 0
    %4371 = vmatprep.subr.bf16.mxu0 0
    %4372 = vmatpush1.bf16.msra.mxu0 0
    %4373 = vmatprep.subr.bf16.mxu0 0
    %4374 = vmatpush1.bf16.msra.mxu0 0
    %4375 = vmatprep.mubr.bf16.mxu0 %v4218
    %4376 = vmatmul.mubr.bf16.gmra.mrb[0].mxu0 %v1335
    %v4377 = vpop.f32.mrb[0].mxu0
    %v4378 = vadd.f32 %v4337, %v4377
    %v4379 = vpop.f32.mrb[0].mxu0
    %v4380 = vadd.f32 %v4339, %v4379
    %v4381 = vpop.f32.mrb[0].mxu0
    %v4382 = vpop.f32.mrb[0].mxu0
    %4383 = vdwg.mxu0
    %4384 = vmatprep.subr.bf16.mxu0 %v3260
    %4385 = vmatpush1.bf16.msra.mxu0 %v3259
    %4386 = vmatprep.subr.bf16.mxu0 %v3268
    %4387 = vmatpush1.bf16.msra.mxu0 %v3267
    %4388 = vmatprep.subr.bf16.mxu0 %v3276
    %4389 = vmatpush1.bf16.msra.mxu0 %v3275
    %4390 = vmatprep.subr.bf16.mxu0 %v3284
    %4391 = vmatpush1.bf16.msra.mxu0 %v3283
    %4392 = vmatprep.subr.bf16.mxu0 %v3292
    %4393 = vmatpush1.bf16.msra.mxu0 %v3291
    %4394 = vmatprep.subr.bf16.mxu0 %v3300
    %4395 = vmatpush1.bf16.msra.mxu0 %v3299
    %4396 = vmatprep.subr.bf16.mxu0 %v3308
    %4397 = vmatpush1.bf16.msra.mxu0 %v3307
    %4398 = vmatprep.subr.bf16.mxu0 %v3316
    %4399 = vmatpush1.bf16.msra.mxu0 %v3315
    %4400 = vmatprep.subr.bf16.mxu0 %v3324
    %4401 = vmatpush1.bf16.msra.mxu0 %v3323
    %4402 = vmatprep.subr.bf16.mxu0 %v3332
    %4403 = vmatpush1.bf16.msra.mxu0 %v3331
    %4404 = vmatprep.subr.bf16.mxu0 %v3340
    %4405 = vmatpush1.bf16.msra.mxu0 %v3339
    %4406 = vmatprep.subr.bf16.mxu0 %v3348
    %4407 = vmatpush1.bf16.msra.mxu0 %v3347
    %4408 = vmatprep.subr.bf16.mxu0 %v3356
    %4409 = vmatpush1.bf16.msra.mxu0 %v3355
    %4410 = vmatprep.subr.bf16.mxu0 %v3364
    %4411 = vmatpush1.bf16.msra.mxu0 %v3363
    %4412 = vmatprep.subr.bf16.mxu0 %v3372
    %4413 = vmatpush1.bf16.msra.mxu0 %v3371
    %4414 = vmatprep.subr.bf16.mxu0 %v3380
    %4415 = vmatpush1.bf16.msra.mxu0 %v3379
    %4416 = vmatprep.mubr.bf16.mxu0 %v1330
    %4417 = vmatmul.mubr.bf16.gmra.mrb[0].mxu0 %v1329
    %v4418 = vpop.f32.mrb[0].mxu0
    %v4419 = vadd.f32 0.0, %v4418
    %v4420 = vpop.f32.mrb[0].mxu0
    %v4421 = vadd.f32 0.0, %v4420
    %v4422 = vpop.f32.mrb[0].mxu0
    %v4423 = vpop.f32.mrb[0].mxu0
    %4424 = vdwg.mxu0
    %4425 = vmatprep.subr.bf16.mxu0 %v3388
    %4426 = vmatpush1.bf16.msra.mxu0 %v3387
    %4427 = vmatprep.subr.bf16.mxu0 %v3396
    %4428 = vmatpush1.bf16.msra.mxu0 %v3395
    %4429 = vmatprep.subr.bf16.mxu0 %v3404
    %4430 = vmatpush1.bf16.msra.mxu0 %v3403
    %4431 = vmatprep.subr.bf16.mxu0 %v3412
    %4432 = vmatpush1.bf16.msra.mxu0 %v3411
    %4433 = vmatprep.subr.bf16.mxu0 %v3420
    %4434 = vmatpush1.bf16.msra.mxu0 %v3419
    %4435 = vmatprep.subr.bf16.mxu0 %v3428
    %4436 = vmatpush1.bf16.msra.mxu0 %v3427
    %4437 = vmatprep.subr.bf16.mxu0 %v3436
    %4438 = vmatpush1.bf16.msra.mxu0 %v3435
    %4439 = vmatprep.subr.bf16.mxu0 %v3444
    %4440 = vmatpush1.bf16.msra.mxu0 %v3443
    %4441 = vmatprep.subr.bf16.mxu0 %v3452
    %4442 = vmatpush1.bf16.msra.mxu0 %v3451
    %4443 = vmatprep.subr.bf16.mxu0 %v3460
    %4444 = vmatpush1.bf16.msra.mxu0 %v3459
    %4445 = vmatprep.subr.bf16.mxu0 %v3468
    %4446 = vmatpush1.bf16.msra.mxu0 %v3467
    %4447 = vmatprep.subr.bf16.mxu0 %v3476
    %4448 = vmatpush1.bf16.msra.mxu0 %v3475
    %4449 = vmatprep.subr.bf16.mxu0 %v3484
    %4450 = vmatpush1.bf16.msra.mxu0 %v3483
    %4451 = vmatprep.subr.bf16.mxu0 %v3492
    %4452 = vmatpush1.bf16.msra.mxu0 %v3491
    %4453 = vmatprep.subr.bf16.mxu0 %v3500
    %4454 = vmatpush1.bf16.msra.mxu0 %v3499
    %4455 = vmatprep.subr.bf16.mxu0 %v3508
    %4456 = vmatpush1.bf16.msra.mxu0 %v3507
    %4457 = vmatprep.mubr.bf16.mxu0 %v1332
    %4458 = vmatmul.mubr.bf16.gmra.mrb[0].mxu0 %v1331
    %v4459 = vpop.f32.mrb[0].mxu0
    %v4460 = vadd.f32 %v4419, %v4459
    %v4461 = vpop.f32.mrb[0].mxu0
    %v4462 = vadd.f32 %v4421, %v4461
    %v4463 = vpop.f32.mrb[0].mxu0
    %v4464 = vpop.f32.mrb[0].mxu0
    %4465 = vdwg.mxu0
    %4466 = vmatprep.subr.bf16.mxu0 %v3516
    %4467 = vmatpush1.bf16.msra.mxu0 %v3515
    %4468 = vmatprep.subr.bf16.mxu0 %v3524
    %4469 = vmatpush1.bf16.msra.mxu0 %v3523
    %4470 = vmatprep.subr.bf16.mxu0 %v3532
    %4471 = vmatpush1.bf16.msra.mxu0 %v3531
    %4472 = vmatprep.subr.bf16.mxu0 %v3540
    %4473 = vmatpush1.bf16.msra.mxu0 %v3539
    %4474 = vmatprep.subr.bf16.mxu0 %v3548
    %4475 = vmatpush1.bf16.msra.mxu0 %v3547
    %4476 = vmatprep.subr.bf16.mxu0 %v3556
    %4477 = vmatpush1.bf16.msra.mxu0 %v3555
    %4478 = vmatprep.subr.bf16.mxu0 %v3564
    %4479 = vmatpush1.bf16.msra.mxu0 %v3563
    %4480 = vmatprep.subr.bf16.mxu0 %v3572
    %4481 = vmatpush1.bf16.msra.mxu0 %v3571
    %4482 = vmatprep.subr.bf16.mxu0 %v3580
    %4483 = vmatpush1.bf16.msra.mxu0 %v3579
    %4484 = vmatprep.subr.bf16.mxu0 %v3588
    %4485 = vmatpush1.bf16.msra.mxu0 %v3587
    %4486 = vmatprep.subr.bf16.mxu0 %v3596
    %4487 = vmatpush1.bf16.msra.mxu0 %v3595
    %4488 = vmatprep.subr.bf16.mxu0 %v3604
    %4489 = vmatpush1.bf16.msra.mxu0 %v3603
    %4490 = vmatprep.subr.bf16.mxu0 %v3612
    %4491 = vmatpush1.bf16.msra.mxu0 %v3611
    %4492 = vmatprep.subr.bf16.mxu0 %v3620
    %4493 = vmatpush1.bf16.msra.mxu0 %v3619
    %4494 = vmatprep.subr.bf16.mxu0 %v3628
    %4495 = vmatpush1.bf16.msra.mxu0 %v3627
    %4496 = vmatprep.subr.bf16.mxu0 %v3636
    %4497 = vmatpush1.bf16.msra.mxu0 %v3635
    %4498 = vmatprep.mubr.bf16.mxu0 %v1334
    %4499 = vmatmul.mubr.bf16.gmra.mrb[0].mxu0 %v1333
    %v4500 = vpop.f32.mrb[0].mxu0
    %v4501 = vadd.f32 %v4460, %v4500
    %v4502 = vpop.f32.mrb[0].mxu0
    %v4503 = vadd.f32 %v4462, %v4502
    %v4504 = vpop.f32.mrb[0].mxu0
    %v4505 = vpop.f32.mrb[0].mxu0
    %4506 = vdwg.mxu0
    %4507 = vmatprep.subr.bf16.mxu0 %v3644
    %4508 = vmatpush1.bf16.msra.mxu0 %v3643
    %4509 = vmatprep.subr.bf16.mxu0 %v3652
    %4510 = vmatpush1.bf16.msra.mxu0 %v3651
    %4511 = vmatprep.subr.bf16.mxu0 %v3660
    %4512 = vmatpush1.bf16.msra.mxu0 %v3659
    %4513 = vmatprep.subr.bf16.mxu0 %v3668
    %4514 = vmatpush1.bf16.msra.mxu0 %v3667
    %4515 = vmatprep.subr.bf16.mxu0 %v3676
    %4516 = vmatpush1.bf16.msra.mxu0 %v3675
    %4517 = vmatprep.subr.bf16.mxu0 %v3684
    %4518 = vmatpush1.bf16.msra.mxu0 %v3683
    %4519 = vmatprep.subr.bf16.mxu0 %v3692
    %4520 = vmatpush1.bf16.msra.mxu0 %v3691
    %4521 = vmatprep.subr.bf16.mxu0 %v3700
    %4522 = vmatpush1.bf16.msra.mxu0 %v3699
    %4523 = vmatprep.subr.bf16.mxu0 %v3708
    %4524 = vmatpush1.bf16.msra.mxu0 %v3707
    %4525 = vmatprep.subr.bf16.mxu0 %v3716
    %4526 = vmatpush1.bf16.msra.mxu0 %v3715
    %4527 = vmatprep.subr.bf16.mxu0 %v3724
    %4528 = vmatpush1.bf16.msra.mxu0 %v3723
    %4529 = vmatprep.subr.bf16.mxu0 %v3732
    %4530 = vmatpush1.bf16.msra.mxu0 %v3731
    %4531 = vmatprep.subr.bf16.mxu0 0
    %4532 = vmatpush1.bf16.msra.mxu0 0
    %4533 = vmatprep.subr.bf16.mxu0 0
    %4534 = vmatpush1.bf16.msra.mxu0 0
    %4535 = vmatprep.subr.bf16.mxu0 0
    %4536 = vmatpush1.bf16.msra.mxu0 0
    %4537 = vmatprep.subr.bf16.mxu0 0
    %4538 = vmatpush1.bf16.msra.mxu0 0
    %4539 = vmatprep.mubr.bf16.mxu0 %v4218
    %4540 = vmatmul.mubr.bf16.gmra.mrb[0].mxu0 %v1335
    %v4541 = vpop.f32.mrb[0].mxu0
    %v4542 = vadd.f32 %v4501, %v4541
    %v4543 = vpop.f32.mrb[0].mxu0
    %v4544 = vadd.f32 %v4503, %v4543
    %v4545 = vpop.f32.mrb[0].mxu0
    %v4546 = vpop.f32.mrb[0].mxu0
    %4547 = vdwg.mxu0
    %4548 = vmatprep.subr.bf16.mxu0 %v3262
    %4549 = vmatpush1.bf16.msra.mxu0 %v3261
    %4550 = vmatprep.subr.bf16.mxu0 %v3270
    %4551 = vmatpush1.bf16.msra.mxu0 %v3269
    %4552 = vmatprep.subr.bf16.mxu0 %v3278
    %4553 = vmatpush1.bf16.msra.mxu0 %v3277
    %4554 = vmatprep.subr.bf16.mxu0 %v3286
    %4555 = vmatpush1.bf16.msra.mxu0 %v3285
    %4556 = vmatprep.subr.bf16.mxu0 %v3294
    %4557 = vmatpush1.bf16.msra.mxu0 %v3293
    %4558 = vmatprep.subr.bf16.mxu0 %v3302
    %4559 = vmatpush1.bf16.msra.mxu0 %v3301
    %4560 = vmatprep.subr.bf16.mxu0 %v3310
    %4561 = vmatpush1.bf16.msra.mxu0 %v3309
    %4562 = vmatprep.subr.bf16.mxu0 %v3318
    %4563 = vmatpush1.bf16.msra.mxu0 %v3317
    %4564 = vmatprep.subr.bf16.mxu0 %v3326
    %4565 = vmatpush1.bf16.msra.mxu0 %v3325
    %4566 = vmatprep.subr.bf16.mxu0 %v3334
    %4567 = vmatpush1.bf16.msra.mxu0 %v3333
    %4568 = vmatprep.subr.bf16.mxu0 %v3342
    %4569 = vmatpush1.bf16.msra.mxu0 %v3341
    %4570 = vmatprep.subr.bf16.mxu0 %v3350
    %4571 = vmatpush1.bf16.msra.mxu0 %v3349
    %4572 = vmatprep.subr.bf16.mxu0 %v3358
    %4573 = vmatpush1.bf16.msra.mxu0 %v3357
    %4574 = vmatprep.subr.bf16.mxu0 %v3366
    %4575 = vmatpush1.bf16.msra.mxu0 %v3365
    %4576 = vmatprep.subr.bf16.mxu0 %v3374
    %4577 = vmatpush1.bf16.msra.mxu0 %v3373
    %4578 = vmatprep.subr.bf16.mxu0 %v3382
    %4579 = vmatpush1.bf16.msra.mxu0 %v3381
    %4580 = vmatprep.mubr.bf16.mxu0 %v1330
    %4581 = vmatmul.mubr.bf16.gmra.mrb[0].mxu0 %v1329
    %v4582 = vpop.f32.mrb[0].mxu0
    %v4583 = vadd.f32 0.0, %v4582
    %v4584 = vpop.f32.mrb[0].mxu0
    %v4585 = vadd.f32 0.0, %v4584
    %v4586 = vpop.f32.mrb[0].mxu0
    %v4587 = vpop.f32.mrb[0].mxu0
    %4588 = vdwg.mxu0
    %4589 = vmatprep.subr.bf16.mxu0 %v3390
    %4590 = vmatpush1.bf16.msra.mxu0 %v3389
    %4591 = vmatprep.subr.bf16.mxu0 %v3398
    %4592 = vmatpush1.bf16.msra.mxu0 %v3397
    %4593 = vmatprep.subr.bf16.mxu0 %v3406
    %4594 = vmatpush1.bf16.msra.mxu0 %v3405
    %4595 = vmatprep.subr.bf16.mxu0 %v3414
    %4596 = vmatpush1.bf16.msra.mxu0 %v3413
    %4597 = vmatprep.subr.bf16.mxu0 %v3422
    %4598 = vmatpush1.bf16.msra.mxu0 %v3421
    %4599 = vmatprep.subr.bf16.mxu0 %v3430
    %4600 = vmatpush1.bf16.msra.mxu0 %v3429
    %4601 = vmatprep.subr.bf16.mxu0 %v3438
    %4602 = vmatpush1.bf16.msra.mxu0 %v3437
    %4603 = vmatprep.subr.bf16.mxu0 %v3446
    %4604 = vmatpush1.bf16.msra.mxu0 %v3445
    %4605 = vmatprep.subr.bf16.mxu0 %v3454
    %4606 = vmatpush1.bf16.msra.mxu0 %v3453
    %4607 = vmatprep.subr.bf16.mxu0 %v3462
    %4608 = vmatpush1.bf16.msra.mxu0 %v3461
    %4609 = vmatprep.subr.bf16.mxu0 %v3470
    %4610 = vmatpush1.bf16.msra.mxu0 %v3469
    %4611 = vmatprep.subr.bf16.mxu0 %v3478
    %4612 = vmatpush1.bf16.msra.mxu0 %v3477
    %4613 = vmatprep.subr.bf16.mxu0 %v3486
    %4614 = vmatpush1.bf16.msra.mxu0 %v3485
    %4615 = vmatprep.subr.bf16.mxu0 %v3494
    %4616 = vmatpush1.bf16.msra.mxu0 %v3493
    %4617 = vmatprep.subr.bf16.mxu0 %v3502
    %4618 = vmatpush1.bf16.msra.mxu0 %v3501
    %4619 = vmatprep.subr.bf16.mxu0 %v3510
    %4620 = vmatpush1.bf16.msra.mxu0 %v3509
    %4621 = vmatprep.mubr.bf16.mxu0 %v1332
    %4622 = vmatmul.mubr.bf16.gmra.mrb[0].mxu0 %v1331
    %v4623 = vpop.f32.mrb[0].mxu0
    %v4624 = vadd.f32 %v4583, %v4623
    %v4625 = vpop.f32.mrb[0].mxu0
    %v4626 = vadd.f32 %v4585, %v4625
    %v4627 = vpop.f32.mrb[0].mxu0
    %v4628 = vpop.f32.mrb[0].mxu0
    %4629 = vdwg.mxu0
    %4630 = vmatprep.subr.bf16.mxu0 %v3518
    %4631 = vmatpush1.bf16.msra.mxu0 %v3517
    %4632 = vmatprep.subr.bf16.mxu0 %v3526
    %4633 = vmatpush1.bf16.msra.mxu0 %v3525
    %4634 = vmatprep.subr.bf16.mxu0 %v3534
    %4635 = vmatpush1.bf16.msra.mxu0 %v3533
    %4636 = vmatprep.subr.bf16.mxu0 %v3542
    %4637 = vmatpush1.bf16.msra.mxu0 %v3541
    %4638 = vmatprep.subr.bf16.mxu0 %v3550
    %4639 = vmatpush1.bf16.msra.mxu0 %v3549
    %4640 = vmatprep.subr.bf16.mxu0 %v3558
    %4641 = vmatpush1.bf16.msra.mxu0 %v3557
    %4642 = vmatprep.subr.bf16.mxu0 %v3566
    %4643 = vmatpush1.bf16.msra.mxu0 %v3565
    %4644 = vmatprep.subr.bf16.mxu0 %v3574
    %4645 = vmatpush1.bf16.msra.mxu0 %v3573
    %4646 = vmatprep.subr.bf16.mxu0 %v3582
    %4647 = vmatpush1.bf16.msra.mxu0 %v3581
    %4648 = vmatprep.subr.bf16.mxu0 %v3590
    %4649 = vmatpush1.bf16.msra.mxu0 %v3589
    %4650 = vmatprep.subr.bf16.mxu0 %v3598
    %4651 = vmatpush1.bf16.msra.mxu0 %v3597
    %4652 = vmatprep.subr.bf16.mxu0 %v3606
    %4653 = vmatpush1.bf16.msra.mxu0 %v3605
    %4654 = vmatprep.subr.bf16.mxu0 %v3614
    %4655 = vmatpush1.bf16.msra.mxu0 %v3613
    %4656 = vmatprep.subr.bf16.mxu0 %v3622
    %4657 = vmatpush1.bf16.msra.mxu0 %v3621
    %4658 = vmatprep.subr.bf16.mxu0 %v3630
    %4659 = vmatpush1.bf16.msra.mxu0 %v3629
    %4660 = vmatprep.subr.bf16.mxu0 %v3638
    %4661 = vmatpush1.bf16.msra.mxu0 %v3637
    %4662 = vmatprep.mubr.bf16.mxu0 %v1334
    %4663 = vmatmul.mubr.bf16.gmra.mrb[0].mxu0 %v1333
    %v4664 = vpop.f32.mrb[0].mxu0
    %v4665 = vadd.f32 %v4624, %v4664
    %v4666 = vpop.f32.mrb[0].mxu0
    %v4667 = vadd.f32 %v4626, %v4666
    %v4668 = vpop.f32.mrb[0].mxu0
    %v4669 = vpop.f32.mrb[0].mxu0
    %4670 = vdwg.mxu0
    %4671 = vmatprep.subr.bf16.mxu0 %v3646
    %4672 = vmatpush1.bf16.msra.mxu0 %v3645
    %4673 = vmatprep.subr.bf16.mxu0 %v3654
    %4674 = vmatpush1.bf16.msra.mxu0 %v3653
    %4675 = vmatprep.subr.bf16.mxu0 %v3662
    %4676 = vmatpush1.bf16.msra.mxu0 %v3661
    %4677 = vmatprep.subr.bf16.mxu0 %v3670
    %4678 = vmatpush1.bf16.msra.mxu0 %v3669
    %4679 = vmatprep.subr.bf16.mxu0 %v3678
    %4680 = vmatpush1.bf16.msra.mxu0 %v3677
    %4681 = vmatprep.subr.bf16.mxu0 %v3686
    %4682 = vmatpush1.bf16.msra.mxu0 %v3685
    %4683 = vmatprep.subr.bf16.mxu0 %v3694
    %4684 = vmatpush1.bf16.msra.mxu0 %v3693
    %4685 = vmatprep.subr.bf16.mxu0 %v3702
    %4686 = vmatpush1.bf16.msra.mxu0 %v3701
    %4687 = vmatprep.subr.bf16.mxu0 %v3710
    %4688 = vmatpush1.bf16.msra.mxu0 %v3709
    %4689 = vmatprep.subr.bf16.mxu0 %v3718
    %4690 = vmatpush1.bf16.msra.mxu0 %v3717
    %4691 = vmatprep.subr.bf16.mxu0 %v3726
    %4692 = vmatpush1.bf16.msra.mxu0 %v3725
    %4693 = vmatprep.subr.bf16.mxu0 %v3734
    %4694 = vmatpush1.bf16.msra.mxu0 %v3733
    %4695 = vmatprep.subr.bf16.mxu0 0
    %4696 = vmatpush1.bf16.msra.mxu0 0
    %4697 = vmatprep.subr.bf16.mxu0 0
    %4698 = vmatpush1.bf16.msra.mxu0 0
    %4699 = vmatprep.subr.bf16.mxu0 0
    %4700 = vmatpush1.bf16.msra.mxu0 0
    %4701 = vmatprep.subr.bf16.mxu0 0
    %4702 = vmatpush1.bf16.msra.mxu0 0
    %4703 = vmatprep.mubr.bf16.mxu0 %v4218
    %4704 = vmatmul.mubr.bf16.gmra.mrb[0].mxu0 %v1335
    %v4705 = vpop.f32.mrb[0].mxu0
    %v4706 = vadd.f32 %v4665, %v4705
    %v4707 = vpop.f32.mrb[0].mxu0
    %v4708 = vadd.f32 %v4667, %v4707
    %v4709 = vpop.f32.mrb[0].mxu0
    %v4710 = vpop.f32.mrb[0].mxu0
    %4711 = vdwg.mxu0
    %4712 = vmatprep.subr.bf16.mxu0 %v3264
    %4713 = vmatpush1.bf16.msra.mxu0 %v3263
    %4714 = vmatprep.subr.bf16.mxu0 %v3272
    %4715 = vmatpush1.bf16.msra.mxu0 %v3271
    %4716 = vmatprep.subr.bf16.mxu0 %v3280
    %4717 = vmatpush1.bf16.msra.mxu0 %v3279
    %4718 = vmatprep.subr.bf16.mxu0 %v3288
    %4719 = vmatpush1.bf16.msra.mxu0 %v3287
    %4720 = vmatprep.subr.bf16.mxu0 %v3296
    %4721 = vmatpush1.bf16.msra.mxu0 %v3295
    %4722 = vmatprep.subr.bf16.mxu0 %v3304
    %4723 = vmatpush1.bf16.msra.mxu0 %v3303
    %4724 = vmatprep.subr.bf16.mxu0 %v3312
    %4725 = vmatpush1.bf16.msra.mxu0 %v3311
    %4726 = vmatprep.subr.bf16.mxu0 %v3320
    %4727 = vmatpush1.bf16.msra.mxu0 %v3319
    %4728 = vmatprep.subr.bf16.mxu0 %v3328
    %4729 = vmatpush1.bf16.msra.mxu0 %v3327
    %4730 = vmatprep.subr.bf16.mxu0 %v3336
    %4731 = vmatpush1.bf16.msra.mxu0 %v3335
    %4732 = vmatprep.subr.bf16.mxu0 %v3344
    %4733 = vmatpush1.bf16.msra.mxu0 %v3343
    %4734 = vmatprep.subr.bf16.mxu0 %v3352
    %4735 = vmatpush1.bf16.msra.mxu0 %v3351
    %4736 = vmatprep.subr.bf16.mxu0 %v3360
    %4737 = vmatpush1.bf16.msra.mxu0 %v3359
    %4738 = vmatprep.subr.bf16.mxu0 %v3368
    %4739 = vmatpush1.bf16.msra.mxu0 %v3367
    %4740 = vmatprep.subr.bf16.mxu0 %v3376
    %4741 = vmatpush1.bf16.msra.mxu0 %v3375
    %4742 = vmatprep.subr.bf16.mxu0 %v3384
    %4743 = vmatpush1.bf16.msra.mxu0 %v3383
    %4744 = vmatprep.mubr.bf16.mxu0 %v1330
    %4745 = vmatmul.mubr.bf16.gmra.mrb[0].mxu0 %v1329
    %v4746 = vpop.f32.mrb[0].mxu0
    %v4747 = vadd.f32 0.0, %v4746
    %v4748 = vpop.f32.mrb[0].mxu0
    %v4749 = vadd.f32 0.0, %v4748
    %v4750 = vpop.f32.mrb[0].mxu0
    %v4751 = vpop.f32.mrb[0].mxu0
    %4752 = vdwg.mxu0
    %4753 = vmatprep.subr.bf16.mxu0 %v3392
    %4754 = vmatpush1.bf16.msra.mxu0 %v3391
    %4755 = vmatprep.subr.bf16.mxu0 %v3400
    %4756 = vmatpush1.bf16.msra.mxu0 %v3399
    %4757 = vmatprep.subr.bf16.mxu0 %v3408
    %4758 = vmatpush1.bf16.msra.mxu0 %v3407
    %4759 = vmatprep.subr.bf16.mxu0 %v3416
    %4760 = vmatpush1.bf16.msra.mxu0 %v3415
    %4761 = vmatprep.subr.bf16.mxu0 %v3424
    %4762 = vmatpush1.bf16.msra.mxu0 %v3423
    %4763 = vmatprep.subr.bf16.mxu0 %v3432
    %4764 = vmatpush1.bf16.msra.mxu0 %v3431
    %4765 = vmatprep.subr.bf16.mxu0 %v3440
    %4766 = vmatpush1.bf16.msra.mxu0 %v3439
    %4767 = vmatprep.subr.bf16.mxu0 %v3448
    %4768 = vmatpush1.bf16.msra.mxu0 %v3447
    %4769 = vmatprep.subr.bf16.mxu0 %v3456
    %4770 = vmatpush1.bf16.msra.mxu0 %v3455
    %4771 = vmatprep.subr.bf16.mxu0 %v3464
    %4772 = vmatpush1.bf16.msra.mxu0 %v3463
    %4773 = vmatprep.subr.bf16.mxu0 %v3472
    %4774 = vmatpush1.bf16.msra.mxu0 %v3471
    %4775 = vmatprep.subr.bf16.mxu0 %v3480
    %4776 = vmatpush1.bf16.msra.mxu0 %v3479
    %4777 = vmatprep.subr.bf16.mxu0 %v3488
    %4778 = vmatpush1.bf16.msra.mxu0 %v3487
    %4779 = vmatprep.subr.bf16.mxu0 %v3496
    %4780 = vmatpush1.bf16.msra.mxu0 %v3495
    %4781 = vmatprep.subr.bf16.mxu0 %v3504
    %4782 = vmatpush1.bf16.msra.mxu0 %v3503
    %4783 = vmatprep.subr.bf16.mxu0 %v3512
    %4784 = vmatpush1.bf16.msra.mxu0 %v3511
    %4785 = vmatprep.mubr.bf16.mxu0 %v1332
    %4786 = vmatmul.mubr.bf16.gmra.mrb[0].mxu0 %v1331
    %v4787 = vpop.f32.mrb[0].mxu0
    %v4788 = vadd.f32 %v4747, %v4787
    %v4789 = vpop.f32.mrb[0].mxu0
    %v4790 = vadd.f32 %v4749, %v4789
    %v4791 = vpop.f32.mrb[0].mxu0
    %v4792 = vpop.f32.mrb[0].mxu0
    %4793 = vdwg.mxu0
    %4794 = vmatprep.subr.bf16.mxu0 %v3520
    %4795 = vmatpush1.bf16.msra.mxu0 %v3519
    %4796 = vmatprep.subr.bf16.mxu0 %v3528
    %4797 = vmatpush1.bf16.msra.mxu0 %v3527
    %4798 = vmatprep.subr.bf16.mxu0 %v3536
    %4799 = vmatpush1.bf16.msra.mxu0 %v3535
    %4800 = vmatprep.subr.bf16.mxu0 %v3544
    %4801 = vmatpush1.bf16.msra.mxu0 %v3543
    %4802 = vmatprep.subr.bf16.mxu0 %v3552
    %4803 = vmatpush1.bf16.msra.mxu0 %v3551
    %4804 = vmatprep.subr.bf16.mxu0 %v3560
    %4805 = vmatpush1.bf16.msra.mxu0 %v3559
    %4806 = vmatprep.subr.bf16.mxu0 %v3568
    %4807 = vmatpush1.bf16.msra.mxu0 %v3567
    %4808 = vmatprep.subr.bf16.mxu0 %v3576
    %4809 = vmatpush1.bf16.msra.mxu0 %v3575
    %4810 = vmatprep.subr.bf16.mxu0 %v3584
    %4811 = vmatpush1.bf16.msra.mxu0 %v3583
    %4812 = vmatprep.subr.bf16.mxu0 %v3592
    %4813 = vmatpush1.bf16.msra.mxu0 %v3591
    %4814 = vmatprep.subr.bf16.mxu0 %v3600
    %4815 = vmatpush1.bf16.msra.mxu0 %v3599
    %4816 = vmatprep.subr.bf16.mxu0 %v3608
    %4817 = vmatpush1.bf16.msra.mxu0 %v3607
    %4818 = vmatprep.subr.bf16.mxu0 %v3616
    %4819 = vmatpush1.bf16.msra.mxu0 %v3615
    %4820 = vmatprep.subr.bf16.mxu0 %v3624
    %4821 = vmatpush1.bf16.msra.mxu0 %v3623
    %4822 = vmatprep.subr.bf16.mxu0 %v3632
    %4823 = vmatpush1.bf16.msra.mxu0 %v3631
    %4824 = vmatprep.subr.bf16.mxu0 %v3640
    %4825 = vmatpush1.bf16.msra.mxu0 %v3639
    %4826 = vmatprep.mubr.bf16.mxu0 %v1334
    %4827 = vmatmul.mubr.bf16.gmra.mrb[0].mxu0 %v1333
    %v4828 = vpop.f32.mrb[0].mxu0
    %v4829 = vadd.f32 %v4788, %v4828
    %v4830 = vpop.f32.mrb[0].mxu0
    %v4831 = vadd.f32 %v4790, %v4830
    %v4832 = vpop.f32.mrb[0].mxu0
    %v4833 = vpop.f32.mrb[0].mxu0
    %4834 = vdwg.mxu0
    %4835 = vmatprep.subr.bf16.mxu0 %v3648
    %4836 = vmatpush1.bf16.msra.mxu0 %v3647
    %4837 = vmatprep.subr.bf16.mxu0 %v3656
    %4838 = vmatpush1.bf16.msra.mxu0 %v3655
    %4839 = vmatprep.subr.bf16.mxu0 %v3664
    %4840 = vmatpush1.bf16.msra.mxu0 %v3663
    %4841 = vmatprep.subr.bf16.mxu0 %v3672
    %4842 = vmatpush1.bf16.msra.mxu0 %v3671
    %4843 = vmatprep.subr.bf16.mxu0 %v3680
    %4844 = vmatpush1.bf16.msra.mxu0 %v3679
    %4845 = vmatprep.subr.bf16.mxu0 %v3688
    %4846 = vmatpush1.bf16.msra.mxu0 %v3687
    %4847 = vmatprep.subr.bf16.mxu0 %v3696
    %4848 = vmatpush1.bf16.msra.mxu0 %v3695
    %4849 = vmatprep.subr.bf16.mxu0 %v3704
    %4850 = vmatpush1.bf16.msra.mxu0 %v3703
    %4851 = vmatprep.subr.bf16.mxu0 %v3712
    %4852 = vmatpush1.bf16.msra.mxu0 %v3711
    %4853 = vmatprep.subr.bf16.mxu0 %v3720
    %4854 = vmatpush1.bf16.msra.mxu0 %v3719
    %4855 = vmatprep.subr.bf16.mxu0 %v3728
    %4856 = vmatpush1.bf16.msra.mxu0 %v3727
    %4857 = vmatprep.subr.bf16.mxu0 %v3736
    %4858 = vmatpush1.bf16.msra.mxu0 %v3735
    %4859 = vmatprep.subr.bf16.mxu0 0
    %4860 = vmatpush1.bf16.msra.mxu0 0
    %4861 = vmatprep.subr.bf16.mxu0 0
    %4862 = vmatpush1.bf16.msra.mxu0 0
    %4863 = vmatprep.subr.bf16.mxu0 0
    %4864 = vmatpush1.bf16.msra.mxu0 0
    %4865 = vmatprep.subr.bf16.mxu0 0
    %4866 = vmatpush1.bf16.msra.mxu0 0
    %4867 = vmatprep.mubr.bf16.mxu0 %v4218
    %4868 = vmatmul.mubr.bf16.gmra.mrb[0].mxu0 %v1335
    %v4869 = vpop.f32.mrb[0].mxu0
    %v4870 = vadd.f32 %v4829, %v4869
    %v4871 = vpop.f32.mrb[0].mxu0
    %v4872 = vadd.f32 %v4831, %v4871
    %v4873 = vpop.f32.mrb[0].mxu0
    %v4874 = vpop.f32.mrb[0].mxu0
    %4875 = vdwg.mxu0
    %v4876 = vld [vmem:[%s2] sm:$0xf]
    %v4878 = vlaneseq
    %v4879 = vshrl.u32 %v4878, 7
    %v4880 = vsub.s32 0, %v4879
    %v4881 = vrot.slane %v4876, %v4880
    %v4882 = vlaneseq
    %v4883 = vshrl.u32 %v4882, 7
    %v4884 = vsub.s32 1, %v4883
    %v4885 = vrot.slane %v4876, %v4884
    %v4886 = vlaneseq
    %v4887 = vshrl.u32 %v4886, 7
    %v4888 = vsub.s32 2, %v4887
    %v4889 = vrot.slane %v4876, %v4888
    %v4890 = vlaneseq
    %v4891 = vshrl.u32 %v4890, 7
    %v4892 = vsub.s32 3, %v4891
    %v4893 = vrot.slane %v4876, %v4892
    %v4898 = vadd.f32 %v4378, %v4881
    %v4899 = vadd.f32 %v4380, %v4885
    %v4900 = vadd.f32 %v4542, %v4889
    %v4901 = vadd.f32 %v4544, %v4893
    %v4902 = vmax.f32 %v4898, 0.0
    %v4903 = vmax.f32 %v4899, 0.0
    %v4904 = vmax.f32 %v4900, 0.0
    %v4905 = vmax.f32 %v4901, 0.0
    %v4906 = vpack.c.bf16 %v4902, %v4902
    %v4907 = vpack.c.bf16 %v4903, %v4903
    %v4908 = vpack.c.bf16 %v4904, %v4904
    %v4909 = vpack.c.bf16 %v4905, %v4905
    %v4910 = vld [vmem:[%s3] sm:$0xf]
    %v4911 = vld [vmem:[%s3 + $0x4] sm:$0xf]
    %v4912 = vld [vmem:[%s3 + $0x8] sm:$0xf]
    %v4913 = vld [vmem:[%s3 + $0xc] sm:$0xf]
    %v4914 = vld [vmem:[%s3 + $0x10] sm:$0xf]
    %v4915 = vld [vmem:[%s3 + $0x14] sm:$0xf]
    %v4916 = vld [vmem:[%s3 + $0x18] sm:$0xf]
    %v4917 = vld [vmem:[%s3 + $0x1c] sm:$0xf]
    %v4918 = vld [vmem:[%s3 + $0x20] sm:$0xf]
    %v4919 = vld [vmem:[%s3 + $0x24] sm:$0xf]
    %v4920 = vld [vmem:[%s3 + $0x28] sm:$0xf]
    %v4921 = vld [vmem:[%s3 + $0x2c] sm:$0xf]
    %v4922 = vld [vmem:[%s3 + $0x30] sm:$0xf]
    %v4923 = vld [vmem:[%s3 + $0x34] sm:$0xf]
    %v4924 = vld [vmem:[%s3 + $0x38] sm:$0xf]
    %v4925 = vld [vmem:[%s3 + $0x3c] sm:$0xf]
    %v4926 = vld [vmem:[%s3 + $0x40] sm:$0xf]
    %v4927 = vld [vmem:[%s3 + $0x44] sm:$0xf]
    %v4928 = vld [vmem:[%s3 + $0x48] sm:$0xf]
    %v4929 = vld [vmem:[%s3 + $0x4c] sm:$0xf]
    %v4930 = vld [vmem:[%s3 + $0x50] sm:$0xf]
    %v4931 = vld [vmem:[%s3 + $0x54] sm:$0xf]
    %v4932 = vld [vmem:[%s3 + $0x58] sm:$0xf]
    %v4933 = vld [vmem:[%s3 + $0x5c] sm:$0xf]
    %v4934 = vld [vmem:[%s3 + $0x60] sm:$0xf]
    %v4935 = vld [vmem:[%s3 + $0x64] sm:$0xf]
    %v4936 = vld [vmem:[%s3 + $0x68] sm:$0xf]
    %v4937 = vld [vmem:[%s3 + $0x6c] sm:$0xf]
    %v4938 = vld [vmem:[%s3 + $0x70] sm:$0xf]
    %v4939 = vld [vmem:[%s3 + $0x74] sm:$0xf]
    %v4940 = vld [vmem:[%s3 + $0x78] sm:$0xf]
    %v4941 = vld [vmem:[%s3 + $0x7c] sm:$0xf]
    %v4942 = vld [vmem:[%s3 + $0x80] sm:$0xf]
    %v4943 = vld [vmem:[%s3 + $0x84] sm:$0xf]
    %v4944 = vld [vmem:[%s3 + $0x88] sm:$0xf]
    %v4945 = vld [vmem:[%s3 + $0x8c] sm:$0xf]
    %v4946 = vld [vmem:[%s3 + $0x90] sm:$0xf]
    %v4947 = vld [vmem:[%s3 + $0x94] sm:$0xf]
    %v4948 = vld [vmem:[%s3 + $0x98] sm:$0xf]
    %v4949 = vld [vmem:[%s3 + $0x9c] sm:$0xf]
    %v4950 = vld [vmem:[%s3 + $0xa0] sm:$0xf]
    %v4951 = vld [vmem:[%s3 + $0xa4] sm:$0xf]
    %v4952 = vld [vmem:[%s3 + $0xa8] sm:$0xf]
    %v4953 = vld [vmem:[%s3 + $0xac] sm:$0xf]
    %v4954 = vld [vmem:[%s3 + $0xb0] sm:$0xf]
    %v4955 = vld [vmem:[%s3 + $0xb4] sm:$0xf]
    %v4956 = vld [vmem:[%s3 + $0xb8] sm:$0xf]
    %v4957 = vld [vmem:[%s3 + $0xbc] sm:$0xf]
    %v4958 = vld [vmem:[%s3 + $0xc0] sm:$0xf]
    %v4959 = vld [vmem:[%s3 + $0xc4] sm:$0xf]
    %v4960 = vld [vmem:[%s3 + $0xc8] sm:$0xf]
    %v4961 = vld [vmem:[%s3 + $0xcc] sm:$0xf]
    %v4962 = vld [vmem:[%s3 + $0xd0] sm:$0xf]
    %v4963 = vld [vmem:[%s3 + $0xd4] sm:$0xf]
    %v4964 = vld [vmem:[%s3 + $0xd8] sm:$0xf]
    %v4965 = vld [vmem:[%s3 + $0xdc] sm:$0xf]
    %v4966 = vld [vmem:[%s3 + $0xe0] sm:$0xf]
    %v4967 = vld [vmem:[%s3 + $0xe4] sm:$0xf]
    %v4968 = vld [vmem:[%s3 + $0xe8] sm:$0xf]
    %v4969 = vld [vmem:[%s3 + $0xec] sm:$0xf]
    %v4970 = vld [vmem:[%s3 + $0xf0] sm:$0xf]
    %v4971 = vld [vmem:[%s3 + $0xf4] sm:$0xf]
    %v4972 = vld [vmem:[%s3 + $0xf8] sm:$0xf]
    %v4973 = vld [vmem:[%s3 + $0xfc] sm:$0xf]
    %v4974 = vld [vmem:[%s4] sm:$0x1]
    %v4976 = vlaneseq
    %v4977 = vshrl.u32 %v4976, 7
    %v4978 = vsub.s32 0, %v4977
    %v4979 = vrot.slane %v4974, %v4978
    %v5045 = vunpack.c.l.b16 %v4910
    %v5046 = vunpack.c.l.b16 %v4911
    %v5047 = vunpack.c.l.b16 %v4912
    %v5048 = vunpack.c.l.b16 %v4913
    %v5049 = vunpack.c.l.b16 %v4914
    %v5050 = vunpack.c.l.b16 %v4915
    %v5051 = vunpack.c.l.b16 %v4916
    %v5052 = vunpack.c.l.b16 %v4917
    %v5053 = vunpack.c.l.b16 %v4918
    %v5054 = vunpack.c.l.b16 %v4919
    %v5055 = vunpack.c.l.b16 %v4920
    %v5056 = vunpack.c.l.b16 %v4921
    %v5057 = vunpack.c.l.b16 %v4922
    %v5058 = vunpack.c.l.b16 %v4923
    %v5059 = vunpack.c.l.b16 %v4924
    %v5060 = vunpack.c.l.b16 %v4925
    %v5061 = vunpack.c.l.b16 %v4926
    %v5062 = vunpack.c.l.b16 %v4927
    %v5063 = vunpack.c.l.b16 %v4928
    %v5064 = vunpack.c.l.b16 %v4929
    %v5065 = vunpack.c.l.b16 %v4930
    %v5066 = vunpack.c.l.b16 %v4931
    %v5067 = vunpack.c.l.b16 %v4932
    %v5068 = vunpack.c.l.b16 %v4933
    %v5069 = vunpack.c.l.b16 %v4934
    %v5070 = vunpack.c.l.b16 %v4935
    %v5071 = vunpack.c.l.b16 %v4936
    %v5072 = vunpack.c.l.b16 %v4937
    %v5073 = vunpack.c.l.b16 %v4938
    %v5074 = vunpack.c.l.b16 %v4939
    %v5075 = vunpack.c.l.b16 %v4940
    %v5076 = vunpack.c.l.b16 %v4941
    %v5077 = vunpack.c.l.b16 %v4942
    %v5078 = vunpack.c.l.b16 %v4943
    %v5079 = vunpack.c.l.b16 %v4944
    %v5080 = vunpack.c.l.b16 %v4945
    %v5081 = vunpack.c.l.b16 %v4946
    %v5082 = vunpack.c.l.b16 %v4947
    %v5083 = vunpack.c.l.b16 %v4948
    %v5084 = vunpack.c.l.b16 %v4949
    %v5085 = vunpack.c.l.b16 %v4950
    %v5086 = vunpack.c.l.b16 %v4951
    %v5087 = vunpack.c.l.b16 %v4952
    %v5088 = vunpack.c.l.b16 %v4953
    %v5089 = vunpack.c.l.b16 %v4954
    %v5090 = vunpack.c.l.b16 %v4955
    %v5091 = vunpack.c.l.b16 %v4956
    %v5092 = vunpack.c.l.b16 %v4957
    %v5093 = vunpack.c.l.b16 %v4958
    %v5094 = vunpack.c.l.b16 %v4959
    %v5095 = vunpack.c.l.b16 %v4960
    %v5096 = vunpack.c.l.b16 %v4961
    %v5097 = vunpack.c.l.b16 %v4962
    %v5098 = vunpack.c.l.b16 %v4963
    %v5099 = vunpack.c.l.b16 %v4964
    %v5100 = vunpack.c.l.b16 %v4965
    %v5101 = vunpack.c.l.b16 %v4966
    %v5102 = vunpack.c.l.b16 %v4967
    %v5103 = vunpack.c.l.b16 %v4968
    %v5104 = vunpack.c.l.b16 %v4969
    %v5105 = vunpack.c.l.b16 %v4970
    %v5106 = vunpack.c.l.b16 %v4971
    %v5107 = vunpack.c.l.b16 %v4972
    %v5108 = vunpack.c.l.b16 %v4973
    %v5109 = vpack.c.b16 %v5046, %v5045
    %v5110 = vpack.c.b16 %v5048, %v5047
    %v5111 = vpack.c.b16 %v5050, %v5049
    %v5112 = vpack.c.b16 %v5052, %v5051
    %v5113 = vpack.c.b16 %v5054, %v5053
    %v5114 = vpack.c.b16 %v5056, %v5055
    %v5115 = vpack.c.b16 %v5058, %v5057
    %v5116 = vpack.c.b16 %v5060, %v5059
    %v5117 = vpack.c.b16 %v5062, %v5061
    %v5118 = vpack.c.b16 %v5064, %v5063
    %v5119 = vpack.c.b16 %v5066, %v5065
    %v5120 = vpack.c.b16 %v5068, %v5067
    %v5121 = vpack.c.b16 %v5070, %v5069
    %v5122 = vpack.c.b16 %v5072, %v5071
    %v5123 = vpack.c.b16 %v5074, %v5073
    %v5124 = vpack.c.b16 %v5076, %v5075
    %v5125 = vpack.c.b16 %v5078, %v5077
    %v5126 = vpack.c.b16 %v5080, %v5079
    %v5127 = vpack.c.b16 %v5082, %v5081
    %v5128 = vpack.c.b16 %v5084, %v5083
    %v5129 = vpack.c.b16 %v5086, %v5085
    %v5130 = vpack.c.b16 %v5088, %v5087
    %v5131 = vpack.c.b16 %v5090, %v5089
    %v5132 = vpack.c.b16 %v5092, %v5091
    %v5133 = vpack.c.b16 %v5094, %v5093
    %v5134 = vpack.c.b16 %v5096, %v5095
    %v5135 = vpack.c.b16 %v5098, %v5097
    %v5136 = vpack.c.b16 %v5100, %v5099
    %v5137 = vpack.c.b16 %v5102, %v5101
    %v5138 = vpack.c.b16 %v5104, %v5103
    %v5139 = vpack.c.b16 %v5106, %v5105
    %v5140 = vpack.c.b16 %v5108, %v5107
    %5173 = vmatprep.subr.bf16.mxu0 0
    %5174 = vmatpush1.bf16.msra.mxu0 %v5109
    %5175 = vmatprep.subr.bf16.mxu0 0
    %5176 = vmatpush1.bf16.msra.mxu0 %v5110
    %5177 = vmatprep.subr.bf16.mxu0 0
    %5178 = vmatpush1.bf16.msra.mxu0 %v5111
    %5179 = vmatprep.subr.bf16.mxu0 0
    %5180 = vmatpush1.bf16.msra.mxu0 %v5112
    %5181 = vmatprep.subr.bf16.mxu0 0
    %5182 = vmatpush1.bf16.msra.mxu0 %v5113
    %5183 = vmatprep.subr.bf16.mxu0 0
    %5184 = vmatpush1.bf16.msra.mxu0 %v5114
    %5185 = vmatprep.subr.bf16.mxu0 0
    %5186 = vmatpush1.bf16.msra.mxu0 %v5115
    %5187 = vmatprep.subr.bf16.mxu0 0
    %5188 = vmatpush1.bf16.msra.mxu0 %v5116
    %5189 = vmatprep.subr.bf16.mxu0 0
    %5190 = vmatpush1.bf16.msra.mxu0 %v5117
    %5191 = vmatprep.subr.bf16.mxu0 0
    %5192 = vmatpush1.bf16.msra.mxu0 %v5118
    %5193 = vmatprep.subr.bf16.mxu0 0
    %5194 = vmatpush1.bf16.msra.mxu0 %v5119
    %5195 = vmatprep.subr.bf16.mxu0 0
    %5196 = vmatpush1.bf16.msra.mxu0 %v5120
    %5197 = vmatprep.subr.bf16.mxu0 0
    %5198 = vmatpush1.bf16.msra.mxu0 %v5121
    %5199 = vmatprep.subr.bf16.mxu0 0
    %5200 = vmatpush1.bf16.msra.mxu0 %v5122
    %5201 = vmatprep.subr.bf16.mxu0 0
    %5202 = vmatpush1.bf16.msra.mxu0 %v5123
    %5203 = vmatprep.subr.bf16.mxu0 0
    %5204 = vmatpush1.bf16.msra.mxu0 %v5124
    %5205 = vmatprep.mubr.bf16.mxu0 %v4907
    %5206 = vmatmul.mubr.bf16.gmra.mrb[0].mxu0 %v4906
    %v5207 = vpop.f32.mrb[0].mxu0
    %v5208 = vadd.f32 %v4979, %v5207
    %v5209 = vpop.f32.mrb[0].mxu0
    %v5210 = vpop.f32.mrb[0].mxu0
    %v5211 = vpop.f32.mrb[0].mxu0
    %5212 = vdwg.mxu0
    %5213 = vmatprep.subr.bf16.mxu0 0
    %5214 = vmatpush1.bf16.msra.mxu0 %v5125
    %5215 = vmatprep.subr.bf16.mxu0 0
    %5216 = vmatpush1.bf16.msra.mxu0 %v5126
    %5217 = vmatprep.subr.bf16.mxu0 0
    %5218 = vmatpush1.bf16.msra.mxu0 %v5127
    %5219 = vmatprep.subr.bf16.mxu0 0
    %5220 = vmatpush1.bf16.msra.mxu0 %v5128
    %5221 = vmatprep.subr.bf16.mxu0 0
    %5222 = vmatpush1.bf16.msra.mxu0 %v5129
    %5223 = vmatprep.subr.bf16.mxu0 0
    %5224 = vmatpush1.bf16.msra.mxu0 %v5130
    %5225 = vmatprep.subr.bf16.mxu0 0
    %5226 = vmatpush1.bf16.msra.mxu0 %v5131
    %5227 = vmatprep.subr.bf16.mxu0 0
    %5228 = vmatpush1.bf16.msra.mxu0 %v5132
    %5229 = vmatprep.subr.bf16.mxu0 0
    %5230 = vmatpush1.bf16.msra.mxu0 %v5133
    %5231 = vmatprep.subr.bf16.mxu0 0
    %5232 = vmatpush1.bf16.msra.mxu0 %v5134
    %5233 = vmatprep.subr.bf16.mxu0 0
    %5234 = vmatpush1.bf16.msra.mxu0 %v5135
    %5235 = vmatprep.subr.bf16.mxu0 0
    %5236 = vmatpush1.bf16.msra.mxu0 %v5136
    %5237 = vmatprep.subr.bf16.mxu0 0
    %5238 = vmatpush1.bf16.msra.mxu0 %v5137
    %5239 = vmatprep.subr.bf16.mxu0 0
    %5240 = vmatpush1.bf16.msra.mxu0 %v5138
    %5241 = vmatprep.subr.bf16.mxu0 0
    %5242 = vmatpush1.bf16.msra.mxu0 %v5139
    %5243 = vmatprep.subr.bf16.mxu0 0
    %5244 = vmatpush1.bf16.msra.mxu0 %v5140
    %5245 = vmatprep.mubr.bf16.mxu0 %v4909
    %5246 = vmatmul.mubr.bf16.gmra.mrb[0].mxu0 %v4908
    %v5247 = vpop.f32.mrb[0].mxu0
    %v5248 = vadd.f32 %v5208, %v5247
    %v5249 = vpop.f32.mrb[0].mxu0
    %v5250 = vpop.f32.mrb[0].mxu0
    %v5251 = vpop.f32.mrb[0].mxu0
    %5252 = vdwg.mxu0
    %5253 = vmax.xlane.f32.xlu0 %v5248
    %v5254 = vpop.xlane.xlu0 %5253
    %v5255 = vsub.f32 %v5248, %v5254
    %v5256 = vmul.f32 %v5255, 1.442695
    %v5257 = vpow.pop %v5256
    %5258 = vadd.xlane.f32.xlu0 %v5257
    %v5259 = vpop.xlane.xlu0 %5258
    %v5260 = vrcp.pop %v5259
    %v5261 = vmul.f32 1.0, %v5260
    %v5262 = vmul.f32 %v5257, %v5261
    %5263 = vst [vmem:[%s9] sm:$0xff] %v5262
    %v5264 = vld [vmem:[%s5] ss:$2 sm:$0xf]
    %5266 = vset.pattern.permute.xlu0 0
    %5267 = vperm.xlu0 %5266, %v5262
    %v5268 = vpop.permute.xlu0 %5267
    %v5271 = vlaneseq
    %v5272 = vshrl.u32 %v5271, 7
    %v5273 = vsub.s32 0, %v5272
    %v5274 = vrot.slane %v5264, %v5273
    %v5275 = vlaneseq
    %v5276 = vshrl.u32 %v5275, 7
    %v5277 = vsub.s32 1, %v5276
    %v5278 = vrot.slane %v5264, %v5277
    %v5279 = vlaneseq
    %v5280 = vshrl.u32 %v5279, 7
    %v5281 = vsub.s32 2, %v5280
    %v5282 = vrot.slane %v5264, %v5281
    %v5283 = vlaneseq
    %v5284 = vshrl.u32 %v5283, 7
    %v5285 = vsub.s32 3, %v5284
    %v5286 = vrot.slane %v5264, %v5285
    %v5291 = vmul.f32 %v5268, %v5274
    %v5292 = vmul.f32 %v5268, %v5278
    %v5293 = vmul.f32 %v5268, %v5282
    %v5294 = vmul.f32 %v5268, %v5286
    %v5295 = vadd.f32 %v4706, %v5291
    %v5296 = vadd.f32 %v4708, %v5292
    %v5297 = vadd.f32 %v4870, %v5293
    %v5298 = vadd.f32 %v4872, %v5294
    %s5299 = scalar_lea.vmem %s5, 1
    %v5300 = vld [vmem:[%s5299] ss:$2 sm:$0xf]
    %5301 = vset.pattern.permute.xlu0 1
    %5302 = vperm.xlu0 %5301, %v5262
    %v5303 = vpop.permute.xlu0 %5302
    %v5306 = vlaneseq
    %v5307 = vshrl.u32 %v5306, 7
    %v5308 = vsub.s32 0, %v5307
    %v5309 = vrot.slane %v5300, %v5308
    %v5310 = vlaneseq
    %v5311 = vshrl.u32 %v5310, 7
    %v5312 = vsub.s32 1, %v5311
    %v5313 = vrot.slane %v5300, %v5312
    %v5314 = vlaneseq
    %v5315 = vshrl.u32 %v5314, 7
    %v5316 = vsub.s32 2, %v5315
    %v5317 = vrot.slane %v5300, %v5316
    %v5318 = vlaneseq
    %v5319 = vshrl.u32 %v5318, 7
    %v5320 = vsub.s32 3, %v5319
    %v5321 = vrot.slane %v5300, %v5320
    %v5326 = vmul.f32 %v5303, %v5309
    %v5327 = vmul.f32 %v5303, %v5313
    %v5328 = vmul.f32 %v5303, %v5317
    %v5329 = vmul.f32 %v5303, %v5321
    %v5330 = vadd.f32 %v5295, %v5326
    %v5331 = vadd.f32 %v5296, %v5327
    %v5332 = vadd.f32 %v5297, %v5328
    %v5333 = vadd.f32 %v5298, %v5329
    %v5334 = vld [vmem:[%s6] sm:$0xf]
    %v5336 = vlaneseq
    %v5337 = vshrl.u32 %v5336, 7
    %v5338 = vsub.s32 0, %v5337
    %v5339 = vrot.slane %v5334, %v5338
    %v5340 = vlaneseq
    %v5341 = vshrl.u32 %v5340, 7
    %v5342 = vsub.s32 1, %v5341
    %v5343 = vrot.slane %v5334, %v5342
    %v5344 = vlaneseq
    %v5345 = vshrl.u32 %v5344, 7
    %v5346 = vsub.s32 2, %v5345
    %v5347 = vrot.slane %v5334, %v5346
    %v5348 = vlaneseq
    %v5349 = vshrl.u32 %v5348, 7
    %v5350 = vsub.s32 3, %v5349
    %v5351 = vrot.slane %v5334, %v5350
    %v5356 = vadd.f32 %v5330, %v5339
    %v5357 = vadd.f32 %v5331, %v5343
    %v5358 = vadd.f32 %v5332, %v5347
    %v5359 = vadd.f32 %v5333, %v5351
    %v5360 = vmax.f32 %v5356, 0.0
    %v5361 = vmax.f32 %v5357, 0.0
    %v5362 = vmax.f32 %v5358, 0.0
    %v5363 = vmax.f32 %v5359, 0.0
    %v5364 = vpack.c.bf16 %v5360, %v5360
    %v5365 = vpack.c.bf16 %v5361, %v5361
    %v5366 = vpack.c.bf16 %v5362, %v5362
    %v5367 = vpack.c.bf16 %v5363, %v5363
    %v5368 = vld [vmem:[%s7] sm:$0xf]
    %v5369 = vld [vmem:[%s7 + $0x4] sm:$0xf]
    %v5370 = vld [vmem:[%s7 + $0x8] sm:$0xf]
    %v5371 = vld [vmem:[%s7 + $0xc] sm:$0xf]
    %v5372 = vld [vmem:[%s7 + $0x10] sm:$0xf]
    %v5373 = vld [vmem:[%s7 + $0x14] sm:$0xf]
    %v5374 = vld [vmem:[%s7 + $0x18] sm:$0xf]
    %v5375 = vld [vmem:[%s7 + $0x1c] sm:$0xf]
    %v5376 = vld [vmem:[%s7 + $0x20] sm:$0xf]
    %v5377 = vld [vmem:[%s7 + $0x24] sm:$0xf]
    %v5378 = vld [vmem:[%s7 + $0x28] sm:$0xf]
    %v5379 = vld [vmem:[%s7 + $0x2c] sm:$0xf]
    %v5380 = vld [vmem:[%s7 + $0x30] sm:$0xf]
    %v5381 = vld [vmem:[%s7 + $0x34] sm:$0xf]
    %v5382 = vld [vmem:[%s7 + $0x38] sm:$0xf]
    %v5383 = vld [vmem:[%s7 + $0x3c] sm:$0xf]
    %v5384 = vld [vmem:[%s7 + $0x40] sm:$0xf]
    %v5385 = vld [vmem:[%s7 + $0x44] sm:$0xf]
    %v5386 = vld [vmem:[%s7 + $0x48] sm:$0xf]
    %v5387 = vld [vmem:[%s7 + $0x4c] sm:$0xf]
    %v5388 = vld [vmem:[%s7 + $0x50] sm:$0xf]
    %v5389 = vld [vmem:[%s7 + $0x54] sm:$0xf]
    %v5390 = vld [vmem:[%s7 + $0x58] sm:$0xf]
    %v5391 = vld [vmem:[%s7 + $0x5c] sm:$0xf]
    %v5392 = vld [vmem:[%s7 + $0x60] sm:$0xf]
    %v5393 = vld [vmem:[%s7 + $0x64] sm:$0xf]
    %v5394 = vld [vmem:[%s7 + $0x68] sm:$0xf]
    %v5395 = vld [vmem:[%s7 + $0x6c] sm:$0xf]
    %v5396 = vld [vmem:[%s7 + $0x70] sm:$0xf]
    %v5397 = vld [vmem:[%s7 + $0x74] sm:$0xf]
    %v5398 = vld [vmem:[%s7 + $0x78] sm:$0xf]
    %v5399 = vld [vmem:[%s7 + $0x7c] sm:$0xf]
    %v5400 = vld [vmem:[%s7 + $0x80] sm:$0xf]
    %v5401 = vld [vmem:[%s7 + $0x84] sm:$0xf]
    %v5402 = vld [vmem:[%s7 + $0x88] sm:$0xf]
    %v5403 = vld [vmem:[%s7 + $0x8c] sm:$0xf]
    %v5404 = vld [vmem:[%s7 + $0x90] sm:$0xf]
    %v5405 = vld [vmem:[%s7 + $0x94] sm:$0xf]
    %v5406 = vld [vmem:[%s7 + $0x98] sm:$0xf]
    %v5407 = vld [vmem:[%s7 + $0x9c] sm:$0xf]
    %v5408 = vld [vmem:[%s7 + $0xa0] sm:$0xf]
    %v5409 = vld [vmem:[%s7 + $0xa4] sm:$0xf]
    %v5410 = vld [vmem:[%s7 + $0xa8] sm:$0xf]
    %v5411 = vld [vmem:[%s7 + $0xac] sm:$0xf]
    %v5412 = vld [vmem:[%s7 + $0xb0] sm:$0xf]
    %v5413 = vld [vmem:[%s7 + $0xb4] sm:$0xf]
    %v5414 = vld [vmem:[%s7 + $0xb8] sm:$0xf]
    %v5415 = vld [vmem:[%s7 + $0xbc] sm:$0xf]
    %v5416 = vld [vmem:[%s7 + $0xc0] sm:$0xf]
    %v5417 = vld [vmem:[%s7 + $0xc4] sm:$0xf]
    %v5418 = vld [vmem:[%s7 + $0xc8] sm:$0xf]
    %v5419 = vld [vmem:[%s7 + $0xcc] sm:$0xf]
    %v5420 = vld [vmem:[%s7 + $0xd0] sm:$0xf]
    %v5421 = vld [vmem:[%s7 + $0xd4] sm:$0xf]
    %v5422 = vld [vmem:[%s7 + $0xd8] sm:$0xf]
    %v5423 = vld [vmem:[%s7 + $0xdc] sm:$0xf]
    %v5424 = vld [vmem:[%s7 + $0xe0] sm:$0xf]
    %v5425 = vld [vmem:[%s7 + $0xe4] sm:$0xf]
    %v5426 = vld [vmem:[%s7 + $0xe8] sm:$0xf]
    %v5427 = vld [vmem:[%s7 + $0xec] sm:$0xf]
    %v5428 = vld [vmem:[%s7 + $0xf0] sm:$0xf]
    %v5429 = vld [vmem:[%s7 + $0xf4] sm:$0xf]
    %v5430 = vld [vmem:[%s7 + $0xf8] sm:$0xf]
    %v5431 = vld [vmem:[%s7 + $0xfc] sm:$0xf]
    %v5432 = vld [vmem:[%s8] sm:$0x1]
    %v5434 = vlaneseq
    %v5435 = vshrl.u32 %v5434, 7
    %v5436 = vsub.s32 0, %v5435
    %v5437 = vrot.slane %v5432, %v5436
    %v5503 = vunpack.c.l.b16 %v5368
    %v5504 = vunpack.c.l.b16 %v5369
    %v5505 = vunpack.c.l.b16 %v5370
    %v5506 = vunpack.c.l.b16 %v5371
    %v5507 = vunpack.c.l.b16 %v5372
    %v5508 = vunpack.c.l.b16 %v5373
    %v5509 = vunpack.c.l.b16 %v5374
    %v5510 = vunpack.c.l.b16 %v5375
    %v5511 = vunpack.c.l.b16 %v5376
    %v5512 = vunpack.c.l.b16 %v5377
    %v5513 = vunpack.c.l.b16 %v5378
    %v5514 = vunpack.c.l.b16 %v5379
    %v5515 = vunpack.c.l.b16 %v5380
    %v5516 = vunpack.c.l.b16 %v5381
    %v5517 = vunpack.c.l.b16 %v5382
    %v5518 = vunpack.c.l.b16 %v5383
    %v5519 = vunpack.c.l.b16 %v5384
    %v5520 = vunpack.c.l.b16 %v5385
    %v5521 = vunpack.c.l.b16 %v5386
    %v5522 = vunpack.c.l.b16 %v5387
    %v5523 = vunpack.c.l.b16 %v5388
    %v5524 = vunpack.c.l.b16 %v5389
    %v5525 = vunpack.c.l.b16 %v5390
    %v5526 = vunpack.c.l.b16 %v5391
    %v5527 = vunpack.c.l.b16 %v5392
    %v5528 = vunpack.c.l.b16 %v5393
    %v5529 = vunpack.c.l.b16 %v5394
    %v5530 = vunpack.c.l.b16 %v5395
    %v5531 = vunpack.c.l.b16 %v5396
    %v5532 = vunpack.c.l.b16 %v5397
    %v5533 = vunpack.c.l.b16 %v5398
    %v5534 = vunpack.c.l.b16 %v5399
    %v5535 = vunpack.c.l.b16 %v5400
    %v5536 = vunpack.c.l.b16 %v5401
    %v5537 = vunpack.c.l.b16 %v5402
    %v5538 = vunpack.c.l.b16 %v5403
    %v5539 = vunpack.c.l.b16 %v5404
    %v5540 = vunpack.c.l.b16 %v5405
    %v5541 = vunpack.c.l.b16 %v5406
    %v5542 = vunpack.c.l.b16 %v5407
    %v5543 = vunpack.c.l.b16 %v5408
    %v5544 = vunpack.c.l.b16 %v5409
    %v5545 = vunpack.c.l.b16 %v5410
    %v5546 = vunpack.c.l.b16 %v5411
    %v5547 = vunpack.c.l.b16 %v5412
    %v5548 = vunpack.c.l.b16 %v5413
    %v5549 = vunpack.c.l.b16 %v5414
    %v5550 = vunpack.c.l.b16 %v5415
    %v5551 = vunpack.c.l.b16 %v5416
    %v5552 = vunpack.c.l.b16 %v5417
    %v5553 = vunpack.c.l.b16 %v5418
    %v5554 = vunpack.c.l.b16 %v5419
    %v5555 = vunpack.c.l.b16 %v5420
    %v5556 = vunpack.c.l.b16 %v5421
    %v5557 = vunpack.c.l.b16 %v5422
    %v5558 = vunpack.c.l.b16 %v5423
    %v5559 = vunpack.c.l.b16 %v5424
    %v5560 = vunpack.c.l.b16 %v5425
    %v5561 = vunpack.c.l.b16 %v5426
    %v5562 = vunpack.c.l.b16 %v5427
    %v5563 = vunpack.c.l.b16 %v5428
    %v5564 = vunpack.c.l.b16 %v5429
    %v5565 = vunpack.c.l.b16 %v5430
    %v5566 = vunpack.c.l.b16 %v5431
    %v5567 = vpack.c.b16 %v5504, %v5503
    %v5568 = vpack.c.b16 %v5506, %v5505
    %v5569 = vpack.c.b16 %v5508, %v5507
    %v5570 = vpack.c.b16 %v5510, %v5509
    %v5571 = vpack.c.b16 %v5512, %v5511
    %v5572 = vpack.c.b16 %v5514, %v5513
    %v5573 = vpack.c.b16 %v5516, %v5515
    %v5574 = vpack.c.b16 %v5518, %v5517
    %v5575 = vpack.c.b16 %v5520, %v5519
    %v5576 = vpack.c.b16 %v5522, %v5521
    %v5577 = vpack.c.b16 %v5524, %v5523
    %v5578 = vpack.c.b16 %v5526, %v5525
    %v5579 = vpack.c.b16 %v5528, %v5527
    %v5580 = vpack.c.b16 %v5530, %v5529
    %v5581 = vpack.c.b16 %v5532, %v5531
    %v5582 = vpack.c.b16 %v5534, %v5533
    %v5583 = vpack.c.b16 %v5536, %v5535
    %v5584 = vpack.c.b16 %v5538, %v5537
    %v5585 = vpack.c.b16 %v5540, %v5539
    %v5586 = vpack.c.b16 %v5542, %v5541
    %v5587 = vpack.c.b16 %v5544, %v5543
    %v5588 = vpack.c.b16 %v5546, %v5545
    %v5589 = vpack.c.b16 %v5548, %v5547
    %v5590 = vpack.c.b16 %v5550, %v5549
    %v5591 = vpack.c.b16 %v5552, %v5551
    %v5592 = vpack.c.b16 %v5554, %v5553
    %v5593 = vpack.c.b16 %v5556, %v5555
    %v5594 = vpack.c.b16 %v5558, %v5557
    %v5595 = vpack.c.b16 %v5560, %v5559
    %v5596 = vpack.c.b16 %v5562, %v5561
    %v5597 = vpack.c.b16 %v5564, %v5563
    %v5598 = vpack.c.b16 %v5566, %v5565
    %5631 = vmatprep.subr.bf16.mxu0 0
    %5632 = vmatpush1.bf16.msra.mxu0 %v5567
    %5633 = vmatprep.subr.bf16.mxu0 0
    %5634 = vmatpush1.bf16.msra.mxu0 %v5568
    %5635 = vmatprep.subr.bf16.mxu0 0
    %5636 = vmatpush1.bf16.msra.mxu0 %v5569
    %5637 = vmatprep.subr.bf16.mxu0 0
    %5638 = vmatpush1.bf16.msra.mxu0 %v5570
    %5639 = vmatprep.subr.bf16.mxu0 0
    %5640 = vmatpush1.bf16.msra.mxu0 %v5571
    %5641 = vmatprep.subr.bf16.mxu0 0
    %5642 = vmatpush1.bf16.msra.mxu0 %v5572
    %5643 = vmatprep.subr.bf16.mxu0 0
    %5644 = vmatpush1.bf16.msra.mxu0 %v5573
    %5645 = vmatprep.subr.bf16.mxu0 0
    %5646 = vmatpush1.bf16.msra.mxu0 %v5574
    %5647 = vmatprep.subr.bf16.mxu0 0
    %5648 = vmatpush1.bf16.msra.mxu0 %v5575
    %5649 = vmatprep.subr.bf16.mxu0 0
    %5650 = vmatpush1.bf16.msra.mxu0 %v5576
    %5651 = vmatprep.subr.bf16.mxu0 0
    %5652 = vmatpush1.bf16.msra.mxu0 %v5577
    %5653 = vmatprep.subr.bf16.mxu0 0
    %5654 = vmatpush1.bf16.msra.mxu0 %v5578
    %5655 = vmatprep.subr.bf16.mxu0 0
    %5656 = vmatpush1.bf16.msra.mxu0 %v5579
    %5657 = vmatprep.subr.bf16.mxu0 0
    %5658 = vmatpush1.bf16.msra.mxu0 %v5580
    %5659 = vmatprep.subr.bf16.mxu0 0
    %5660 = vmatpush1.bf16.msra.mxu0 %v5581
    %5661 = vmatprep.subr.bf16.mxu0 0
    %5662 = vmatpush1.bf16.msra.mxu0 %v5582
    %5663 = vmatprep.mubr.bf16.mxu0 %v5365
    %5664 = vmatmul.mubr.bf16.gmra.mrb[0].mxu0 %v5364
    %v5665 = vpop.f32.mrb[0].mxu0
    %v5666 = vadd.f32 %v5437, %v5665
    %v5667 = vpop.f32.mrb[0].mxu0
    %v5668 = vpop.f32.mrb[0].mxu0
    %v5669 = vpop.f32.mrb[0].mxu0
    %5670 = vdwg.mxu0
    %5671 = vmatprep.subr.bf16.mxu0 0
    %5672 = vmatpush1.bf16.msra.mxu0 %v5583
    %5673 = vmatprep.subr.bf16.mxu0 0
    %5674 = vmatpush1.bf16.msra.mxu0 %v5584
    %5675 = vmatprep.subr.bf16.mxu0 0
    %5676 = vmatpush1.bf16.msra.mxu0 %v5585
    %5677 = vmatprep.subr.bf16.mxu0 0
    %5678 = vmatpush1.bf16.msra.mxu0 %v5586
    %5679 = vmatprep.subr.bf16.mxu0 0
    %5680 = vmatpush1.bf16.msra.mxu0 %v5587
    %5681 = vmatprep.subr.bf16.mxu0 0
    %5682 = vmatpush1.bf16.msra.mxu0 %v5588
    %5683 = vmatprep.subr.bf16.mxu0 0
    %5684 = vmatpush1.bf16.msra.mxu0 %v5589
    %5685 = vmatprep.subr.bf16.mxu0 0
    %5686 = vmatpush1.bf16.msra.mxu0 %v5590
    %5687 = vmatprep.subr.bf16.mxu0 0
    %5688 = vmatpush1.bf16.msra.mxu0 %v5591
    %5689 = vmatprep.subr.bf16.mxu0 0
    %5690 = vmatpush1.bf16.msra.mxu0 %v5592
    %5691 = vmatprep.subr.bf16.mxu0 0
    %5692 = vmatpush1.bf16.msra.mxu0 %v5593
    %5693 = vmatprep.subr.bf16.mxu0 0
    %5694 = vmatpush1.bf16.msra.mxu0 %v5594
    %5695 = vmatprep.subr.bf16.mxu0 0
    %5696 = vmatpush1.bf16.msra.mxu0 %v5595
    %5697 = vmatprep.subr.bf16.mxu0 0
    %5698 = vmatpush1.bf16.msra.mxu0 %v5596
    %5699 = vmatprep.subr.bf16.mxu0 0
    %5700 = vmatpush1.bf16.msra.mxu0 %v5597
    %5701 = vmatprep.subr.bf16.mxu0 0
    %5702 = vmatpush1.bf16.msra.mxu0 %v5598
    %5703 = vmatprep.mubr.bf16.mxu0 %v5367
    %5704 = vmatmul.mubr.bf16.gmra.mrb[0].mxu0 %v5366
    %v5705 = vpop.f32.mrb[0].mxu0
    %v5706 = vadd.f32 %v5666, %v5705
    %v5707 = vpop.f32.mrb[0].mxu0
    %v5708 = vpop.f32.mrb[0].mxu0
    %v5709 = vpop.f32.mrb[0].mxu0
    %5710 = vdwg.mxu0
    %5711 = vst [vmem:[%s10] sm:$0xff] %v5706
  $region45: #{bmi_predictor_heads.1} parent=0 // pred_fallthru
    _
  // Predicated region
  $region46: #{bmi_predictor_heads.1} parent=0 // pred_check
    _
  $region47: #{bmi_predictor_heads.1} parent=0 // pred_check_branch
    %5713 = sbr.rel (0) target = $region49
  $region48: #{bmi_predictor_heads.1} parent=0 // pred_region
    _
  $region49: #{bmi_predictor_heads.1} parent=0 // pred_fallthru
    _
  // Predicated region
  $region50: #{bmi_predictor_heads.1} parent=0 // pred_check
    _
  $region51: #{bmi_predictor_heads.1} parent=0 // pred_check_branch
    %5715 = sbr.rel (0) target = $region53
  $region52: #{bmi_predictor_heads.1} parent=0 // pred_region
    _
  $region53: #{bmi_predictor_heads.1} parent=0 // pred_fallthru
    _
  // Predicated region
  $region54: #{bmi_predictor_heads.1} parent=0 // pred_check
    _
  $region55: #{bmi_predictor_heads.1} parent=0 // pred_check_branch
    %5717 = sbr.rel (0) target = $region57
  $region56: #{bmi_predictor_heads.1} parent=0 // pred_region
    _
  $region57: #{bmi_predictor_heads.1} parent=0 // pred_fallthru
    _
  // Predicated region
  $region58: #{bmi_predictor_heads.1} parent=0 // pred_check
    _
  $region59: #{bmi_predictor_heads.1} parent=0 // pred_check_branch
    %5719 = sbr.rel (0) target = $region61
  $region60: #{bmi_predictor_heads.1} parent=0 // pred_region
    _
  $region61: #{bmi_predictor_heads.1} parent=0 // pred_fallthru
    _

</llo_original>
